<compile_context>
chip_gen: v7x
topology: tpu7x:2x2x1
jax: 0.10.0
libtpu: 0.0.40
codegen_flags: <defaults>
</compile_context>

<pallas_src>
import math

import jax
import jax.numpy as jnp
from jax.experimental import pallas as pl
from jax.experimental.pallas import tpu as pltpu

C, H, W = 3, 16, 16
D_IN = C * H * W          # 768  (multiple of 128)
D_FEAT = 512              # CLIP / GeoCLIP feature dim
D_HID = 512
D_OUT = 2
D_OUT_PAD = 128           # lane-dense padded output width (wrapper slices to 2)
TB = 128                  # batch tile (rows per grid step)

_INV_SQRT2 = 1.0 / math.sqrt(2.0)


def clip_regressor_kernel(img_ref, wenc_ref, gamma_ref, beta_ref,
                          w1_ref, b1_ref, w2_ref, b2_ref, out_ref):
    # ---- frozen "image encoder" stand-in (half precision in, .float() out) ----
    feats = jnp.dot(img_ref[...], wenc_ref[...],
                    preferred_element_type=jnp.float32)          # (TB, 512) f32

    # ---- head[0]: LayerNorm(512, eps=1e-6), fused single-pass moments ----
    inv_n = jnp.float32(1.0 / D_FEAT)
    s1 = jnp.sum(feats, axis=-1, keepdims=True)
    s2 = jnp.sum(feats * feats, axis=-1, keepdims=True)
    mean = s1 * inv_n
    var = s2 * inv_n - mean * mean                               # E[x^2] - E[x]^2
    xn = (feats - mean) * jax.lax.rsqrt(var + jnp.float32(1e-6))
    xn = xn * gamma_ref[...] + beta_ref[...]

    # ---- head[1..2]: Linear(512,512) [bf16 MXU, f32 acc] + exact (erf) GELU ----
    h = jnp.dot(xn.astype(jnp.bfloat16), w1_ref[...],
                preferred_element_type=jnp.float32) + b1_ref[...]
    h = 0.5 * h * (1.0 + jax.lax.erf(h * jnp.float32(_INV_SQRT2)))

    # ---- head[3..4]: Linear(512,2) (zero-padded to 128 lanes) + Tanh ----
    y = jnp.dot(h.astype(jnp.bfloat16), w2_ref[...],
                preferred_element_type=jnp.float32) + b2_ref[...]
    out_ref[...] = jnp.tanh(y)                                   # unmasked vst


def clip_regressor_geoclip(imgs, params):
    """imgs: (B, C, H, W) float32 NCHW. Returns (B, 2) float32 in (-1, 1)."""
    wenc, gamma, beta, w1, b1, w2p, b2p = params
    b = imgs.shape[0]
    # .half() at the boundary: flatten NCHW row-major and cast to bf16.
    imgs_flat = imgs.reshape(b, -1).astype(jnp.bfloat16)         # (B, D_IN)
    b_pad = pl.cdiv(b, TB) * TB
    if b_pad != b:
        imgs_flat = jnp.pad(imgs_flat, ((0, b_pad - b), (0, 0)))
    n_tiles = b_pad // TB

    cost = pl.CostEstimate(
        flops=2 * b_pad * (D_IN * D_FEAT + D_FEAT * D_HID + D_HID * D_OUT_PAD),
        transcendentals=b_pad * (D_HID + D_OUT_PAD + 1),          # erf + tanh + rsqrt
        bytes_accessed=(wenc.size * 2 + w1.size * 2 + w2p.size * 2
                        + (gamma.size + beta.size + b1.size + b2p.size) * 4
                        + b_pad * (D_IN * 2 + D_OUT_PAD * 4)),
    )

    out = pl.pallas_call(
        clip_regressor_kernel,
        out_shape=jax.ShapeDtypeStruct((b_pad, D_OUT_PAD), jnp.float32),
        grid=(n_tiles,),
        in_specs=[
            pl.BlockSpec((TB, D_IN), lambda i: (i, 0)),          # img tile (bf16)
            pl.BlockSpec((D_IN, D_FEAT), lambda i: (0, 0)),      # encoder proj (bf16, resident)
            pl.BlockSpec((1, D_FEAT), lambda i: (0, 0)),         # LN gamma (f32)
            pl.BlockSpec((1, D_FEAT), lambda i: (0, 0)),         # LN beta (f32)
            pl.BlockSpec((D_FEAT, D_HID), lambda i: (0, 0)),     # Linear1 W (bf16, resident)
            pl.BlockSpec((1, D_HID), lambda i: (0, 0)),          # Linear1 b (f32)
            pl.BlockSpec((D_HID, D_OUT_PAD), lambda i: (0, 0)),  # Linear2 W padded (bf16)
            pl.BlockSpec((1, D_OUT_PAD), lambda i: (0, 0)),      # Linear2 b padded (f32)
        ],
        out_specs=pl.BlockSpec((TB, D_OUT_PAD), lambda i: (i, 0)),
        compiler_params=pltpu.CompilerParams(
            dimension_semantics=("parallel",)),                  # megacore split on v7x
        cost_estimate=cost,
    )(imgs_flat, wenc, gamma, beta, w1, b1, w2p, b2p)

    return out[:b, :D_OUT]


def init_params(key):
    k_enc, k_w1, k_b1, k_w2, k_b2 = jax.random.split(key, 5)
    # frozen half-precision encoder stand-in
    wenc = (jax.random.normal(k_enc, (D_IN, D_FEAT), jnp.float32)
            * (1.0 / math.sqrt(D_IN))).astype(jnp.bfloat16)
    gamma = jnp.ones((1, D_FEAT), jnp.float32)       # nn.LayerNorm default init
    beta = jnp.zeros((1, D_FEAT), jnp.float32)
    # nn.Linear default init: U(-1/sqrt(fan_in), 1/sqrt(fan_in)); head weights
    # stored bf16 (f32 accumulation in-kernel), biases kept f32.
    lim1 = 1.0 / math.sqrt(D_FEAT)
    w1 = jax.random.uniform(k_w1, (D_FEAT, D_HID), jnp.float32,
                            -lim1, lim1).astype(jnp.bfloat16)
    b1 = jax.random.uniform(k_b1, (1, D_HID), jnp.float32, -lim1, lim1)
    lim2 = 1.0 / math.sqrt(D_HID)
    w2 = jax.random.uniform(k_w2, (D_HID, D_OUT), jnp.float32, -lim2, lim2)
    b2 = jax.random.uniform(k_b2, (1, D_OUT), jnp.float32, -lim2, lim2)
    # zero-pad the (512, 2) head to 128 lanes for an unmasked lane-dense store
    w2p = jnp.zeros((D_HID, D_OUT_PAD), jnp.float32).at[:, :D_OUT].set(w2)
    w2p = w2p.astype(jnp.bfloat16)
    b2p = jnp.zeros((1, D_OUT_PAD), jnp.float32).at[:, :D_OUT].set(b2)
    return wenc, gamma, beta, w1, b1, w2p, b2p


if __name__ == "__main__":
    key = jax.random.PRNGKey(0)
    k_img, k_params = jax.random.split(key)
    B = 256                                              # 2 batch tiles of 128
    imgs = jax.random.normal(k_img, (B, C, H, W), jnp.float32)   # NCHW input
    params = init_params(k_params)

    out = clip_regressor_geoclip(imgs, params)
    out = jax.block_until_ready(out)

    assert out.shape == (B, D_OUT) and out.dtype == jnp.float32
    assert bool(jnp.all(jnp.isfinite(out))) and bool(jnp.all(jnp.abs(out) <= 1.0))
    print("KERNEL_OK")
</pallas_src>

<mosaic_0001>
module attributes {stable_mosaic.version = 11 : i64} {
  func.func @clip_regressor_kernel(%arg0: i32, %arg1: memref<128x768xbf16, #tpu.memory_space<vmem>>, %arg2: memref<768x512xbf16, #tpu.memory_space<vmem>>, %arg3: memref<1x512xf32, #tpu.memory_space<vmem>>, %arg4: memref<1x512xf32, #tpu.memory_space<vmem>>, %arg5: memref<512x512xbf16, #tpu.memory_space<vmem>>, %arg6: memref<1x512xf32, #tpu.memory_space<vmem>>, %arg7: memref<512x128xbf16, #tpu.memory_space<vmem>>, %arg8: memref<1x128xf32, #tpu.memory_space<vmem>>, %arg9: memref<128x128xf32, #tpu.memory_space<vmem>>) attributes {dimension_semantics = [#tpu.dimension_semantics<parallel>], iteration_bounds = array<i64: 2>, scalar_prefetch = 0 : i64, scratch_operands = 0 : i64, tpu.core_type = #tpu.core_type<tc>, window_params = [{transform_indices = @transform_0, window_bounds = array<i64: 128, 768>}, {pipeline_mode = #tpu.pipeline_mode<synchronous>, transform_indices = @transform_1, window_bounds = array<i64: 768, 512>}, {pipeline_mode = #tpu.pipeline_mode<synchronous>, transform_indices = @transform_2, window_bounds = array<i64: 1, 512>}, {pipeline_mode = #tpu.pipeline_mode<synchronous>, transform_indices = @transform_3, window_bounds = array<i64: 1, 512>}, {pipeline_mode = #tpu.pipeline_mode<synchronous>, transform_indices = @transform_4, window_bounds = array<i64: 512, 512>}, {pipeline_mode = #tpu.pipeline_mode<synchronous>, transform_indices = @transform_5, window_bounds = array<i64: 1, 512>}, {pipeline_mode = #tpu.pipeline_mode<synchronous>, transform_indices = @transform_6, window_bounds = array<i64: 512, 128>}, {pipeline_mode = #tpu.pipeline_mode<synchronous>, transform_indices = @transform_7, window_bounds = array<i64: 1, 128>}, {transform_indices = @transform_8, window_bounds = array<i64: 128, 128>}]} {
    %c0 = arith.constant 0 : index
    %c0_0 = arith.constant 0 : index
    %0 = vector.load %arg1[%c0, %c0_0] : memref<128x768xbf16, #tpu.memory_space<vmem>>, vector<128x768xbf16>
    %c0_1 = arith.constant 0 : index
    %c0_2 = arith.constant 0 : index
    %1 = vector.load %arg2[%c0_1, %c0_2] : memref<768x512xbf16, #tpu.memory_space<vmem>>, vector<768x512xbf16>
    %cst = arith.constant dense<0.000000e+00> : vector<128x512xf32>
    %2 = tpu.matmul %0, %1, %cst {dimension_numbers = #tpu.dot_dimension_numbers<[1], [0], [0], [1], [0, 0, 1, 1], [], []>} : vector<128x768xbf16>, vector<768x512xbf16>, vector<128x512xf32> -> vector<128x512xf32>
    %cst_3 = arith.constant dense<0.000000e+00> : vector<128xf32>
    %3 = vector.multi_reduction <add>, %2, %cst_3 [1] : vector<128x512xf32> to vector<128xf32>
    %4 = vector.shape_cast %3 : vector<128xf32> to vector<128x1xf32>
    %5 = arith.mulf %2, %2 : vector<128x512xf32>
    %cst_4 = arith.constant dense<0.000000e+00> : vector<128xf32>
    %6 = vector.multi_reduction <add>, %5, %cst_4 [1] : vector<128x512xf32> to vector<128xf32>
    %7 = vector.shape_cast %6 : vector<128xf32> to vector<128x1xf32>
    %cst_5 = arith.constant 0.001953125 : f32
    %8 = vector.broadcast %cst_5 : f32 to vector<128x1xf32>
    %9 = arith.mulf %4, %8 : vector<128x1xf32>
    %cst_6 = arith.constant 0.001953125 : f32
    %10 = vector.broadcast %cst_6 : f32 to vector<128x1xf32>
    %11 = arith.mulf %7, %10 : vector<128x1xf32>
    %12 = arith.mulf %9, %9 : vector<128x1xf32>
    %13 = arith.subf %11, %12 : vector<128x1xf32>
    %14 = vector.broadcast %9 : vector<128x1xf32> to vector<128x512xf32>
    %15 = arith.subf %2, %14 : vector<128x512xf32>
    %cst_7 = arith.constant 9.99999997E-7 : f32
    %16 = vector.broadcast %cst_7 : f32 to vector<128x1xf32>
    %17 = arith.addf %13, %16 : vector<128x1xf32>
    %18 = math.rsqrt %17 : vector<128x1xf32>
    %19 = vector.broadcast %18 : vector<128x1xf32> to vector<128x512xf32>
    %20 = arith.mulf %15, %19 : vector<128x512xf32>
    %c0_8 = arith.constant 0 : index
    %c0_9 = arith.constant 0 : index
    %21 = vector.load %arg3[%c0_8, %c0_9] : memref<1x512xf32, #tpu.memory_space<vmem>>, vector<1x512xf32>
    %22 = vector.broadcast %21 : vector<1x512xf32> to vector<128x512xf32>
    %23 = arith.mulf %20, %22 : vector<128x512xf32>
    %c0_10 = arith.constant 0 : index
    %c0_11 = arith.constant 0 : index
    %24 = vector.load %arg4[%c0_10, %c0_11] : memref<1x512xf32, #tpu.memory_space<vmem>>, vector<1x512xf32>
    %25 = vector.broadcast %24 : vector<1x512xf32> to vector<128x512xf32>
    %26 = arith.addf %23, %25 : vector<128x512xf32>
    %27 = arith.truncf %26 : vector<128x512xf32> to vector<128x512xbf16>
    %c0_12 = arith.constant 0 : index
    %c0_13 = arith.constant 0 : index
    %28 = vector.load %arg5[%c0_12, %c0_13] : memref<512x512xbf16, #tpu.memory_space<vmem>>, vector<512x512xbf16>
    %cst_14 = arith.constant dense<0.000000e+00> : vector<128x512xf32>
    %29 = tpu.matmul %27, %28, %cst_14 {dimension_numbers = #tpu.dot_dimension_numbers<[1], [0], [0], [1], [0, 0, 1, 1], [], []>} : vector<128x512xbf16>, vector<512x512xbf16>, vector<128x512xf32> -> vector<128x512xf32>
    %c0_15 = arith.constant 0 : index
    %c0_16 = arith.constant 0 : index
    %30 = vector.load %arg6[%c0_15, %c0_16] : memref<1x512xf32, #tpu.memory_space<vmem>>, vector<1x512xf32>
    %31 = vector.broadcast %30 : vector<1x512xf32> to vector<128x512xf32>
    %32 = arith.addf %29, %31 : vector<128x512xf32>
    %cst_17 = arith.constant 5.000000e-01 : f32
    %33 = vector.broadcast %cst_17 : f32 to vector<128x512xf32>
    %34 = arith.mulf %33, %32 : vector<128x512xf32>
    %cst_18 = arith.constant 0.707106769 : f32
    %35 = vector.broadcast %cst_18 : f32 to vector<128x512xf32>
    %36 = arith.mulf %32, %35 : vector<128x512xf32>
    %37 = math.erf %36 : vector<128x512xf32>
    %cst_19 = arith.constant 1.000000e+00 : f32
    %38 = vector.broadcast %cst_19 : f32 to vector<128x512xf32>
    %39 = arith.addf %38, %37 : vector<128x512xf32>
    %40 = arith.mulf %34, %39 : vector<128x512xf32>
    %41 = arith.truncf %40 : vector<128x512xf32> to vector<128x512xbf16>
    %c0_20 = arith.constant 0 : index
    %c0_21 = arith.constant 0 : index
    %42 = vector.load %arg7[%c0_20, %c0_21] : memref<512x128xbf16, #tpu.memory_space<vmem>>, vector<512x128xbf16>
    %cst_22 = arith.constant dense<0.000000e+00> : vector<128x128xf32>
    %43 = tpu.matmul %41, %42, %cst_22 {dimension_numbers = #tpu.dot_dimension_numbers<[1], [0], [0], [1], [0, 0, 1, 1], [], []>} : vector<128x512xbf16>, vector<512x128xbf16>, vector<128x128xf32> -> vector<128x128xf32>
    %c0_23 = arith.constant 0 : index
    %c0_24 = arith.constant 0 : index
    %44 = vector.load %arg8[%c0_23, %c0_24] : memref<1x128xf32, #tpu.memory_space<vmem>>, vector<1x128xf32>
    %45 = vector.broadcast %44 : vector<1x128xf32> to vector<128x128xf32>
    %46 = arith.addf %43, %45 : vector<128x128xf32>
    %47 = math.tanh %46 : vector<128x128xf32>
    %c0_25 = arith.constant 0 : index
    %c0_26 = arith.constant 0 : index
    %48 = vector.load %arg9[%c0_25, %c0_26] : memref<128x128xf32, #tpu.memory_space<vmem>>, vector<128x128xf32>
    tpu.vector_store %arg9[%c0_25, %c0_26], %47 {strides = array<i32>} : memref<128x128xf32, #tpu.memory_space<vmem>>, vector<128x128xf32>,
    return
  }
  func.func @transform_0(%arg0: i32) -> (i32, i32) {
    %c0_i32 = arith.constant 0 : i32
    %c0_i32_0 = arith.constant 0 : i32
    return %arg0, %c0_i32 : i32, i32
  }
  func.func @transform_1(%arg0: i32) -> (i32, i32) {
    %c0_i32 = arith.constant 0 : i32
    %c0_i32_0 = arith.constant 0 : i32
    %c0_i32_1 = arith.constant 0 : i32
    return %c0_i32, %c0_i32_0 : i32, i32
  }
  func.func @transform_2(%arg0: i32) -> (i32, i32) {
    %c0_i32 = arith.constant 0 : i32
    %c0_i32_0 = arith.constant 0 : i32
    %c0_i32_1 = arith.constant 0 : i32
    return %c0_i32, %c0_i32_0 : i32, i32
  }
  func.func @transform_3(%arg0: i32) -> (i32, i32) {
    %c0_i32 = arith.constant 0 : i32
    %c0_i32_0 = arith.constant 0 : i32
    %c0_i32_1 = arith.constant 0 : i32
    return %c0_i32, %c0_i32_0 : i32, i32
  }
  func.func @transform_4(%arg0: i32) -> (i32, i32) {
    %c0_i32 = arith.constant 0 : i32
    %c0_i32_0 = arith.constant 0 : i32
    %c0_i32_1 = arith.constant 0 : i32
    return %c0_i32, %c0_i32_0 : i32, i32
  }
  func.func @transform_5(%arg0: i32) -> (i32, i32) {
    %c0_i32 = arith.constant 0 : i32
    %c0_i32_0 = arith.constant 0 : i32
    %c0_i32_1 = arith.constant 0 : i32
    return %c0_i32, %c0_i32_0 : i32, i32
  }
  func.func @transform_6(%arg0: i32) -> (i32, i32) {
    %c0_i32 = arith.constant 0 : i32
    %c0_i32_0 = arith.constant 0 : i32
    %c0_i32_1 = arith.constant 0 : i32
    return %c0_i32, %c0_i32_0 : i32, i32
  }
  func.func @transform_7(%arg0: i32) -> (i32, i32) {
    %c0_i32 = arith.constant 0 : i32
    %c0_i32_0 = arith.constant 0 : i32
    %c0_i32_1 = arith.constant 0 : i32
    return %c0_i32, %c0_i32_0 : i32, i32
  }
  func.func @transform_8(%arg0: i32) -> (i32, i32) {
    %c0_i32 = arith.constant 0 : i32
    %c0_i32_0 = arith.constant 0 : i32
    return %arg0, %c0_i32 : i32, i32
  }
}

</mosaic_0001>

<llo_original>
// kernel: tpu_custom_call.1
$region0: #{tpu_custom_call.1}
  #allocation0 [shape = 'u32[]', space=smem, size = 0x4, offset = 0x4, fixed_abs, tag = 'smem constant byte address 0x4 - core index']
  #allocation1 [shape = 'u32[144,128]{1,0:T(1,128)}', space=vmem, size = 0x12000, scoped, tag = 'internal scratch']
  %s0 = inlined_call_operand.hbm [shape: bf16[256,768], index: 0, kind: input, shape index: {}]
  %s1 = inlined_call_operand.hbm [shape: bf16[768,512], index: 1, kind: input, shape index: {}]
  %s2 = inlined_call_operand.vmem [shape: f32[1,512], index: 2, kind: input, shape index: {}]
  %s3 = inlined_call_operand.vmem [shape: f32[1,512], index: 3, kind: input, shape index: {}]
  %s4 = inlined_call_operand.hbm [shape: bf16[512,512], index: 4, kind: input, shape index: {}]
  %s5 = inlined_call_operand.vmem [shape: f32[1,512], index: 5, kind: input, shape index: {}]
  %s6 = inlined_call_operand.hbm [shape: bf16[512,128], index: 6, kind: input, shape index: {}]
  %s7 = inlined_call_operand.vmem [shape: f32[1,128], index: 7, kind: input, shape index: {}]
  %s8 = inlined_call_operand.hbm [shape: f32[256,128], index: 8, kind: output, shape index: {}]
  %s9 = sld [smem:[#allocation0]]
  $region81: #{tpu_custom_call.1} parent=0
    _
  %s11 = ssub.s32 1, %s9
  %s12 = scalar_select 0, %s11, %s9
  $region1: #{tpu_custom_call.1} parent=0
    #allocation2 [shape = 'u8[393216]{0}', space=vmem, size = 0x60000, scoped, tag = 'input window, operand 0']
    #allocation3 [shape = 's32[2]{0}', space=sflag, size = 0x8, scoped, tag = 'scoped memory for tpu_custom_call.1']
    #allocation4 [shape = 's32[2]{0}', space=sflag, size = 0x8, scoped, tag = 'scoped memory for tpu_custom_call.1']
    #allocation5 [shape = 'u8[786432]{0}', space=vmem, size = 0xc0000, scoped, tag = 'input window, operand 1, single buffered']
    #allocation6 [shape = 's32[1]{0}', space=sflag, size = 0x4, scoped, tag = 'scoped memory for tpu_custom_call.1']
    #allocation7 [shape = 'u8[524288]{0}', space=vmem, size = 0x80000, scoped, tag = 'input window, operand 4, single buffered']
    #allocation8 [shape = 'u8[131072]{0}', space=vmem, size = 0x20000, scoped, tag = 'input window, operand 6, single buffered']
    #allocation9 [shape = 's32[1]{0}', space=sflag, size = 0x4, scoped, tag = 'scoped memory for tpu_custom_call.1']
    #allocation10 [shape = 'u8[131072]{0}', space=vmem, size = 0x20000, scoped, tag = 'output window, operand 0']
    %13 = vsyncpa [#allocation3], 0
    %s14 = scalar_lea.sflag [#allocation3], 1
    %15 = vsyncpa %s14, 0
    %16 = vsyncpa [#allocation6], 0
    %17 = vsyncpa [#allocation9], 0
    %18 = vsyncpa [#allocation4], 0
    %s19 = scalar_lea.sflag [#allocation4], 1
    %20 = vsyncpa %s19, 0
    loop: start=0, step=1, limit=4
    $region2: #{tpu_custom_call.1} parent=1 // loop_pre_header
      _
    $region3: #{tpu_custom_call.1} parent=1 // loop_header
      %s22 = sphi 0, %s26
      %p23 = scmp.ge.s32.totalorder %s22, 4
      %s32 = sphi 0, %s34
      %s35 = sphi 0, %s32
      %s36 = sphi 0, %s35
      %s52 = sphi 0, %s36
      %s56 = sphi 0, %s56
      %s58 = sphi 0, %s56
      %s59 = sphi 0, %s58
      %s73 = sphi 0, %s59
      %s77 = sphi 0, %s77
      %s79 = sphi 0, %s77
      %s80 = sphi 0, %s79
      %s94 = sphi 0, %s80
      %s98 = sphi 0, %s98
      %s100 = sphi 0, %s98
      %s101 = sphi 0, %s100
      %s115 = sphi 0, %s101
      %s119 = sphi 0, %s119
      %s121 = sphi 0, %s119
      %s122 = sphi 0, %s121
      %s136 = sphi 0, %s122
      %s140 = sphi 0, %s140
      %s142 = sphi 0, %s140
      %s143 = sphi 0, %s142
      %s157 = sphi 0, %s143
      %s161 = sphi 0, %s161
      %s163 = sphi 0, %s161
      %s164 = sphi 0, %s163
      %s178 = sphi 0, %s164
      %s182 = sphi 0, %s182
      %s184 = sphi 0, %s182
      %s185 = sphi 0, %s184
      %s199 = sphi 0, %s185
      %s205 = sphi 0, %s207
      %s208 = sphi 0, %s205
      %s209 = sphi 0, %s208
      %s225 = sphi 0, %s209
    $region4: #{tpu_custom_call.1} parent=1 // loop_header_branch
      %25 = sbr.rel (%p23) target = $region8
    $region5: #{tpu_custom_call.1} parent=1 // loop_body
      %s27 = ssub.s32 %s22, 1
      %s28 = ssub.s32 %s22, 2
      %s29 = sadd.s32 %s22, 1
      %s30 = ssub.s32 %s22, %s29
      %p31 = scmp.eq.s32.totalorder %s30, 0
      %s33 = sadd.s32 %s32, 1
      %s34 = scalar_select %p31, %s32, %s33
      %p37 = pneg %p31
      %p38 = scmp.eq.s32.totalorder %s22, 1
      %p39 = por %p37, %p38
      %p40 = scmp.ne.s32.totalorder %s32, %s35
      %p41 = scmp.eq.s32.totalorder %s22, 0
      %p42 = por %p40, %p41
      %p43 = scmp.ne.s32.totalorder %s32, %s35
      %p44 = scmp.eq.s32.totalorder %s27, 1
      %p45 = por %p43, %p44
      %p46 = scmp.ne.s32.totalorder %s35, %s36
      %p47 = scmp.eq.s32.totalorder %s27, 0
      %p48 = por %p46, %p47
      %p49 = scmp.ne.s32.totalorder %s35, %s36
      %p50 = scmp.eq.s32.totalorder %s28, 1
      %p51 = por %p49, %p50
      %p53 = scmp.ne.s32.totalorder %s36, %s52
      %p54 = scmp.eq.s32.totalorder %s28, 0
      %p55 = por %p53, %p54
      %s57 = sadd.s32 %s56, 1
      %p60 = scmp.eq.s32.totalorder %s22, 1
      %p61 = scmp.ne.s32.totalorder %s56, %s58
      %p62 = scmp.eq.s32.totalorder %s22, 0
      %p63 = por %p61, %p62
      %p64 = scmp.ne.s32.totalorder %s56, %s58
      %p65 = scmp.eq.s32.totalorder %s27, 1
      %p66 = por %p64, %p65
      %p67 = scmp.ne.s32.totalorder %s58, %s59
      %p68 = scmp.eq.s32.totalorder %s27, 0
      %p69 = por %p67, %p68
      %p70 = scmp.ne.s32.totalorder %s58, %s59
      %p71 = scmp.eq.s32.totalorder %s28, 1
      %p72 = por %p70, %p71
      %p74 = scmp.ne.s32.totalorder %s59, %s73
      %p75 = scmp.eq.s32.totalorder %s28, 0
      %p76 = por %p74, %p75
      %s78 = sadd.s32 %s77, 1
      %p81 = scmp.eq.s32.totalorder %s22, 1
      %p82 = scmp.ne.s32.totalorder %s77, %s79
      %p83 = scmp.eq.s32.totalorder %s22, 0
      %p84 = por %p82, %p83
      %p85 = scmp.ne.s32.totalorder %s77, %s79
      %p86 = scmp.eq.s32.totalorder %s27, 1
      %p87 = por %p85, %p86
      %p88 = scmp.ne.s32.totalorder %s79, %s80
      %p89 = scmp.eq.s32.totalorder %s27, 0
      %p90 = por %p88, %p89
      %p91 = scmp.ne.s32.totalorder %s79, %s80
      %p92 = scmp.eq.s32.totalorder %s28, 1
      %p93 = por %p91, %p92
      %p95 = scmp.ne.s32.totalorder %s80, %s94
      %p96 = scmp.eq.s32.totalorder %s28, 0
      %p97 = por %p95, %p96
      %s99 = sadd.s32 %s98, 1
      %p102 = scmp.eq.s32.totalorder %s22, 1
      %p103 = scmp.ne.s32.totalorder %s98, %s100
      %p104 = scmp.eq.s32.totalorder %s22, 0
      %p105 = por %p103, %p104
      %p106 = scmp.ne.s32.totalorder %s98, %s100
      %p107 = scmp.eq.s32.totalorder %s27, 1
      %p108 = por %p106, %p107
      %p109 = scmp.ne.s32.totalorder %s100, %s101
      %p110 = scmp.eq.s32.totalorder %s27, 0
      %p111 = por %p109, %p110
      %p112 = scmp.ne.s32.totalorder %s100, %s101
      %p113 = scmp.eq.s32.totalorder %s28, 1
      %p114 = por %p112, %p113
      %p116 = scmp.ne.s32.totalorder %s101, %s115
      %p117 = scmp.eq.s32.totalorder %s28, 0
      %p118 = por %p116, %p117
      %s120 = sadd.s32 %s119, 1
      %p123 = scmp.eq.s32.totalorder %s22, 1
      %p124 = scmp.ne.s32.totalorder %s119, %s121
      %p125 = scmp.eq.s32.totalorder %s22, 0
      %p126 = por %p124, %p125
      %p127 = scmp.ne.s32.totalorder %s119, %s121
      %p128 = scmp.eq.s32.totalorder %s27, 1
      %p129 = por %p127, %p128
      %p130 = scmp.ne.s32.totalorder %s121, %s122
      %p131 = scmp.eq.s32.totalorder %s27, 0
      %p132 = por %p130, %p131
      %p133 = scmp.ne.s32.totalorder %s121, %s122
      %p134 = scmp.eq.s32.totalorder %s28, 1
      %p135 = por %p133, %p134
      %p137 = scmp.ne.s32.totalorder %s122, %s136
      %p138 = scmp.eq.s32.totalorder %s28, 0
      %p139 = por %p137, %p138
      %s141 = sadd.s32 %s140, 1
      %p144 = scmp.eq.s32.totalorder %s22, 1
      %p145 = scmp.ne.s32.totalorder %s140, %s142
      %p146 = scmp.eq.s32.totalorder %s22, 0
      %p147 = por %p145, %p146
      %p148 = scmp.ne.s32.totalorder %s140, %s142
      %p149 = scmp.eq.s32.totalorder %s27, 1
      %p150 = por %p148, %p149
      %p151 = scmp.ne.s32.totalorder %s142, %s143
      %p152 = scmp.eq.s32.totalorder %s27, 0
      %p153 = por %p151, %p152
      %p154 = scmp.ne.s32.totalorder %s142, %s143
      %p155 = scmp.eq.s32.totalorder %s28, 1
      %p156 = por %p154, %p155
      %p158 = scmp.ne.s32.totalorder %s143, %s157
      %p159 = scmp.eq.s32.totalorder %s28, 0
      %p160 = por %p158, %p159
      %s162 = sadd.s32 %s161, 1
      %p165 = scmp.eq.s32.totalorder %s22, 1
      %p166 = scmp.ne.s32.totalorder %s161, %s163
      %p167 = scmp.eq.s32.totalorder %s22, 0
      %p168 = por %p166, %p167
      %p169 = scmp.ne.s32.totalorder %s161, %s163
      %p170 = scmp.eq.s32.totalorder %s27, 1
      %p171 = por %p169, %p170
      %p172 = scmp.ne.s32.totalorder %s163, %s164
      %p173 = scmp.eq.s32.totalorder %s27, 0
      %p174 = por %p172, %p173
      %p175 = scmp.ne.s32.totalorder %s163, %s164
      %p176 = scmp.eq.s32.totalorder %s28, 1
      %p177 = por %p175, %p176
      %p179 = scmp.ne.s32.totalorder %s164, %s178
      %p180 = scmp.eq.s32.totalorder %s28, 0
      %p181 = por %p179, %p180
      %s183 = sadd.s32 %s182, 1
      %p186 = scmp.eq.s32.totalorder %s22, 1
      %p187 = scmp.ne.s32.totalorder %s182, %s184
      %p188 = scmp.eq.s32.totalorder %s22, 0
      %p189 = por %p187, %p188
      %p190 = scmp.ne.s32.totalorder %s182, %s184
      %p191 = scmp.eq.s32.totalorder %s27, 1
      %p192 = por %p190, %p191
      %p193 = scmp.ne.s32.totalorder %s184, %s185
      %p194 = scmp.eq.s32.totalorder %s27, 0
      %p195 = por %p193, %p194
      %p196 = scmp.ne.s32.totalorder %s184, %s185
      %p197 = scmp.eq.s32.totalorder %s28, 1
      %p198 = por %p196, %p197
      %p200 = scmp.ne.s32.totalorder %s185, %s199
      %p201 = scmp.eq.s32.totalorder %s28, 0
      %p202 = por %p200, %p201
      %s203 = ssub.s32 %s22, %s29
      %p204 = scmp.eq.s32.totalorder %s203, 0
      %s206 = sadd.s32 %s205, 1
      %s207 = scalar_select %p204, %s205, %s206
      %p210 = pneg %p204
      %p211 = scmp.eq.s32.totalorder %s22, 1
      %p212 = por %p210, %p211
      %p213 = scmp.ne.s32.totalorder %s205, %s208
      %p214 = scmp.eq.s32.totalorder %s22, 0
      %p215 = por %p213, %p214
      %p216 = scmp.ne.s32.totalorder %s205, %s208
      %p217 = scmp.eq.s32.totalorder %s27, 1
      %p218 = por %p216, %p217
      %p219 = scmp.ne.s32.totalorder %s208, %s209
      %p220 = scmp.eq.s32.totalorder %s27, 0
      %p221 = por %p219, %p220
      %p222 = scmp.ne.s32.totalorder %s208, %s209
      %p223 = scmp.eq.s32.totalorder %s28, 1
      %p224 = por %p222, %p223
      %p226 = scmp.ne.s32.totalorder %s209, %s225
      %p227 = scmp.eq.s32.totalorder %s28, 0
      %p228 = por %p226, %p227
      %p229 = scmp.le.s32.totalorder 1, %s22
      %p230 = scmp.lt.s32.totalorder %s22, 3
      %p231 = pnand %p229, %p230
      %p232 = pneg %p231
      // Predicated region
      $region9: #{tpu_custom_call.1} parent=5 // pred_check
        _
      $region10: #{tpu_custom_call.1} parent=5 // pred_check_branch
        %234 = sbr.rel (%p231) target = $region12
      $region11: #{tpu_custom_call.1} parent=5 // pred_region
        %s235 = ssub.s32 %s22, 1
        // Predicated region
        $region13: #{tpu_custom_call.1} parent=11 // pred_check
          %p236 = pneg %p69
        $region14: #{tpu_custom_call.1} parent=11 // pred_check_branch
          %238 = sbr.rel (%p236) target = $region16
        $region15: #{tpu_custom_call.1} parent=11 // pred_region
          %s240 = ssub.s32 24576, 24576
          %241 = vsyncadd [#allocation6], %s240
          %s242 = sshll.u32 [#allocation5], 4
          %s243 = int_to_ptr.vmem [resolvable:$true] %s242
          %248 = dma.hbm_to_vmem [thread:$0]  %s1, 24576, %s243, [#allocation6], 256, 256, 16
        $region16: #{tpu_custom_call.1} parent=11 // pred_fallthru
          _
        // Predicated region
        $region17: #{tpu_custom_call.1} parent=11 // pred_check
          %p249 = pneg %p90
        $region18: #{tpu_custom_call.1} parent=11 // pred_check_branch
          %251 = sbr.rel (%p249) target = $region20
        $region19: #{tpu_custom_call.1} parent=11 // pred_region
          _
        $region20: #{tpu_custom_call.1} parent=11 // pred_fallthru
          _
        // Predicated region
        $region21: #{tpu_custom_call.1} parent=11 // pred_check
          %p252 = pneg %p111
        $region22: #{tpu_custom_call.1} parent=11 // pred_check_branch
          %254 = sbr.rel (%p252) target = $region24
        $region23: #{tpu_custom_call.1} parent=11 // pred_region
          _
        $region24: #{tpu_custom_call.1} parent=11 // pred_fallthru
          _
        // Predicated region
        $region25: #{tpu_custom_call.1} parent=11 // pred_check
          %p255 = pneg %p132
        $region26: #{tpu_custom_call.1} parent=11 // pred_check_branch
          %257 = sbr.rel (%p255) target = $region28
        $region27: #{tpu_custom_call.1} parent=11 // pred_region
          %s259 = ssub.s32 16384, 16384
          %260 = vsyncadd [#allocation6], %s259
          %s261 = sshll.u32 [#allocation7], 4
          %s262 = int_to_ptr.vmem [resolvable:$true] %s261
          %267 = dma.hbm_to_vmem [thread:$0]  %s4, 16384, %s262, [#allocation6], 256, 256, 16
        $region28: #{tpu_custom_call.1} parent=11 // pred_fallthru
          _
        // Predicated region
        $region29: #{tpu_custom_call.1} parent=11 // pred_check
          %p268 = pneg %p153
        $region30: #{tpu_custom_call.1} parent=11 // pred_check_branch
          %270 = sbr.rel (%p268) target = $region32
        $region31: #{tpu_custom_call.1} parent=11 // pred_region
          _
        $region32: #{tpu_custom_call.1} parent=11 // pred_fallthru
          _
        // Predicated region
        $region33: #{tpu_custom_call.1} parent=11 // pred_check
          %p271 = pneg %p174
        $region34: #{tpu_custom_call.1} parent=11 // pred_check_branch
          %273 = sbr.rel (%p271) target = $region36
        $region35: #{tpu_custom_call.1} parent=11 // pred_region
          %s275 = ssub.s32 4096, 4096
          %276 = vsyncadd [#allocation9], %s275
          %s277 = sshll.u32 [#allocation8], 4
          %s278 = int_to_ptr.vmem [resolvable:$true] %s277
          %283 = dma.hbm_to_vmem [thread:$0]  %s6, 4096, %s278, [#allocation9], 64, 64, 4
        $region36: #{tpu_custom_call.1} parent=11 // pred_fallthru
          _
        // Predicated region
        $region37: #{tpu_custom_call.1} parent=11 // pred_check
          %p284 = pneg %p195
        $region38: #{tpu_custom_call.1} parent=11 // pred_check_branch
          %286 = sbr.rel (%p284) target = $region40
        $region39: #{tpu_custom_call.1} parent=11 // pred_region
          _
        $region40: #{tpu_custom_call.1} parent=11 // pred_fallthru
          _
      $region12: #{tpu_custom_call.1} parent=5 // pred_fallthru
        _
      %p287 = scmp.lt.s32.totalorder %s22, 2
      // Predicated region
      $region41: #{tpu_custom_call.1} parent=5 // pred_check
        %p288 = pneg %p287
      $region42: #{tpu_custom_call.1} parent=5 // pred_check_branch
        %290 = sbr.rel (%p288) target = $region44
      $region43: #{tpu_custom_call.1} parent=5 // pred_region
        // Predicated region
        $region45: #{tpu_custom_call.1} parent=43 // pred_check
          %p291 = pneg %p42
        $region46: #{tpu_custom_call.1} parent=43 // pred_check_branch
          %293 = sbr.rel (%p291) target = $region48
        $region47: #{tpu_custom_call.1} parent=43 // pred_region
          %s294 = sand.u32 %s32, 1
          %s295 = scalar_lea.sflag [#allocation3], %s294
          %s296 = sand.u32 %s32, 1
          %s297 = smul.addr %s296, 384
          %s298 = scalar_lea.vmem [#allocation2], %s297
          %s299 = smul.u32 16, %s22
          %s301 = ssub.s32 6144, 6144
          %302 = vsyncadd %s295, %s301
          %s303 = smul.addr %s299, 6
          %s304 = smul.addr %s303, 64
          %s305 = scalar_lea.hbm %s0, %s304
          %s306 = sshll.u32 %s298, 4
          %s307 = int_to_ptr.vmem [resolvable:$true] %s306
          %312 = dma.hbm_to_vmem [thread:$0]  %s305, 6144, %s307, %s295, 384, 384, 24
        $region48: #{tpu_custom_call.1} parent=43 // pred_fallthru
          _
      $region44: #{tpu_custom_call.1} parent=5 // pred_fallthru
        _
      %p313 = scmp.le.s32.totalorder 1, %s22
      %p314 = scmp.lt.s32.totalorder %s22, 3
      %p315 = pnand %p313, %p314
      %p316 = pneg %p315
      // Predicated region
      $region49: #{tpu_custom_call.1} parent=5 // pred_check
        _
      $region50: #{tpu_custom_call.1} parent=5 // pred_check_branch
        %318 = sbr.rel (%p315) target = $region52
      $region51: #{tpu_custom_call.1} parent=5 // pred_region
        %s319 = ssub.s32 %s22, 1
        %s320 = sand.u32 %s35, 1
        %s321 = scalar_lea.sflag [#allocation3], %s320
        %s322 = sand.u32 %s35, 1
        %s323 = smul.addr %s322, 384
        %s324 = scalar_lea.vmem [#allocation2], %s323
        // Predicated region
        $region53: #{tpu_custom_call.1} parent=51 // pred_check
          %p325 = pneg %p48
        $region54: #{tpu_custom_call.1} parent=51 // pred_check_branch
          %327 = sbr.rel (%p325) target = $region56
        $region55: #{tpu_custom_call.1} parent=51 // pred_region
          %328 = dma.done %s321, 6144
        $region56: #{tpu_custom_call.1} parent=51 // pred_fallthru
          _
        // Predicated region
        $region57: #{tpu_custom_call.1} parent=51 // pred_check
          %p329 = pneg %p69
        $region58: #{tpu_custom_call.1} parent=51 // pred_check_branch
          %331 = sbr.rel (%p329) target = $region60
        $region59: #{tpu_custom_call.1} parent=51 // pred_region
          %332 = dma.done [#allocation6], 24576
        $region60: #{tpu_custom_call.1} parent=51 // pred_fallthru
          _
        // Predicated region
        $region61: #{tpu_custom_call.1} parent=51 // pred_check
          %p333 = pneg %p132
        $region62: #{tpu_custom_call.1} parent=51 // pred_check_branch
          %335 = sbr.rel (%p333) target = $region64
        $region63: #{tpu_custom_call.1} parent=51 // pred_region
          %336 = dma.done [#allocation6], 16384
        $region64: #{tpu_custom_call.1} parent=51 // pred_fallthru
          _
        // Predicated region
        $region65: #{tpu_custom_call.1} parent=51 // pred_check
          %p337 = pneg %p174
        $region66: #{tpu_custom_call.1} parent=51 // pred_check_branch
          %339 = sbr.rel (%p337) target = $region68
        $region67: #{tpu_custom_call.1} parent=51 // pred_region
          %340 = dma.done [#allocation9], 4096
        $region68: #{tpu_custom_call.1} parent=51 // pred_fallthru
          _
        %s341 = sand.u32 %s35, 1
        %s342 = scalar_lea.sflag [#allocation3], %s341
        %s343 = sand.u32 %s35, 1
        %s344 = smul.addr %s343, 384
        %s345 = scalar_lea.vmem [#allocation2], %s344
        %p346 = pneg %p48
        %p347 = pneg %p45
        %p348 = pneg %p69
        %p349 = pneg %p66
        %p350 = pneg %p90
        %p351 = pneg %p87
        %p352 = pneg %p111
        %p353 = pneg %p108
        %p354 = pneg %p132
        %p355 = pneg %p129
        %p356 = pneg %p153
        %p357 = pneg %p150
        %p358 = pneg %p174
        %p359 = pneg %p171
        %p360 = pneg %p195
        %p361 = pneg %p192
        %p362 = pneg %p221
        %p363 = pneg %p218
        %s364 = sand.u32 %s208, 1
        %s365 = scalar_lea.sflag [#allocation4], %s364
        %s366 = sand.u32 %s208, 1
        %s367 = smul.addr %s366, 128
        %s368 = scalar_lea.vmem [#allocation10], %s367
        %s369 = smul.u32 16, %s27
        %s370 = smul.u32 16, %s27
        %v372 = vld [vmem:[%s324] sm:$0xff]
        %v373 = vld [vmem:[%s324 + $0x8] sm:$0xff]
        %v374 = vld [vmem:[%s324 + $0x10] sm:$0xff]
        %v375 = vld [vmem:[%s324 + $0x18] sm:$0xff]
        %v376 = vld [vmem:[%s324 + $0x20] sm:$0xff]
        %v377 = vld [vmem:[%s324 + $0x28] sm:$0xff]
        %v378 = vld [vmem:[%s324 + $0x30] sm:$0xff]
        %v379 = vld [vmem:[%s324 + $0x38] sm:$0xff]
        %v380 = vld [vmem:[%s324 + $0x40] sm:$0xff]
        %v381 = vld [vmem:[%s324 + $0x48] sm:$0xff]
        %v382 = vld [vmem:[%s324 + $0x50] sm:$0xff]
        %v383 = vld [vmem:[%s324 + $0x58] sm:$0xff]
        %v384 = vld [vmem:[%s324 + $0x60] sm:$0xff]
        %v385 = vld [vmem:[%s324 + $0x68] sm:$0xff]
        %v386 = vld [vmem:[%s324 + $0x70] sm:$0xff]
        %v387 = vld [vmem:[%s324 + $0x78] sm:$0xff]
        %v388 = vld [vmem:[%s324 + $0x80] sm:$0xff]
        %v389 = vld [vmem:[%s324 + $0x88] sm:$0xff]
        %v390 = vld [vmem:[%s324 + $0x90] sm:$0xff]
        %v391 = vld [vmem:[%s324 + $0x98] sm:$0xff]
        %v392 = vld [vmem:[%s324 + $0xa0] sm:$0xff]
        %v393 = vld [vmem:[%s324 + $0xa8] sm:$0xff]
        %v394 = vld [vmem:[%s324 + $0xb0] sm:$0xff]
        %v395 = vld [vmem:[%s324 + $0xb8] sm:$0xff]
        %v396 = vld [vmem:[%s324 + $0xc0] sm:$0xff]
        %v397 = vld [vmem:[%s324 + $0xc8] sm:$0xff]
        %v398 = vld [vmem:[%s324 + $0xd0] sm:$0xff]
        %v399 = vld [vmem:[%s324 + $0xd8] sm:$0xff]
        %v400 = vld [vmem:[%s324 + $0xe0] sm:$0xff]
        %v401 = vld [vmem:[%s324 + $0xe8] sm:$0xff]
        %v402 = vld [vmem:[%s324 + $0xf0] sm:$0xff]
        %v403 = vld [vmem:[%s324 + $0xf8] sm:$0xff]
        %v404 = vld [vmem:[%s324 + $0x100] sm:$0xff]
        %v405 = vld [vmem:[%s324 + $0x108] sm:$0xff]
        %v406 = vld [vmem:[%s324 + $0x110] sm:$0xff]
        %v407 = vld [vmem:[%s324 + $0x118] sm:$0xff]
        %v408 = vld [vmem:[%s324 + $0x120] sm:$0xff]
        %v409 = vld [vmem:[%s324 + $0x128] sm:$0xff]
        %v410 = vld [vmem:[%s324 + $0x130] sm:$0xff]
        %v411 = vld [vmem:[%s324 + $0x138] sm:$0xff]
        %v412 = vld [vmem:[%s324 + $0x140] sm:$0xff]
        %v413 = vld [vmem:[%s324 + $0x148] sm:$0xff]
        %v414 = vld [vmem:[%s324 + $0x150] sm:$0xff]
        %v415 = vld [vmem:[%s324 + $0x158] sm:$0xff]
        %v416 = vld [vmem:[%s324 + $0x160] sm:$0xff]
        %v417 = vld [vmem:[%s324 + $0x168] sm:$0xff]
        %v418 = vld [vmem:[%s324 + $0x170] sm:$0xff]
        %v419 = vld [vmem:[%s324 + $0x178] sm:$0xff]
        %v420 = vld [vmem:[#allocation5] sm:$0xff]
        %v421 = vld [vmem:[#allocation5 + $0x8] sm:$0xff]
        %v422 = vld [vmem:[#allocation5 + $0x10] sm:$0xff]
        %v423 = vld [vmem:[#allocation5 + $0x18] sm:$0xff]
        %v424 = vld [vmem:[#allocation5 + $0x20] sm:$0xff]
        %v425 = vld [vmem:[#allocation5 + $0x28] sm:$0xff]
        %v426 = vld [vmem:[#allocation5 + $0x30] sm:$0xff]
        %v427 = vld [vmem:[#allocation5 + $0x38] sm:$0xff]
        %v428 = vld [vmem:[#allocation5 + $0x40] sm:$0xff]
        %v429 = vld [vmem:[#allocation5 + $0x48] sm:$0xff]
        %v430 = vld [vmem:[#allocation5 + $0x50] sm:$0xff]
        %v431 = vld [vmem:[#allocation5 + $0x58] sm:$0xff]
        %v432 = vld [vmem:[#allocation5 + $0x60] sm:$0xff]
        %v433 = vld [vmem:[#allocation5 + $0x68] sm:$0xff]
        %v434 = vld [vmem:[#allocation5 + $0x70] sm:$0xff]
        %v435 = vld [vmem:[#allocation5 + $0x78] sm:$0xff]
        %v436 = vld [vmem:[#allocation5 + $0x80] sm:$0xff]
        %v437 = vld [vmem:[#allocation5 + $0x88] sm:$0xff]
        %v438 = vld [vmem:[#allocation5 + $0x90] sm:$0xff]
        %v439 = vld [vmem:[#allocation5 + $0x98] sm:$0xff]
        %v440 = vld [vmem:[#allocation5 + $0xa0] sm:$0xff]
        %v441 = vld [vmem:[#allocation5 + $0xa8] sm:$0xff]
        %v442 = vld [vmem:[#allocation5 + $0xb0] sm:$0xff]
        %v443 = vld [vmem:[#allocation5 + $0xb8] sm:$0xff]
        %v444 = vld [vmem:[#allocation5 + $0xc0] sm:$0xff]
        %v445 = vld [vmem:[#allocation5 + $0xc8] sm:$0xff]
        %v446 = vld [vmem:[#allocation5 + $0xd0] sm:$0xff]
        %v447 = vld [vmem:[#allocation5 + $0xd8] sm:$0xff]
        %v448 = vld [vmem:[#allocation5 + $0xe0] sm:$0xff]
        %v449 = vld [vmem:[#allocation5 + $0xe8] sm:$0xff]
        %v450 = vld [vmem:[#allocation5 + $0xf0] sm:$0xff]
        %v451 = vld [vmem:[#allocation5 + $0xf8] sm:$0xff]
        %v452 = vld [vmem:[#allocation5 + $0x100] sm:$0xff]
        %v453 = vld [vmem:[#allocation5 + $0x108] sm:$0xff]
        %v454 = vld [vmem:[#allocation5 + $0x110] sm:$0xff]
        %v455 = vld [vmem:[#allocation5 + $0x118] sm:$0xff]
        %v456 = vld [vmem:[#allocation5 + $0x120] sm:$0xff]
        %v457 = vld [vmem:[#allocation5 + $0x128] sm:$0xff]
        %v458 = vld [vmem:[#allocation5 + $0x130] sm:$0xff]
        %v459 = vld [vmem:[#allocation5 + $0x138] sm:$0xff]
        %v460 = vld [vmem:[#allocation5 + $0x140] sm:$0xff]
        %v461 = vld [vmem:[#allocation5 + $0x148] sm:$0xff]
        %v462 = vld [vmem:[#allocation5 + $0x150] sm:$0xff]
        %v463 = vld [vmem:[#allocation5 + $0x158] sm:$0xff]
        %v464 = vld [vmem:[#allocation5 + $0x160] sm:$0xff]
        %v465 = vld [vmem:[#allocation5 + $0x168] sm:$0xff]
        %v466 = vld [vmem:[#allocation5 + $0x170] sm:$0xff]
        %v467 = vld [vmem:[#allocation5 + $0x178] sm:$0xff]
        %v468 = vld [vmem:[#allocation5 + $0x180] sm:$0xff]
        %v469 = vld [vmem:[#allocation5 + $0x188] sm:$0xff]
        %v470 = vld [vmem:[#allocation5 + $0x190] sm:$0xff]
        %v471 = vld [vmem:[#allocation5 + $0x198] sm:$0xff]
        %v472 = vld [vmem:[#allocation5 + $0x1a0] sm:$0xff]
        %v473 = vld [vmem:[#allocation5 + $0x1a8] sm:$0xff]
        %v474 = vld [vmem:[#allocation5 + $0x1b0] sm:$0xff]
        %v475 = vld [vmem:[#allocation5 + $0x1b8] sm:$0xff]
        %v476 = vld [vmem:[#allocation5 + $0x1c0] sm:$0xff]
        %v477 = vld [vmem:[#allocation5 + $0x1c8] sm:$0xff]
        %v478 = vld [vmem:[#allocation5 + $0x1d0] sm:$0xff]
        %v479 = vld [vmem:[#allocation5 + $0x1d8] sm:$0xff]
        %v480 = vld [vmem:[#allocation5 + $0x1e0] sm:$0xff]
        %v481 = vld [vmem:[#allocation5 + $0x1e8] sm:$0xff]
        %v482 = vld [vmem:[#allocation5 + $0x1f0] sm:$0xff]
        %v483 = vld [vmem:[#allocation5 + $0x1f8] sm:$0xff]
        %v484 = vld [vmem:[#allocation5 + $0x200] sm:$0xff]
        %v485 = vld [vmem:[#allocation5 + $0x208] sm:$0xff]
        %v486 = vld [vmem:[#allocation5 + $0x210] sm:$0xff]
        %v487 = vld [vmem:[#allocation5 + $0x218] sm:$0xff]
        %v488 = vld [vmem:[#allocation5 + $0x220] sm:$0xff]
        %v489 = vld [vmem:[#allocation5 + $0x228] sm:$0xff]
        %v490 = vld [vmem:[#allocation5 + $0x230] sm:$0xff]
        %v491 = vld [vmem:[#allocation5 + $0x238] sm:$0xff]
        %v492 = vld [vmem:[#allocation5 + $0x240] sm:$0xff]
        %v493 = vld [vmem:[#allocation5 + $0x248] sm:$0xff]
        %v494 = vld [vmem:[#allocation5 + $0x250] sm:$0xff]
        %v495 = vld [vmem:[#allocation5 + $0x258] sm:$0xff]
        %v496 = vld [vmem:[#allocation5 + $0x260] sm:$0xff]
        %v497 = vld [vmem:[#allocation5 + $0x268] sm:$0xff]
        %v498 = vld [vmem:[#allocation5 + $0x270] sm:$0xff]
        %v499 = vld [vmem:[#allocation5 + $0x278] sm:$0xff]
        %v500 = vld [vmem:[#allocation5 + $0x280] sm:$0xff]
        %v501 = vld [vmem:[#allocation5 + $0x288] sm:$0xff]
        %v502 = vld [vmem:[#allocation5 + $0x290] sm:$0xff]
        %v503 = vld [vmem:[#allocation5 + $0x298] sm:$0xff]
        %v504 = vld [vmem:[#allocation5 + $0x2a0] sm:$0xff]
        %v505 = vld [vmem:[#allocation5 + $0x2a8] sm:$0xff]
        %v506 = vld [vmem:[#allocation5 + $0x2b0] sm:$0xff]
        %v507 = vld [vmem:[#allocation5 + $0x2b8] sm:$0xff]
        %v508 = vld [vmem:[#allocation5 + $0x2c0] sm:$0xff]
        %v509 = vld [vmem:[#allocation5 + $0x2c8] sm:$0xff]
        %v510 = vld [vmem:[#allocation5 + $0x2d0] sm:$0xff]
        %v511 = vld [vmem:[#allocation5 + $0x2d8] sm:$0xff]
        %v512 = vld [vmem:[#allocation5 + $0x2e0] sm:$0xff]
        %v513 = vld [vmem:[#allocation5 + $0x2e8] sm:$0xff]
        %v514 = vld [vmem:[#allocation5 + $0x2f0] sm:$0xff]
        %v515 = vld [vmem:[#allocation5 + $0x2f8] sm:$0xff]
        %v516 = vld [vmem:[#allocation5 + $0x300] sm:$0xff]
        %v517 = vld [vmem:[#allocation5 + $0x308] sm:$0xff]
        %v518 = vld [vmem:[#allocation5 + $0x310] sm:$0xff]
        %v519 = vld [vmem:[#allocation5 + $0x318] sm:$0xff]
        %v520 = vld [vmem:[#allocation5 + $0x320] sm:$0xff]
        %v521 = vld [vmem:[#allocation5 + $0x328] sm:$0xff]
        %v522 = vld [vmem:[#allocation5 + $0x330] sm:$0xff]
        %v523 = vld [vmem:[#allocation5 + $0x338] sm:$0xff]
        %v524 = vld [vmem:[#allocation5 + $0x340] sm:$0xff]
        %v525 = vld [vmem:[#allocation5 + $0x348] sm:$0xff]
        %v526 = vld [vmem:[#allocation5 + $0x350] sm:$0xff]
        %v527 = vld [vmem:[#allocation5 + $0x358] sm:$0xff]
        %v528 = vld [vmem:[#allocation5 + $0x360] sm:$0xff]
        %v529 = vld [vmem:[#allocation5 + $0x368] sm:$0xff]
        %v530 = vld [vmem:[#allocation5 + $0x370] sm:$0xff]
        %v531 = vld [vmem:[#allocation5 + $0x378] sm:$0xff]
        %v532 = vld [vmem:[#allocation5 + $0x380] sm:$0xff]
        %v533 = vld [vmem:[#allocation5 + $0x388] sm:$0xff]
        %v534 = vld [vmem:[#allocation5 + $0x390] sm:$0xff]
        %v535 = vld [vmem:[#allocation5 + $0x398] sm:$0xff]
        %v536 = vld [vmem:[#allocation5 + $0x3a0] sm:$0xff]
        %v537 = vld [vmem:[#allocation5 + $0x3a8] sm:$0xff]
        %v538 = vld [vmem:[#allocation5 + $0x3b0] sm:$0xff]
        %v539 = vld [vmem:[#allocation5 + $0x3b8] sm:$0xff]
        %v540 = vld [vmem:[#allocation5 + $0x3c0] sm:$0xff]
        %v541 = vld [vmem:[#allocation5 + $0x3c8] sm:$0xff]
        %v542 = vld [vmem:[#allocation5 + $0x3d0] sm:$0xff]
        %v543 = vld [vmem:[#allocation5 + $0x3d8] sm:$0xff]
        %v544 = vld [vmem:[#allocation5 + $0x3e0] sm:$0xff]
        %v545 = vld [vmem:[#allocation5 + $0x3e8] sm:$0xff]
        %v546 = vld [vmem:[#allocation5 + $0x3f0] sm:$0xff]
        %v547 = vld [vmem:[#allocation5 + $0x3f8] sm:$0xff]
        %v548 = vld [vmem:[#allocation5 + $0x400] sm:$0xff]
        %v549 = vld [vmem:[#allocation5 + $0x408] sm:$0xff]
        %v550 = vld [vmem:[#allocation5 + $0x410] sm:$0xff]
        %v551 = vld [vmem:[#allocation5 + $0x418] sm:$0xff]
        %v552 = vld [vmem:[#allocation5 + $0x420] sm:$0xff]
        %v553 = vld [vmem:[#allocation5 + $0x428] sm:$0xff]
        %v554 = vld [vmem:[#allocation5 + $0x430] sm:$0xff]
        %v555 = vld [vmem:[#allocation5 + $0x438] sm:$0xff]
        %v556 = vld [vmem:[#allocation5 + $0x440] sm:$0xff]
        %v557 = vld [vmem:[#allocation5 + $0x448] sm:$0xff]
        %v558 = vld [vmem:[#allocation5 + $0x450] sm:$0xff]
        %v559 = vld [vmem:[#allocation5 + $0x458] sm:$0xff]
        %v560 = vld [vmem:[#allocation5 + $0x460] sm:$0xff]
        %v561 = vld [vmem:[#allocation5 + $0x468] sm:$0xff]
        %v562 = vld [vmem:[#allocation5 + $0x470] sm:$0xff]
        %v563 = vld [vmem:[#allocation5 + $0x478] sm:$0xff]
        %v564 = vld [vmem:[#allocation5 + $0x480] sm:$0xff]
        %v565 = vld [vmem:[#allocation5 + $0x488] sm:$0xff]
        %v566 = vld [vmem:[#allocation5 + $0x490] sm:$0xff]
        %v567 = vld [vmem:[#allocation5 + $0x498] sm:$0xff]
        %v568 = vld [vmem:[#allocation5 + $0x4a0] sm:$0xff]
        %v569 = vld [vmem:[#allocation5 + $0x4a8] sm:$0xff]
        %v570 = vld [vmem:[#allocation5 + $0x4b0] sm:$0xff]
        %v571 = vld [vmem:[#allocation5 + $0x4b8] sm:$0xff]
        %v572 = vld [vmem:[#allocation5 + $0x4c0] sm:$0xff]
        %v573 = vld [vmem:[#allocation5 + $0x4c8] sm:$0xff]
        %v574 = vld [vmem:[#allocation5 + $0x4d0] sm:$0xff]
        %v575 = vld [vmem:[#allocation5 + $0x4d8] sm:$0xff]
        %v576 = vld [vmem:[#allocation5 + $0x4e0] sm:$0xff]
        %v577 = vld [vmem:[#allocation5 + $0x4e8] sm:$0xff]
        %v578 = vld [vmem:[#allocation5 + $0x4f0] sm:$0xff]
        %v579 = vld [vmem:[#allocation5 + $0x4f8] sm:$0xff]
        %v580 = vld [vmem:[#allocation5 + $0x500] sm:$0xff]
        %v581 = vld [vmem:[#allocation5 + $0x508] sm:$0xff]
        %v582 = vld [vmem:[#allocation5 + $0x510] sm:$0xff]
        %v583 = vld [vmem:[#allocation5 + $0x518] sm:$0xff]
        %v584 = vld [vmem:[#allocation5 + $0x520] sm:$0xff]
        %v585 = vld [vmem:[#allocation5 + $0x528] sm:$0xff]
        %v586 = vld [vmem:[#allocation5 + $0x530] sm:$0xff]
        %v587 = vld [vmem:[#allocation5 + $0x538] sm:$0xff]
        %v588 = vld [vmem:[#allocation5 + $0x540] sm:$0xff]
        %v589 = vld [vmem:[#allocation5 + $0x548] sm:$0xff]
        %v590 = vld [vmem:[#allocation5 + $0x550] sm:$0xff]
        %v591 = vld [vmem:[#allocation5 + $0x558] sm:$0xff]
        %v592 = vld [vmem:[#allocation5 + $0x560] sm:$0xff]
        %v593 = vld [vmem:[#allocation5 + $0x568] sm:$0xff]
        %v594 = vld [vmem:[#allocation5 + $0x570] sm:$0xff]
        %v595 = vld [vmem:[#allocation5 + $0x578] sm:$0xff]
        %v596 = vld [vmem:[#allocation5 + $0x580] sm:$0xff]
        %v597 = vld [vmem:[#allocation5 + $0x588] sm:$0xff]
        %v598 = vld [vmem:[#allocation5 + $0x590] sm:$0xff]
        %v599 = vld [vmem:[#allocation5 + $0x598] sm:$0xff]
        %v600 = vld [vmem:[#allocation5 + $0x5a0] sm:$0xff]
        %v601 = vld [vmem:[#allocation5 + $0x5a8] sm:$0xff]
        %v602 = vld [vmem:[#allocation5 + $0x5b0] sm:$0xff]
        %v603 = vld [vmem:[#allocation5 + $0x5b8] sm:$0xff]
        %v604 = vld [vmem:[#allocation5 + $0x5c0] sm:$0xff]
        %v605 = vld [vmem:[#allocation5 + $0x5c8] sm:$0xff]
        %v606 = vld [vmem:[#allocation5 + $0x5d0] sm:$0xff]
        %v607 = vld [vmem:[#allocation5 + $0x5d8] sm:$0xff]
        %v608 = vld [vmem:[#allocation5 + $0x5e0] sm:$0xff]
        %v609 = vld [vmem:[#allocation5 + $0x5e8] sm:$0xff]
        %v610 = vld [vmem:[#allocation5 + $0x5f0] sm:$0xff]
        %v611 = vld [vmem:[#allocation5 + $0x5f8] sm:$0xff]
        %v660 = vunpack.c.l.b16 %v372
        %v661 = vunpack.c.h.b16 %v372
        %v662 = vunpack.c.l.b16 %v373
        %v663 = vunpack.c.h.b16 %v373
        %v664 = vunpack.c.l.b16 %v374
        %v665 = vunpack.c.h.b16 %v374
        %v666 = vunpack.c.l.b16 %v375
        %v667 = vunpack.c.h.b16 %v375
        %v668 = vunpack.c.l.b16 %v376
        %v669 = vunpack.c.h.b16 %v376
        %v670 = vunpack.c.l.b16 %v377
        %v671 = vunpack.c.h.b16 %v377
        %v672 = vunpack.c.l.b16 %v378
        %v673 = vunpack.c.h.b16 %v378
        %v674 = vunpack.c.l.b16 %v379
        %v675 = vunpack.c.h.b16 %v379
        %v676 = vunpack.c.l.b16 %v380
        %v677 = vunpack.c.h.b16 %v380
        %v678 = vunpack.c.l.b16 %v381
        %v679 = vunpack.c.h.b16 %v381
        %v680 = vunpack.c.l.b16 %v382
        %v681 = vunpack.c.h.b16 %v382
        %v682 = vunpack.c.l.b16 %v383
        %v683 = vunpack.c.h.b16 %v383
        %v684 = vunpack.c.l.b16 %v384
        %v685 = vunpack.c.h.b16 %v384
        %v686 = vunpack.c.l.b16 %v385
        %v687 = vunpack.c.h.b16 %v385
        %v688 = vunpack.c.l.b16 %v386
        %v689 = vunpack.c.h.b16 %v386
        %v690 = vunpack.c.l.b16 %v387
        %v691 = vunpack.c.h.b16 %v387
        %v692 = vunpack.c.l.b16 %v388
        %v693 = vunpack.c.h.b16 %v388
        %v694 = vunpack.c.l.b16 %v389
        %v695 = vunpack.c.h.b16 %v389
        %v696 = vunpack.c.l.b16 %v390
        %v697 = vunpack.c.h.b16 %v390
        %v698 = vunpack.c.l.b16 %v391
        %v699 = vunpack.c.h.b16 %v391
        %v700 = vunpack.c.l.b16 %v392
        %v701 = vunpack.c.h.b16 %v392
        %v702 = vunpack.c.l.b16 %v393
        %v703 = vunpack.c.h.b16 %v393
        %v704 = vunpack.c.l.b16 %v394
        %v705 = vunpack.c.h.b16 %v394
        %v706 = vunpack.c.l.b16 %v395
        %v707 = vunpack.c.h.b16 %v395
        %v708 = vunpack.c.l.b16 %v396
        %v709 = vunpack.c.h.b16 %v396
        %v710 = vunpack.c.l.b16 %v397
        %v711 = vunpack.c.h.b16 %v397
        %v712 = vunpack.c.l.b16 %v398
        %v713 = vunpack.c.h.b16 %v398
        %v714 = vunpack.c.l.b16 %v399
        %v715 = vunpack.c.h.b16 %v399
        %v716 = vunpack.c.l.b16 %v400
        %v717 = vunpack.c.h.b16 %v400
        %v718 = vunpack.c.l.b16 %v401
        %v719 = vunpack.c.h.b16 %v401
        %v720 = vunpack.c.l.b16 %v402
        %v721 = vunpack.c.h.b16 %v402
        %v722 = vunpack.c.l.b16 %v403
        %v723 = vunpack.c.h.b16 %v403
        %v724 = vunpack.c.l.b16 %v404
        %v725 = vunpack.c.h.b16 %v404
        %v726 = vunpack.c.l.b16 %v405
        %v727 = vunpack.c.h.b16 %v405
        %v728 = vunpack.c.l.b16 %v406
        %v729 = vunpack.c.h.b16 %v406
        %v730 = vunpack.c.l.b16 %v407
        %v731 = vunpack.c.h.b16 %v407
        %v732 = vunpack.c.l.b16 %v408
        %v733 = vunpack.c.h.b16 %v408
        %v734 = vunpack.c.l.b16 %v409
        %v735 = vunpack.c.h.b16 %v409
        %v736 = vunpack.c.l.b16 %v410
        %v737 = vunpack.c.h.b16 %v410
        %v738 = vunpack.c.l.b16 %v411
        %v739 = vunpack.c.h.b16 %v411
        %v740 = vunpack.c.l.b16 %v412
        %v741 = vunpack.c.h.b16 %v412
        %v742 = vunpack.c.l.b16 %v413
        %v743 = vunpack.c.h.b16 %v413
        %v744 = vunpack.c.l.b16 %v414
        %v745 = vunpack.c.h.b16 %v414
        %v746 = vunpack.c.l.b16 %v415
        %v747 = vunpack.c.h.b16 %v415
        %v748 = vunpack.c.l.b16 %v416
        %v749 = vunpack.c.h.b16 %v416
        %v750 = vunpack.c.l.b16 %v417
        %v751 = vunpack.c.h.b16 %v417
        %v752 = vunpack.c.l.b16 %v418
        %v753 = vunpack.c.h.b16 %v418
        %v754 = vunpack.c.l.b16 %v419
        %v755 = vunpack.c.h.b16 %v419
        %v756 = vpack.c.b16 %v666, %v660
        %v757 = vpack.c.b16 %v667, %v661
        %v758 = vpack.c.b16 %v668, %v662
        %v759 = vpack.c.b16 %v669, %v663
        %v760 = vpack.c.b16 %v670, %v664
        %v761 = vpack.c.b16 %v671, %v665
        %v762 = vpack.c.b16 %v678, %v672
        %v763 = vpack.c.b16 %v679, %v673
        %v764 = vpack.c.b16 %v680, %v674
        %v765 = vpack.c.b16 %v681, %v675
        %v766 = vpack.c.b16 %v682, %v676
        %v767 = vpack.c.b16 %v683, %v677
        %v768 = vpack.c.b16 %v690, %v684
        %v769 = vpack.c.b16 %v691, %v685
        %v770 = vpack.c.b16 %v692, %v686
        %v771 = vpack.c.b16 %v693, %v687
        %v772 = vpack.c.b16 %v694, %v688
        %v773 = vpack.c.b16 %v695, %v689
        %v774 = vpack.c.b16 %v702, %v696
        %v775 = vpack.c.b16 %v703, %v697
        %v776 = vpack.c.b16 %v704, %v698
        %v777 = vpack.c.b16 %v705, %v699
        %v778 = vpack.c.b16 %v706, %v700
        %v779 = vpack.c.b16 %v707, %v701
        %v780 = vpack.c.b16 %v714, %v708
        %v781 = vpack.c.b16 %v715, %v709
        %v782 = vpack.c.b16 %v716, %v710
        %v783 = vpack.c.b16 %v717, %v711
        %v784 = vpack.c.b16 %v718, %v712
        %v785 = vpack.c.b16 %v719, %v713
        %v786 = vpack.c.b16 %v726, %v720
        %v787 = vpack.c.b16 %v727, %v721
        %v788 = vpack.c.b16 %v728, %v722
        %v789 = vpack.c.b16 %v729, %v723
        %v790 = vpack.c.b16 %v730, %v724
        %v791 = vpack.c.b16 %v731, %v725
        %v792 = vpack.c.b16 %v738, %v732
        %v793 = vpack.c.b16 %v739, %v733
        %v794 = vpack.c.b16 %v740, %v734
        %v795 = vpack.c.b16 %v741, %v735
        %v796 = vpack.c.b16 %v742, %v736
        %v797 = vpack.c.b16 %v743, %v737
        %v798 = vpack.c.b16 %v750, %v744
        %v799 = vpack.c.b16 %v751, %v745
        %v800 = vpack.c.b16 %v752, %v746
        %v801 = vpack.c.b16 %v753, %v747
        %v802 = vpack.c.b16 %v754, %v748
        %v803 = vpack.c.b16 %v755, %v749
        %v1044 = vunpack.c.l.b16 %v420
        %v1045 = vunpack.c.h.b16 %v420
        %v1046 = vunpack.c.l.b16 %v421
        %v1047 = vunpack.c.h.b16 %v421
        %v1048 = vunpack.c.l.b16 %v422
        %v1049 = vunpack.c.h.b16 %v422
        %v1050 = vunpack.c.l.b16 %v423
        %v1051 = vunpack.c.h.b16 %v423
        %v1052 = vunpack.c.l.b16 %v424
        %v1053 = vunpack.c.h.b16 %v424
        %v1054 = vunpack.c.l.b16 %v425
        %v1055 = vunpack.c.h.b16 %v425
        %v1056 = vunpack.c.l.b16 %v426
        %v1057 = vunpack.c.h.b16 %v426
        %v1058 = vunpack.c.l.b16 %v427
        %v1059 = vunpack.c.h.b16 %v427
        %v1060 = vunpack.c.l.b16 %v428
        %v1061 = vunpack.c.h.b16 %v428
        %v1062 = vunpack.c.l.b16 %v429
        %v1063 = vunpack.c.h.b16 %v429
        %v1064 = vunpack.c.l.b16 %v430
        %v1065 = vunpack.c.h.b16 %v430
        %v1066 = vunpack.c.l.b16 %v431
        %v1067 = vunpack.c.h.b16 %v431
        %v1068 = vunpack.c.l.b16 %v432
        %v1069 = vunpack.c.h.b16 %v432
        %v1070 = vunpack.c.l.b16 %v433
        %v1071 = vunpack.c.h.b16 %v433
        %v1072 = vunpack.c.l.b16 %v434
        %v1073 = vunpack.c.h.b16 %v434
        %v1074 = vunpack.c.l.b16 %v435
        %v1075 = vunpack.c.h.b16 %v435
        %v1076 = vunpack.c.l.b16 %v436
        %v1077 = vunpack.c.h.b16 %v436
        %v1078 = vunpack.c.l.b16 %v437
        %v1079 = vunpack.c.h.b16 %v437
        %v1080 = vunpack.c.l.b16 %v438
        %v1081 = vunpack.c.h.b16 %v438
        %v1082 = vunpack.c.l.b16 %v439
        %v1083 = vunpack.c.h.b16 %v439
        %v1084 = vunpack.c.l.b16 %v440
        %v1085 = vunpack.c.h.b16 %v440
        %v1086 = vunpack.c.l.b16 %v441
        %v1087 = vunpack.c.h.b16 %v441
        %v1088 = vunpack.c.l.b16 %v442
        %v1089 = vunpack.c.h.b16 %v442
        %v1090 = vunpack.c.l.b16 %v443
        %v1091 = vunpack.c.h.b16 %v443
        %v1092 = vunpack.c.l.b16 %v444
        %v1093 = vunpack.c.h.b16 %v444
        %v1094 = vunpack.c.l.b16 %v445
        %v1095 = vunpack.c.h.b16 %v445
        %v1096 = vunpack.c.l.b16 %v446
        %v1097 = vunpack.c.h.b16 %v446
        %v1098 = vunpack.c.l.b16 %v447
        %v1099 = vunpack.c.h.b16 %v447
        %v1100 = vunpack.c.l.b16 %v448
        %v1101 = vunpack.c.h.b16 %v448
        %v1102 = vunpack.c.l.b16 %v449
        %v1103 = vunpack.c.h.b16 %v449
        %v1104 = vunpack.c.l.b16 %v450
        %v1105 = vunpack.c.h.b16 %v450
        %v1106 = vunpack.c.l.b16 %v451
        %v1107 = vunpack.c.h.b16 %v451
        %v1108 = vunpack.c.l.b16 %v452
        %v1109 = vunpack.c.h.b16 %v452
        %v1110 = vunpack.c.l.b16 %v453
        %v1111 = vunpack.c.h.b16 %v453
        %v1112 = vunpack.c.l.b16 %v454
        %v1113 = vunpack.c.h.b16 %v454
        %v1114 = vunpack.c.l.b16 %v455
        %v1115 = vunpack.c.h.b16 %v455
        %v1116 = vunpack.c.l.b16 %v456
        %v1117 = vunpack.c.h.b16 %v456
        %v1118 = vunpack.c.l.b16 %v457
        %v1119 = vunpack.c.h.b16 %v457
        %v1120 = vunpack.c.l.b16 %v458
        %v1121 = vunpack.c.h.b16 %v458
        %v1122 = vunpack.c.l.b16 %v459
        %v1123 = vunpack.c.h.b16 %v459
        %v1124 = vunpack.c.l.b16 %v460
        %v1125 = vunpack.c.h.b16 %v460
        %v1126 = vunpack.c.l.b16 %v461
        %v1127 = vunpack.c.h.b16 %v461
        %v1128 = vunpack.c.l.b16 %v462
        %v1129 = vunpack.c.h.b16 %v462
        %v1130 = vunpack.c.l.b16 %v463
        %v1131 = vunpack.c.h.b16 %v463
        %v1132 = vunpack.c.l.b16 %v464
        %v1133 = vunpack.c.h.b16 %v464
        %v1134 = vunpack.c.l.b16 %v465
        %v1135 = vunpack.c.h.b16 %v465
        %v1136 = vunpack.c.l.b16 %v466
        %v1137 = vunpack.c.h.b16 %v466
        %v1138 = vunpack.c.l.b16 %v467
        %v1139 = vunpack.c.h.b16 %v467
        %v1140 = vunpack.c.l.b16 %v468
        %v1141 = vunpack.c.h.b16 %v468
        %v1142 = vunpack.c.l.b16 %v469
        %v1143 = vunpack.c.h.b16 %v469
        %v1144 = vunpack.c.l.b16 %v470
        %v1145 = vunpack.c.h.b16 %v470
        %v1146 = vunpack.c.l.b16 %v471
        %v1147 = vunpack.c.h.b16 %v471
        %v1148 = vunpack.c.l.b16 %v472
        %v1149 = vunpack.c.h.b16 %v472
        %v1150 = vunpack.c.l.b16 %v473
        %v1151 = vunpack.c.h.b16 %v473
        %v1152 = vunpack.c.l.b16 %v474
        %v1153 = vunpack.c.h.b16 %v474
        %v1154 = vunpack.c.l.b16 %v475
        %v1155 = vunpack.c.h.b16 %v475
        %v1156 = vunpack.c.l.b16 %v476
        %v1157 = vunpack.c.h.b16 %v476
        %v1158 = vunpack.c.l.b16 %v477
        %v1159 = vunpack.c.h.b16 %v477
        %v1160 = vunpack.c.l.b16 %v478
        %v1161 = vunpack.c.h.b16 %v478
        %v1162 = vunpack.c.l.b16 %v479
        %v1163 = vunpack.c.h.b16 %v479
        %v1164 = vunpack.c.l.b16 %v480
        %v1165 = vunpack.c.h.b16 %v480
        %v1166 = vunpack.c.l.b16 %v481
        %v1167 = vunpack.c.h.b16 %v481
        %v1168 = vunpack.c.l.b16 %v482
        %v1169 = vunpack.c.h.b16 %v482
        %v1170 = vunpack.c.l.b16 %v483
        %v1171 = vunpack.c.h.b16 %v483
        %v1172 = vunpack.c.l.b16 %v484
        %v1173 = vunpack.c.h.b16 %v484
        %v1174 = vunpack.c.l.b16 %v485
        %v1175 = vunpack.c.h.b16 %v485
        %v1176 = vunpack.c.l.b16 %v486
        %v1177 = vunpack.c.h.b16 %v486
        %v1178 = vunpack.c.l.b16 %v487
        %v1179 = vunpack.c.h.b16 %v487
        %v1180 = vunpack.c.l.b16 %v488
        %v1181 = vunpack.c.h.b16 %v488
        %v1182 = vunpack.c.l.b16 %v489
        %v1183 = vunpack.c.h.b16 %v489
        %v1184 = vunpack.c.l.b16 %v490
        %v1185 = vunpack.c.h.b16 %v490
        %v1186 = vunpack.c.l.b16 %v491
        %v1187 = vunpack.c.h.b16 %v491
        %v1188 = vunpack.c.l.b16 %v492
        %v1189 = vunpack.c.h.b16 %v492
        %v1190 = vunpack.c.l.b16 %v493
        %v1191 = vunpack.c.h.b16 %v493
        %v1192 = vunpack.c.l.b16 %v494
        %v1193 = vunpack.c.h.b16 %v494
        %v1194 = vunpack.c.l.b16 %v495
        %v1195 = vunpack.c.h.b16 %v495
        %v1196 = vunpack.c.l.b16 %v496
        %v1197 = vunpack.c.h.b16 %v496
        %v1198 = vunpack.c.l.b16 %v497
        %v1199 = vunpack.c.h.b16 %v497
        %v1200 = vunpack.c.l.b16 %v498
        %v1201 = vunpack.c.h.b16 %v498
        %v1202 = vunpack.c.l.b16 %v499
        %v1203 = vunpack.c.h.b16 %v499
        %v1204 = vunpack.c.l.b16 %v500
        %v1205 = vunpack.c.h.b16 %v500
        %v1206 = vunpack.c.l.b16 %v501
        %v1207 = vunpack.c.h.b16 %v501
        %v1208 = vunpack.c.l.b16 %v502
        %v1209 = vunpack.c.h.b16 %v502
        %v1210 = vunpack.c.l.b16 %v503
        %v1211 = vunpack.c.h.b16 %v503
        %v1212 = vunpack.c.l.b16 %v504
        %v1213 = vunpack.c.h.b16 %v504
        %v1214 = vunpack.c.l.b16 %v505
        %v1215 = vunpack.c.h.b16 %v505
        %v1216 = vunpack.c.l.b16 %v506
        %v1217 = vunpack.c.h.b16 %v506
        %v1218 = vunpack.c.l.b16 %v507
        %v1219 = vunpack.c.h.b16 %v507
        %v1220 = vunpack.c.l.b16 %v508
        %v1221 = vunpack.c.h.b16 %v508
        %v1222 = vunpack.c.l.b16 %v509
        %v1223 = vunpack.c.h.b16 %v509
        %v1224 = vunpack.c.l.b16 %v510
        %v1225 = vunpack.c.h.b16 %v510
        %v1226 = vunpack.c.l.b16 %v511
        %v1227 = vunpack.c.h.b16 %v511
        %v1228 = vunpack.c.l.b16 %v512
        %v1229 = vunpack.c.h.b16 %v512
        %v1230 = vunpack.c.l.b16 %v513
        %v1231 = vunpack.c.h.b16 %v513
        %v1232 = vunpack.c.l.b16 %v514
        %v1233 = vunpack.c.h.b16 %v514
        %v1234 = vunpack.c.l.b16 %v515
        %v1235 = vunpack.c.h.b16 %v515
        %v1236 = vunpack.c.l.b16 %v516
        %v1237 = vunpack.c.h.b16 %v516
        %v1238 = vunpack.c.l.b16 %v517
        %v1239 = vunpack.c.h.b16 %v517
        %v1240 = vunpack.c.l.b16 %v518
        %v1241 = vunpack.c.h.b16 %v518
        %v1242 = vunpack.c.l.b16 %v519
        %v1243 = vunpack.c.h.b16 %v519
        %v1244 = vunpack.c.l.b16 %v520
        %v1245 = vunpack.c.h.b16 %v520
        %v1246 = vunpack.c.l.b16 %v521
        %v1247 = vunpack.c.h.b16 %v521
        %v1248 = vunpack.c.l.b16 %v522
        %v1249 = vunpack.c.h.b16 %v522
        %v1250 = vunpack.c.l.b16 %v523
        %v1251 = vunpack.c.h.b16 %v523
        %v1252 = vunpack.c.l.b16 %v524
        %v1253 = vunpack.c.h.b16 %v524
        %v1254 = vunpack.c.l.b16 %v525
        %v1255 = vunpack.c.h.b16 %v525
        %v1256 = vunpack.c.l.b16 %v526
        %v1257 = vunpack.c.h.b16 %v526
        %v1258 = vunpack.c.l.b16 %v527
        %v1259 = vunpack.c.h.b16 %v527
        %v1260 = vunpack.c.l.b16 %v528
        %v1261 = vunpack.c.h.b16 %v528
        %v1262 = vunpack.c.l.b16 %v529
        %v1263 = vunpack.c.h.b16 %v529
        %v1264 = vunpack.c.l.b16 %v530
        %v1265 = vunpack.c.h.b16 %v530
        %v1266 = vunpack.c.l.b16 %v531
        %v1267 = vunpack.c.h.b16 %v531
        %v1268 = vunpack.c.l.b16 %v532
        %v1269 = vunpack.c.h.b16 %v532
        %v1270 = vunpack.c.l.b16 %v533
        %v1271 = vunpack.c.h.b16 %v533
        %v1272 = vunpack.c.l.b16 %v534
        %v1273 = vunpack.c.h.b16 %v534
        %v1274 = vunpack.c.l.b16 %v535
        %v1275 = vunpack.c.h.b16 %v535
        %v1276 = vunpack.c.l.b16 %v536
        %v1277 = vunpack.c.h.b16 %v536
        %v1278 = vunpack.c.l.b16 %v537
        %v1279 = vunpack.c.h.b16 %v537
        %v1280 = vunpack.c.l.b16 %v538
        %v1281 = vunpack.c.h.b16 %v538
        %v1282 = vunpack.c.l.b16 %v539
        %v1283 = vunpack.c.h.b16 %v539
        %v1284 = vunpack.c.l.b16 %v540
        %v1285 = vunpack.c.h.b16 %v540
        %v1286 = vunpack.c.l.b16 %v541
        %v1287 = vunpack.c.h.b16 %v541
        %v1288 = vunpack.c.l.b16 %v542
        %v1289 = vunpack.c.h.b16 %v542
        %v1290 = vunpack.c.l.b16 %v543
        %v1291 = vunpack.c.h.b16 %v543
        %v1292 = vunpack.c.l.b16 %v544
        %v1293 = vunpack.c.h.b16 %v544
        %v1294 = vunpack.c.l.b16 %v545
        %v1295 = vunpack.c.h.b16 %v545
        %v1296 = vunpack.c.l.b16 %v546
        %v1297 = vunpack.c.h.b16 %v546
        %v1298 = vunpack.c.l.b16 %v547
        %v1299 = vunpack.c.h.b16 %v547
        %v1300 = vunpack.c.l.b16 %v548
        %v1301 = vunpack.c.h.b16 %v548
        %v1302 = vunpack.c.l.b16 %v549
        %v1303 = vunpack.c.h.b16 %v549
        %v1304 = vunpack.c.l.b16 %v550
        %v1305 = vunpack.c.h.b16 %v550
        %v1306 = vunpack.c.l.b16 %v551
        %v1307 = vunpack.c.h.b16 %v551
        %v1308 = vunpack.c.l.b16 %v552
        %v1309 = vunpack.c.h.b16 %v552
        %v1310 = vunpack.c.l.b16 %v553
        %v1311 = vunpack.c.h.b16 %v553
        %v1312 = vunpack.c.l.b16 %v554
        %v1313 = vunpack.c.h.b16 %v554
        %v1314 = vunpack.c.l.b16 %v555
        %v1315 = vunpack.c.h.b16 %v555
        %v1316 = vunpack.c.l.b16 %v556
        %v1317 = vunpack.c.h.b16 %v556
        %v1318 = vunpack.c.l.b16 %v557
        %v1319 = vunpack.c.h.b16 %v557
        %v1320 = vunpack.c.l.b16 %v558
        %v1321 = vunpack.c.h.b16 %v558
        %v1322 = vunpack.c.l.b16 %v559
        %v1323 = vunpack.c.h.b16 %v559
        %v1324 = vunpack.c.l.b16 %v560
        %v1325 = vunpack.c.h.b16 %v560
        %v1326 = vunpack.c.l.b16 %v561
        %v1327 = vunpack.c.h.b16 %v561
        %v1328 = vunpack.c.l.b16 %v562
        %v1329 = vunpack.c.h.b16 %v562
        %v1330 = vunpack.c.l.b16 %v563
        %v1331 = vunpack.c.h.b16 %v563
        %v1332 = vunpack.c.l.b16 %v564
        %v1333 = vunpack.c.h.b16 %v564
        %v1334 = vunpack.c.l.b16 %v565
        %v1335 = vunpack.c.h.b16 %v565
        %v1336 = vunpack.c.l.b16 %v566
        %v1337 = vunpack.c.h.b16 %v566
        %v1338 = vunpack.c.l.b16 %v567
        %v1339 = vunpack.c.h.b16 %v567
        %v1340 = vunpack.c.l.b16 %v568
        %v1341 = vunpack.c.h.b16 %v568
        %v1342 = vunpack.c.l.b16 %v569
        %v1343 = vunpack.c.h.b16 %v569
        %v1344 = vunpack.c.l.b16 %v570
        %v1345 = vunpack.c.h.b16 %v570
        %v1346 = vunpack.c.l.b16 %v571
        %v1347 = vunpack.c.h.b16 %v571
        %v1348 = vunpack.c.l.b16 %v572
        %v1349 = vunpack.c.h.b16 %v572
        %v1350 = vunpack.c.l.b16 %v573
        %v1351 = vunpack.c.h.b16 %v573
        %v1352 = vunpack.c.l.b16 %v574
        %v1353 = vunpack.c.h.b16 %v574
        %v1354 = vunpack.c.l.b16 %v575
        %v1355 = vunpack.c.h.b16 %v575
        %v1356 = vunpack.c.l.b16 %v576
        %v1357 = vunpack.c.h.b16 %v576
        %v1358 = vunpack.c.l.b16 %v577
        %v1359 = vunpack.c.h.b16 %v577
        %v1360 = vunpack.c.l.b16 %v578
        %v1361 = vunpack.c.h.b16 %v578
        %v1362 = vunpack.c.l.b16 %v579
        %v1363 = vunpack.c.h.b16 %v579
        %v1364 = vunpack.c.l.b16 %v580
        %v1365 = vunpack.c.h.b16 %v580
        %v1366 = vunpack.c.l.b16 %v581
        %v1367 = vunpack.c.h.b16 %v581
        %v1368 = vunpack.c.l.b16 %v582
        %v1369 = vunpack.c.h.b16 %v582
        %v1370 = vunpack.c.l.b16 %v583
        %v1371 = vunpack.c.h.b16 %v583
        %v1372 = vunpack.c.l.b16 %v584
        %v1373 = vunpack.c.h.b16 %v584
        %v1374 = vunpack.c.l.b16 %v585
        %v1375 = vunpack.c.h.b16 %v585
        %v1376 = vunpack.c.l.b16 %v586
        %v1377 = vunpack.c.h.b16 %v586
        %v1378 = vunpack.c.l.b16 %v587
        %v1379 = vunpack.c.h.b16 %v587
        %v1380 = vunpack.c.l.b16 %v588
        %v1381 = vunpack.c.h.b16 %v588
        %v1382 = vunpack.c.l.b16 %v589
        %v1383 = vunpack.c.h.b16 %v589
        %v1384 = vunpack.c.l.b16 %v590
        %v1385 = vunpack.c.h.b16 %v590
        %v1386 = vunpack.c.l.b16 %v591
        %v1387 = vunpack.c.h.b16 %v591
        %v1388 = vunpack.c.l.b16 %v592
        %v1389 = vunpack.c.h.b16 %v592
        %v1390 = vunpack.c.l.b16 %v593
        %v1391 = vunpack.c.h.b16 %v593
        %v1392 = vunpack.c.l.b16 %v594
        %v1393 = vunpack.c.h.b16 %v594
        %v1394 = vunpack.c.l.b16 %v595
        %v1395 = vunpack.c.h.b16 %v595
        %v1396 = vunpack.c.l.b16 %v596
        %v1397 = vunpack.c.h.b16 %v596
        %v1398 = vunpack.c.l.b16 %v597
        %v1399 = vunpack.c.h.b16 %v597
        %v1400 = vunpack.c.l.b16 %v598
        %v1401 = vunpack.c.h.b16 %v598
        %v1402 = vunpack.c.l.b16 %v599
        %v1403 = vunpack.c.h.b16 %v599
        %v1404 = vunpack.c.l.b16 %v600
        %v1405 = vunpack.c.h.b16 %v600
        %v1406 = vunpack.c.l.b16 %v601
        %v1407 = vunpack.c.h.b16 %v601
        %v1408 = vunpack.c.l.b16 %v602
        %v1409 = vunpack.c.h.b16 %v602
        %v1410 = vunpack.c.l.b16 %v603
        %v1411 = vunpack.c.h.b16 %v603
        %v1412 = vunpack.c.l.b16 %v604
        %v1413 = vunpack.c.h.b16 %v604
        %v1414 = vunpack.c.l.b16 %v605
        %v1415 = vunpack.c.h.b16 %v605
        %v1416 = vunpack.c.l.b16 %v606
        %v1417 = vunpack.c.h.b16 %v606
        %v1418 = vunpack.c.l.b16 %v607
        %v1419 = vunpack.c.h.b16 %v607
        %v1420 = vunpack.c.l.b16 %v608
        %v1421 = vunpack.c.h.b16 %v608
        %v1422 = vunpack.c.l.b16 %v609
        %v1423 = vunpack.c.h.b16 %v609
        %v1424 = vunpack.c.l.b16 %v610
        %v1425 = vunpack.c.h.b16 %v610
        %v1426 = vunpack.c.l.b16 %v611
        %v1427 = vunpack.c.h.b16 %v611
        %v1428 = vpack.c.b16 %v1048, %v1044
        %v1429 = vpack.c.b16 %v1049, %v1045
        %v1430 = vpack.c.b16 %v1050, %v1046
        %v1431 = vpack.c.b16 %v1051, %v1047
        %v1432 = vpack.c.b16 %v1056, %v1052
        %v1433 = vpack.c.b16 %v1057, %v1053
        %v1434 = vpack.c.b16 %v1058, %v1054
        %v1435 = vpack.c.b16 %v1059, %v1055
        %v1436 = vpack.c.b16 %v1064, %v1060
        %v1437 = vpack.c.b16 %v1065, %v1061
        %v1438 = vpack.c.b16 %v1066, %v1062
        %v1439 = vpack.c.b16 %v1067, %v1063
        %v1440 = vpack.c.b16 %v1072, %v1068
        %v1441 = vpack.c.b16 %v1073, %v1069
        %v1442 = vpack.c.b16 %v1074, %v1070
        %v1443 = vpack.c.b16 %v1075, %v1071
        %v1444 = vpack.c.b16 %v1080, %v1076
        %v1445 = vpack.c.b16 %v1081, %v1077
        %v1446 = vpack.c.b16 %v1082, %v1078
        %v1447 = vpack.c.b16 %v1083, %v1079
        %v1448 = vpack.c.b16 %v1088, %v1084
        %v1449 = vpack.c.b16 %v1089, %v1085
        %v1450 = vpack.c.b16 %v1090, %v1086
        %v1451 = vpack.c.b16 %v1091, %v1087
        %v1452 = vpack.c.b16 %v1096, %v1092
        %v1453 = vpack.c.b16 %v1097, %v1093
        %v1454 = vpack.c.b16 %v1098, %v1094
        %v1455 = vpack.c.b16 %v1099, %v1095
        %v1456 = vpack.c.b16 %v1104, %v1100
        %v1457 = vpack.c.b16 %v1105, %v1101
        %v1458 = vpack.c.b16 %v1106, %v1102
        %v1459 = vpack.c.b16 %v1107, %v1103
        %v1460 = vpack.c.b16 %v1112, %v1108
        %v1461 = vpack.c.b16 %v1113, %v1109
        %v1462 = vpack.c.b16 %v1114, %v1110
        %v1463 = vpack.c.b16 %v1115, %v1111
        %v1464 = vpack.c.b16 %v1120, %v1116
        %v1465 = vpack.c.b16 %v1121, %v1117
        %v1466 = vpack.c.b16 %v1122, %v1118
        %v1467 = vpack.c.b16 %v1123, %v1119
        %v1468 = vpack.c.b16 %v1128, %v1124
        %v1469 = vpack.c.b16 %v1129, %v1125
        %v1470 = vpack.c.b16 %v1130, %v1126
        %v1471 = vpack.c.b16 %v1131, %v1127
        %v1472 = vpack.c.b16 %v1136, %v1132
        %v1473 = vpack.c.b16 %v1137, %v1133
        %v1474 = vpack.c.b16 %v1138, %v1134
        %v1475 = vpack.c.b16 %v1139, %v1135
        %v1476 = vpack.c.b16 %v1144, %v1140
        %v1477 = vpack.c.b16 %v1145, %v1141
        %v1478 = vpack.c.b16 %v1146, %v1142
        %v1479 = vpack.c.b16 %v1147, %v1143
        %v1480 = vpack.c.b16 %v1152, %v1148
        %v1481 = vpack.c.b16 %v1153, %v1149
        %v1482 = vpack.c.b16 %v1154, %v1150
        %v1483 = vpack.c.b16 %v1155, %v1151
        %v1484 = vpack.c.b16 %v1160, %v1156
        %v1485 = vpack.c.b16 %v1161, %v1157
        %v1486 = vpack.c.b16 %v1162, %v1158
        %v1487 = vpack.c.b16 %v1163, %v1159
        %v1488 = vpack.c.b16 %v1168, %v1164
        %v1489 = vpack.c.b16 %v1169, %v1165
        %v1490 = vpack.c.b16 %v1170, %v1166
        %v1491 = vpack.c.b16 %v1171, %v1167
        %v1492 = vpack.c.b16 %v1176, %v1172
        %v1493 = vpack.c.b16 %v1177, %v1173
        %v1494 = vpack.c.b16 %v1178, %v1174
        %v1495 = vpack.c.b16 %v1179, %v1175
        %v1496 = vpack.c.b16 %v1184, %v1180
        %v1497 = vpack.c.b16 %v1185, %v1181
        %v1498 = vpack.c.b16 %v1186, %v1182
        %v1499 = vpack.c.b16 %v1187, %v1183
        %v1500 = vpack.c.b16 %v1192, %v1188
        %v1501 = vpack.c.b16 %v1193, %v1189
        %v1502 = vpack.c.b16 %v1194, %v1190
        %v1503 = vpack.c.b16 %v1195, %v1191
        %v1504 = vpack.c.b16 %v1200, %v1196
        %v1505 = vpack.c.b16 %v1201, %v1197
        %v1506 = vpack.c.b16 %v1202, %v1198
        %v1507 = vpack.c.b16 %v1203, %v1199
        %v1508 = vpack.c.b16 %v1208, %v1204
        %v1509 = vpack.c.b16 %v1209, %v1205
        %v1510 = vpack.c.b16 %v1210, %v1206
        %v1511 = vpack.c.b16 %v1211, %v1207
        %v1512 = vpack.c.b16 %v1216, %v1212
        %v1513 = vpack.c.b16 %v1217, %v1213
        %v1514 = vpack.c.b16 %v1218, %v1214
        %v1515 = vpack.c.b16 %v1219, %v1215
        %v1516 = vpack.c.b16 %v1224, %v1220
        %v1517 = vpack.c.b16 %v1225, %v1221
        %v1518 = vpack.c.b16 %v1226, %v1222
        %v1519 = vpack.c.b16 %v1227, %v1223
        %v1520 = vpack.c.b16 %v1232, %v1228
        %v1521 = vpack.c.b16 %v1233, %v1229
        %v1522 = vpack.c.b16 %v1234, %v1230
        %v1523 = vpack.c.b16 %v1235, %v1231
        %v1524 = vpack.c.b16 %v1240, %v1236
        %v1525 = vpack.c.b16 %v1241, %v1237
        %v1526 = vpack.c.b16 %v1242, %v1238
        %v1527 = vpack.c.b16 %v1243, %v1239
        %v1528 = vpack.c.b16 %v1248, %v1244
        %v1529 = vpack.c.b16 %v1249, %v1245
        %v1530 = vpack.c.b16 %v1250, %v1246
        %v1531 = vpack.c.b16 %v1251, %v1247
        %v1532 = vpack.c.b16 %v1256, %v1252
        %v1533 = vpack.c.b16 %v1257, %v1253
        %v1534 = vpack.c.b16 %v1258, %v1254
        %v1535 = vpack.c.b16 %v1259, %v1255
        %v1536 = vpack.c.b16 %v1264, %v1260
        %v1537 = vpack.c.b16 %v1265, %v1261
        %v1538 = vpack.c.b16 %v1266, %v1262
        %v1539 = vpack.c.b16 %v1267, %v1263
        %v1540 = vpack.c.b16 %v1272, %v1268
        %v1541 = vpack.c.b16 %v1273, %v1269
        %v1542 = vpack.c.b16 %v1274, %v1270
        %v1543 = vpack.c.b16 %v1275, %v1271
        %v1544 = vpack.c.b16 %v1280, %v1276
        %v1545 = vpack.c.b16 %v1281, %v1277
        %v1546 = vpack.c.b16 %v1282, %v1278
        %v1547 = vpack.c.b16 %v1283, %v1279
        %v1548 = vpack.c.b16 %v1288, %v1284
        %v1549 = vpack.c.b16 %v1289, %v1285
        %v1550 = vpack.c.b16 %v1290, %v1286
        %v1551 = vpack.c.b16 %v1291, %v1287
        %v1552 = vpack.c.b16 %v1296, %v1292
        %v1553 = vpack.c.b16 %v1297, %v1293
        %v1554 = vpack.c.b16 %v1298, %v1294
        %v1555 = vpack.c.b16 %v1299, %v1295
        %v1556 = vpack.c.b16 %v1304, %v1300
        %v1557 = vpack.c.b16 %v1305, %v1301
        %v1558 = vpack.c.b16 %v1306, %v1302
        %v1559 = vpack.c.b16 %v1307, %v1303
        %v1560 = vpack.c.b16 %v1312, %v1308
        %v1561 = vpack.c.b16 %v1313, %v1309
        %v1562 = vpack.c.b16 %v1314, %v1310
        %v1563 = vpack.c.b16 %v1315, %v1311
        %v1564 = vpack.c.b16 %v1320, %v1316
        %v1565 = vpack.c.b16 %v1321, %v1317
        %v1566 = vpack.c.b16 %v1322, %v1318
        %v1567 = vpack.c.b16 %v1323, %v1319
        %v1568 = vpack.c.b16 %v1328, %v1324
        %v1569 = vpack.c.b16 %v1329, %v1325
        %v1570 = vpack.c.b16 %v1330, %v1326
        %v1571 = vpack.c.b16 %v1331, %v1327
        %v1572 = vpack.c.b16 %v1336, %v1332
        %v1573 = vpack.c.b16 %v1337, %v1333
        %v1574 = vpack.c.b16 %v1338, %v1334
        %v1575 = vpack.c.b16 %v1339, %v1335
        %v1576 = vpack.c.b16 %v1344, %v1340
        %v1577 = vpack.c.b16 %v1345, %v1341
        %v1578 = vpack.c.b16 %v1346, %v1342
        %v1579 = vpack.c.b16 %v1347, %v1343
        %v1580 = vpack.c.b16 %v1352, %v1348
        %v1581 = vpack.c.b16 %v1353, %v1349
        %v1582 = vpack.c.b16 %v1354, %v1350
        %v1583 = vpack.c.b16 %v1355, %v1351
        %v1584 = vpack.c.b16 %v1360, %v1356
        %v1585 = vpack.c.b16 %v1361, %v1357
        %v1586 = vpack.c.b16 %v1362, %v1358
        %v1587 = vpack.c.b16 %v1363, %v1359
        %v1588 = vpack.c.b16 %v1368, %v1364
        %v1589 = vpack.c.b16 %v1369, %v1365
        %v1590 = vpack.c.b16 %v1370, %v1366
        %v1591 = vpack.c.b16 %v1371, %v1367
        %v1592 = vpack.c.b16 %v1376, %v1372
        %v1593 = vpack.c.b16 %v1377, %v1373
        %v1594 = vpack.c.b16 %v1378, %v1374
        %v1595 = vpack.c.b16 %v1379, %v1375
        %v1596 = vpack.c.b16 %v1384, %v1380
        %v1597 = vpack.c.b16 %v1385, %v1381
        %v1598 = vpack.c.b16 %v1386, %v1382
        %v1599 = vpack.c.b16 %v1387, %v1383
        %v1600 = vpack.c.b16 %v1392, %v1388
        %v1601 = vpack.c.b16 %v1393, %v1389
        %v1602 = vpack.c.b16 %v1394, %v1390
        %v1603 = vpack.c.b16 %v1395, %v1391
        %v1604 = vpack.c.b16 %v1400, %v1396
        %v1605 = vpack.c.b16 %v1401, %v1397
        %v1606 = vpack.c.b16 %v1402, %v1398
        %v1607 = vpack.c.b16 %v1403, %v1399
        %v1608 = vpack.c.b16 %v1408, %v1404
        %v1609 = vpack.c.b16 %v1409, %v1405
        %v1610 = vpack.c.b16 %v1410, %v1406
        %v1611 = vpack.c.b16 %v1411, %v1407
        %v1612 = vpack.c.b16 %v1416, %v1412
        %v1613 = vpack.c.b16 %v1417, %v1413
        %v1614 = vpack.c.b16 %v1418, %v1414
        %v1615 = vpack.c.b16 %v1419, %v1415
        %v1616 = vpack.c.b16 %v1424, %v1420
        %v1617 = vpack.c.b16 %v1425, %v1421
        %v1618 = vpack.c.b16 %v1426, %v1422
        %v1619 = vpack.c.b16 %v1427, %v1423
        %1812 = vmatprep.subr.bf16.mxu0 %v1429
        %1813 = vmatpush1.bf16.msra.mxu0 %v1428
        %1814 = vmatprep.subr.bf16.mxu0 %v1433
        %1815 = vmatpush1.bf16.msra.mxu0 %v1432
        %1816 = vmatprep.subr.bf16.mxu0 %v1437
        %1817 = vmatpush1.bf16.msra.mxu0 %v1436
        %1818 = vmatprep.subr.bf16.mxu0 %v1441
        %1819 = vmatpush1.bf16.msra.mxu0 %v1440
        %1820 = vmatprep.subr.bf16.mxu0 %v1445
        %1821 = vmatpush1.bf16.msra.mxu0 %v1444
        %1822 = vmatprep.subr.bf16.mxu0 %v1449
        %1823 = vmatpush1.bf16.msra.mxu0 %v1448
        %1824 = vmatprep.subr.bf16.mxu0 %v1453
        %1825 = vmatpush1.bf16.msra.mxu0 %v1452
        %1826 = vmatprep.subr.bf16.mxu0 %v1457
        %1827 = vmatpush1.bf16.msra.mxu0 %v1456
        %1828 = vmatprep.subr.bf16.mxu0 %v1461
        %1829 = vmatpush1.bf16.msra.mxu0 %v1460
        %1830 = vmatprep.subr.bf16.mxu0 %v1465
        %1831 = vmatpush1.bf16.msra.mxu0 %v1464
        %1832 = vmatprep.subr.bf16.mxu0 %v1469
        %1833 = vmatpush1.bf16.msra.mxu0 %v1468
        %1834 = vmatprep.subr.bf16.mxu0 %v1473
        %1835 = vmatpush1.bf16.msra.mxu0 %v1472
        %1836 = vmatprep.subr.bf16.mxu0 %v1477
        %1837 = vmatpush1.bf16.msra.mxu0 %v1476
        %1838 = vmatprep.subr.bf16.mxu0 %v1481
        %1839 = vmatpush1.bf16.msra.mxu0 %v1480
        %1840 = vmatprep.subr.bf16.mxu0 %v1485
        %1841 = vmatpush1.bf16.msra.mxu0 %v1484
        %1842 = vmatprep.subr.bf16.mxu0 %v1489
        %1843 = vmatpush1.bf16.msra.mxu0 %v1488
        %1844 = vmatprep.mubr.bf16.mxu0 %v757
        %1845 = vmatmul.mubr.bf16.gmra.mrb[0].mxu0 %v756
        %v1846 = vpop.f32.mrb[0].mxu0
        %v1847 = vadd.f32 0.0, %v1846
        %v1848 = vpop.f32.mrb[0].mxu0
        %v1849 = vadd.f32 0.0, %v1848
        %v1850 = vpop.f32.mrb[0].mxu0
        %v1851 = vadd.f32 0.0, %v1850
        %v1852 = vpop.f32.mrb[0].mxu0
        %v1853 = vadd.f32 0.0, %v1852
        %1854 = vmatprep.mubr.bf16.mxu0 %v763
        %1855 = vmatmul.mubr.bf16.gmra.mrb[0].mxu0 %v762
        %v1856 = vpop.f32.mrb[0].mxu0
        %v1857 = vadd.f32 0.0, %v1856
        %v1858 = vpop.f32.mrb[0].mxu0
        %v1859 = vadd.f32 0.0, %v1858
        %v1860 = vpop.f32.mrb[0].mxu0
        %v1861 = vadd.f32 0.0, %v1860
        %v1862 = vpop.f32.mrb[0].mxu0
        %v1863 = vadd.f32 0.0, %v1862
        %1864 = vmatprep.mubr.bf16.mxu0 %v769
        %1865 = vmatmul.mubr.bf16.gmra.mrb[0].mxu0 %v768
        %v1866 = vpop.f32.mrb[0].mxu0
        %v1867 = vadd.f32 0.0, %v1866
        %v1868 = vpop.f32.mrb[0].mxu0
        %v1869 = vadd.f32 0.0, %v1868
        %v1870 = vpop.f32.mrb[0].mxu0
        %v1871 = vadd.f32 0.0, %v1870
        %v1872 = vpop.f32.mrb[0].mxu0
        %v1873 = vadd.f32 0.0, %v1872
        %1874 = vmatprep.mubr.bf16.mxu0 %v775
        %1875 = vmatmul.mubr.bf16.gmra.mrb[0].mxu0 %v774
        %v1876 = vpop.f32.mrb[0].mxu0
        %v1877 = vadd.f32 0.0, %v1876
        %v1878 = vpop.f32.mrb[0].mxu0
        %v1879 = vadd.f32 0.0, %v1878
        %v1880 = vpop.f32.mrb[0].mxu0
        %v1881 = vadd.f32 0.0, %v1880
        %v1882 = vpop.f32.mrb[0].mxu0
        %v1883 = vadd.f32 0.0, %v1882
        %1884 = vmatprep.mubr.bf16.mxu0 %v781
        %1885 = vmatmul.mubr.bf16.gmra.mrb[0].mxu0 %v780
        %v1886 = vpop.f32.mrb[0].mxu0
        %v1887 = vadd.f32 0.0, %v1886
        %v1888 = vpop.f32.mrb[0].mxu0
        %v1889 = vadd.f32 0.0, %v1888
        %v1890 = vpop.f32.mrb[0].mxu0
        %v1891 = vadd.f32 0.0, %v1890
        %v1892 = vpop.f32.mrb[0].mxu0
        %v1893 = vadd.f32 0.0, %v1892
        %1894 = vmatprep.mubr.bf16.mxu0 %v787
        %1895 = vmatmul.mubr.bf16.gmra.mrb[0].mxu0 %v786
        %v1896 = vpop.f32.mrb[0].mxu0
        %v1897 = vadd.f32 0.0, %v1896
        %v1898 = vpop.f32.mrb[0].mxu0
        %v1899 = vadd.f32 0.0, %v1898
        %v1900 = vpop.f32.mrb[0].mxu0
        %v1901 = vadd.f32 0.0, %v1900
        %v1902 = vpop.f32.mrb[0].mxu0
        %v1903 = vadd.f32 0.0, %v1902
        %1904 = vmatprep.mubr.bf16.mxu0 %v793
        %1905 = vmatmul.mubr.bf16.gmra.mrb[0].mxu0 %v792
        %v1906 = vpop.f32.mrb[0].mxu0
        %v1907 = vadd.f32 0.0, %v1906
        %v1908 = vpop.f32.mrb[0].mxu0
        %v1909 = vadd.f32 0.0, %v1908
        %v1910 = vpop.f32.mrb[0].mxu0
        %v1911 = vadd.f32 0.0, %v1910
        %v1912 = vpop.f32.mrb[0].mxu0
        %v1913 = vadd.f32 0.0, %v1912
        %1914 = vmatprep.mubr.bf16.mxu0 %v799
        %1915 = vmatmul.mubr.bf16.gmra.mrb[0].mxu0 %v798
        %v1916 = vpop.f32.mrb[0].mxu0
        %v1917 = vadd.f32 0.0, %v1916
        %v1918 = vpop.f32.mrb[0].mxu0
        %v1919 = vadd.f32 0.0, %v1918
        %v1920 = vpop.f32.mrb[0].mxu0
        %v1921 = vadd.f32 0.0, %v1920
        %v1922 = vpop.f32.mrb[0].mxu0
        %v1923 = vadd.f32 0.0, %v1922
        %1924 = vdwg.mxu0
        %1925 = vmatprep.subr.bf16.mxu0 %v1493
        %1926 = vmatpush1.bf16.msra.mxu0 %v1492
        %1927 = vmatprep.subr.bf16.mxu0 %v1497
        %1928 = vmatpush1.bf16.msra.mxu0 %v1496
        %1929 = vmatprep.subr.bf16.mxu0 %v1501
        %1930 = vmatpush1.bf16.msra.mxu0 %v1500
        %1931 = vmatprep.subr.bf16.mxu0 %v1505
        %1932 = vmatpush1.bf16.msra.mxu0 %v1504
        %1933 = vmatprep.subr.bf16.mxu0 %v1509
        %1934 = vmatpush1.bf16.msra.mxu0 %v1508
        %1935 = vmatprep.subr.bf16.mxu0 %v1513
        %1936 = vmatpush1.bf16.msra.mxu0 %v1512
        %1937 = vmatprep.subr.bf16.mxu0 %v1517
        %1938 = vmatpush1.bf16.msra.mxu0 %v1516
        %1939 = vmatprep.subr.bf16.mxu0 %v1521
        %1940 = vmatpush1.bf16.msra.mxu0 %v1520
        %1941 = vmatprep.subr.bf16.mxu0 %v1525
        %1942 = vmatpush1.bf16.msra.mxu0 %v1524
        %1943 = vmatprep.subr.bf16.mxu0 %v1529
        %1944 = vmatpush1.bf16.msra.mxu0 %v1528
        %1945 = vmatprep.subr.bf16.mxu0 %v1533
        %1946 = vmatpush1.bf16.msra.mxu0 %v1532
        %1947 = vmatprep.subr.bf16.mxu0 %v1537
        %1948 = vmatpush1.bf16.msra.mxu0 %v1536
        %1949 = vmatprep.subr.bf16.mxu0 %v1541
        %1950 = vmatpush1.bf16.msra.mxu0 %v1540
        %1951 = vmatprep.subr.bf16.mxu0 %v1545
        %1952 = vmatpush1.bf16.msra.mxu0 %v1544
        %1953 = vmatprep.subr.bf16.mxu0 %v1549
        %1954 = vmatpush1.bf16.msra.mxu0 %v1548
        %1955 = vmatprep.subr.bf16.mxu0 %v1553
        %1956 = vmatpush1.bf16.msra.mxu0 %v1552
        %1957 = vmatprep.mubr.bf16.mxu0 %v759
        %1958 = vmatmul.mubr.bf16.gmra.mrb[0].mxu0 %v758
        %v1959 = vpop.f32.mrb[0].mxu0
        %v1960 = vadd.f32 %v1847, %v1959
        %v1961 = vpop.f32.mrb[0].mxu0
        %v1962 = vadd.f32 %v1849, %v1961
        %v1963 = vpop.f32.mrb[0].mxu0
        %v1964 = vadd.f32 %v1851, %v1963
        %v1965 = vpop.f32.mrb[0].mxu0
        %v1966 = vadd.f32 %v1853, %v1965
        %1967 = vmatprep.mubr.bf16.mxu0 %v765
        %1968 = vmatmul.mubr.bf16.gmra.mrb[0].mxu0 %v764
        %v1969 = vpop.f32.mrb[0].mxu0
        %v1970 = vadd.f32 %v1857, %v1969
        %v1971 = vpop.f32.mrb[0].mxu0
        %v1972 = vadd.f32 %v1859, %v1971
        %v1973 = vpop.f32.mrb[0].mxu0
        %v1974 = vadd.f32 %v1861, %v1973
        %v1975 = vpop.f32.mrb[0].mxu0
        %v1976 = vadd.f32 %v1863, %v1975
        %1977 = vmatprep.mubr.bf16.mxu0 %v771
        %1978 = vmatmul.mubr.bf16.gmra.mrb[0].mxu0 %v770
        %v1979 = vpop.f32.mrb[0].mxu0
        %v1980 = vadd.f32 %v1867, %v1979
        %v1981 = vpop.f32.mrb[0].mxu0
        %v1982 = vadd.f32 %v1869, %v1981
        %v1983 = vpop.f32.mrb[0].mxu0
        %v1984 = vadd.f32 %v1871, %v1983
        %v1985 = vpop.f32.mrb[0].mxu0
        %v1986 = vadd.f32 %v1873, %v1985
        %1987 = vmatprep.mubr.bf16.mxu0 %v777
        %1988 = vmatmul.mubr.bf16.gmra.mrb[0].mxu0 %v776
        %v1989 = vpop.f32.mrb[0].mxu0
        %v1990 = vadd.f32 %v1877, %v1989
        %v1991 = vpop.f32.mrb[0].mxu0
        %v1992 = vadd.f32 %v1879, %v1991
        %v1993 = vpop.f32.mrb[0].mxu0
        %v1994 = vadd.f32 %v1881, %v1993
        %v1995 = vpop.f32.mrb[0].mxu0
        %v1996 = vadd.f32 %v1883, %v1995
        %1997 = vmatprep.mubr.bf16.mxu0 %v783
        %1998 = vmatmul.mubr.bf16.gmra.mrb[0].mxu0 %v782
        %v1999 = vpop.f32.mrb[0].mxu0
        %v2000 = vadd.f32 %v1887, %v1999
        %v2001 = vpop.f32.mrb[0].mxu0
        %v2002 = vadd.f32 %v1889, %v2001
        %v2003 = vpop.f32.mrb[0].mxu0
        %v2004 = vadd.f32 %v1891, %v2003
        %v2005 = vpop.f32.mrb[0].mxu0
        %v2006 = vadd.f32 %v1893, %v2005
        %2007 = vmatprep.mubr.bf16.mxu0 %v789
        %2008 = vmatmul.mubr.bf16.gmra.mrb[0].mxu0 %v788
        %v2009 = vpop.f32.mrb[0].mxu0
        %v2010 = vadd.f32 %v1897, %v2009
        %v2011 = vpop.f32.mrb[0].mxu0
        %v2012 = vadd.f32 %v1899, %v2011
        %v2013 = vpop.f32.mrb[0].mxu0
        %v2014 = vadd.f32 %v1901, %v2013
        %v2015 = vpop.f32.mrb[0].mxu0
        %v2016 = vadd.f32 %v1903, %v2015
        %2017 = vmatprep.mubr.bf16.mxu0 %v795
        %2018 = vmatmul.mubr.bf16.gmra.mrb[0].mxu0 %v794
        %v2019 = vpop.f32.mrb[0].mxu0
        %v2020 = vadd.f32 %v1907, %v2019
        %v2021 = vpop.f32.mrb[0].mxu0
        %v2022 = vadd.f32 %v1909, %v2021
        %v2023 = vpop.f32.mrb[0].mxu0
        %v2024 = vadd.f32 %v1911, %v2023
        %v2025 = vpop.f32.mrb[0].mxu0
        %v2026 = vadd.f32 %v1913, %v2025
        %2027 = vmatprep.mubr.bf16.mxu0 %v801
        %2028 = vmatmul.mubr.bf16.gmra.mrb[0].mxu0 %v800
        %v2029 = vpop.f32.mrb[0].mxu0
        %v2030 = vadd.f32 %v1917, %v2029
        %v2031 = vpop.f32.mrb[0].mxu0
        %v2032 = vadd.f32 %v1919, %v2031
        %v2033 = vpop.f32.mrb[0].mxu0
        %v2034 = vadd.f32 %v1921, %v2033
        %v2035 = vpop.f32.mrb[0].mxu0
        %v2036 = vadd.f32 %v1923, %v2035
        %2037 = vdwg.mxu0
        %2038 = vmatprep.subr.bf16.mxu0 %v1557
        %2039 = vmatpush1.bf16.msra.mxu0 %v1556
        %2040 = vmatprep.subr.bf16.mxu0 %v1561
        %2041 = vmatpush1.bf16.msra.mxu0 %v1560
        %2042 = vmatprep.subr.bf16.mxu0 %v1565
        %2043 = vmatpush1.bf16.msra.mxu0 %v1564
        %2044 = vmatprep.subr.bf16.mxu0 %v1569
        %2045 = vmatpush1.bf16.msra.mxu0 %v1568
        %2046 = vmatprep.subr.bf16.mxu0 %v1573
        %2047 = vmatpush1.bf16.msra.mxu0 %v1572
        %2048 = vmatprep.subr.bf16.mxu0 %v1577
        %2049 = vmatpush1.bf16.msra.mxu0 %v1576
        %2050 = vmatprep.subr.bf16.mxu0 %v1581
        %2051 = vmatpush1.bf16.msra.mxu0 %v1580
        %2052 = vmatprep.subr.bf16.mxu0 %v1585
        %2053 = vmatpush1.bf16.msra.mxu0 %v1584
        %2054 = vmatprep.subr.bf16.mxu0 %v1589
        %2055 = vmatpush1.bf16.msra.mxu0 %v1588
        %2056 = vmatprep.subr.bf16.mxu0 %v1593
        %2057 = vmatpush1.bf16.msra.mxu0 %v1592
        %2058 = vmatprep.subr.bf16.mxu0 %v1597
        %2059 = vmatpush1.bf16.msra.mxu0 %v1596
        %2060 = vmatprep.subr.bf16.mxu0 %v1601
        %2061 = vmatpush1.bf16.msra.mxu0 %v1600
        %2062 = vmatprep.subr.bf16.mxu0 %v1605
        %2063 = vmatpush1.bf16.msra.mxu0 %v1604
        %2064 = vmatprep.subr.bf16.mxu0 %v1609
        %2065 = vmatpush1.bf16.msra.mxu0 %v1608
        %2066 = vmatprep.subr.bf16.mxu0 %v1613
        %2067 = vmatpush1.bf16.msra.mxu0 %v1612
        %2068 = vmatprep.subr.bf16.mxu0 %v1617
        %2069 = vmatpush1.bf16.msra.mxu0 %v1616
        %2070 = vmatprep.mubr.bf16.mxu0 %v761
        %2071 = vmatmul.mubr.bf16.gmra.mrb[0].mxu0 %v760
        %v2072 = vpop.f32.mrb[0].mxu0
        %v2073 = vadd.f32 %v1960, %v2072
        %v2074 = vpop.f32.mrb[0].mxu0
        %v2075 = vadd.f32 %v1962, %v2074
        %v2076 = vpop.f32.mrb[0].mxu0
        %v2077 = vadd.f32 %v1964, %v2076
        %v2078 = vpop.f32.mrb[0].mxu0
        %v2079 = vadd.f32 %v1966, %v2078
        %2080 = vmatprep.mubr.bf16.mxu0 %v767
        %2081 = vmatmul.mubr.bf16.gmra.mrb[0].mxu0 %v766
        %v2082 = vpop.f32.mrb[0].mxu0
        %v2083 = vadd.f32 %v1970, %v2082
        %v2084 = vpop.f32.mrb[0].mxu0
        %v2085 = vadd.f32 %v1972, %v2084
        %v2086 = vpop.f32.mrb[0].mxu0
        %v2087 = vadd.f32 %v1974, %v2086
        %v2088 = vpop.f32.mrb[0].mxu0
        %v2089 = vadd.f32 %v1976, %v2088
        %2090 = vmatprep.mubr.bf16.mxu0 %v773
        %2091 = vmatmul.mubr.bf16.gmra.mrb[0].mxu0 %v772
        %v2092 = vpop.f32.mrb[0].mxu0
        %v2093 = vadd.f32 %v1980, %v2092
        %v2094 = vpop.f32.mrb[0].mxu0
        %v2095 = vadd.f32 %v1982, %v2094
        %v2096 = vpop.f32.mrb[0].mxu0
        %v2097 = vadd.f32 %v1984, %v2096
        %v2098 = vpop.f32.mrb[0].mxu0
        %v2099 = vadd.f32 %v1986, %v2098
        %2100 = vmatprep.mubr.bf16.mxu0 %v779
        %2101 = vmatmul.mubr.bf16.gmra.mrb[0].mxu0 %v778
        %v2102 = vpop.f32.mrb[0].mxu0
        %v2103 = vadd.f32 %v1990, %v2102
        %v2104 = vpop.f32.mrb[0].mxu0
        %v2105 = vadd.f32 %v1992, %v2104
        %v2106 = vpop.f32.mrb[0].mxu0
        %v2107 = vadd.f32 %v1994, %v2106
        %v2108 = vpop.f32.mrb[0].mxu0
        %v2109 = vadd.f32 %v1996, %v2108
        %2110 = vmatprep.mubr.bf16.mxu0 %v785
        %2111 = vmatmul.mubr.bf16.gmra.mrb[0].mxu0 %v784
        %v2112 = vpop.f32.mrb[0].mxu0
        %v2113 = vadd.f32 %v2000, %v2112
        %v2114 = vpop.f32.mrb[0].mxu0
        %v2115 = vadd.f32 %v2002, %v2114
        %v2116 = vpop.f32.mrb[0].mxu0
        %v2117 = vadd.f32 %v2004, %v2116
        %v2118 = vpop.f32.mrb[0].mxu0
        %v2119 = vadd.f32 %v2006, %v2118
        %2120 = vmatprep.mubr.bf16.mxu0 %v791
        %2121 = vmatmul.mubr.bf16.gmra.mrb[0].mxu0 %v790
        %v2122 = vpop.f32.mrb[0].mxu0
        %v2123 = vadd.f32 %v2010, %v2122
        %v2124 = vpop.f32.mrb[0].mxu0
        %v2125 = vadd.f32 %v2012, %v2124
        %v2126 = vpop.f32.mrb[0].mxu0
        %v2127 = vadd.f32 %v2014, %v2126
        %v2128 = vpop.f32.mrb[0].mxu0
        %v2129 = vadd.f32 %v2016, %v2128
        %2130 = vmatprep.mubr.bf16.mxu0 %v797
        %2131 = vmatmul.mubr.bf16.gmra.mrb[0].mxu0 %v796
        %v2132 = vpop.f32.mrb[0].mxu0
        %v2133 = vadd.f32 %v2020, %v2132
        %v2134 = vpop.f32.mrb[0].mxu0
        %v2135 = vadd.f32 %v2022, %v2134
        %v2136 = vpop.f32.mrb[0].mxu0
        %v2137 = vadd.f32 %v2024, %v2136
        %v2138 = vpop.f32.mrb[0].mxu0
        %v2139 = vadd.f32 %v2026, %v2138
        %2140 = vmatprep.mubr.bf16.mxu0 %v803
        %2141 = vmatmul.mubr.bf16.gmra.mrb[0].mxu0 %v802
        %v2142 = vpop.f32.mrb[0].mxu0
        %v2143 = vadd.f32 %v2030, %v2142
        %v2144 = vpop.f32.mrb[0].mxu0
        %v2145 = vadd.f32 %v2032, %v2144
        %v2146 = vpop.f32.mrb[0].mxu0
        %v2147 = vadd.f32 %v2034, %v2146
        %v2148 = vpop.f32.mrb[0].mxu0
        %v2149 = vadd.f32 %v2036, %v2148
        %2150 = vdwg.mxu0
        %2151 = vmatprep.subr.bf16.mxu0 %v1431
        %2152 = vmatpush1.bf16.msra.mxu0 %v1430
        %2153 = vmatprep.subr.bf16.mxu0 %v1435
        %2154 = vmatpush1.bf16.msra.mxu0 %v1434
        %2155 = vmatprep.subr.bf16.mxu0 %v1439
        %2156 = vmatpush1.bf16.msra.mxu0 %v1438
        %2157 = vmatprep.subr.bf16.mxu0 %v1443
        %2158 = vmatpush1.bf16.msra.mxu0 %v1442
        %2159 = vmatprep.subr.bf16.mxu0 %v1447
        %2160 = vmatpush1.bf16.msra.mxu0 %v1446
        %2161 = vmatprep.subr.bf16.mxu0 %v1451
        %2162 = vmatpush1.bf16.msra.mxu0 %v1450
        %2163 = vmatprep.subr.bf16.mxu0 %v1455
        %2164 = vmatpush1.bf16.msra.mxu0 %v1454
        %2165 = vmatprep.subr.bf16.mxu0 %v1459
        %2166 = vmatpush1.bf16.msra.mxu0 %v1458
        %2167 = vmatprep.subr.bf16.mxu0 %v1463
        %2168 = vmatpush1.bf16.msra.mxu0 %v1462
        %2169 = vmatprep.subr.bf16.mxu0 %v1467
        %2170 = vmatpush1.bf16.msra.mxu0 %v1466
        %2171 = vmatprep.subr.bf16.mxu0 %v1471
        %2172 = vmatpush1.bf16.msra.mxu0 %v1470
        %2173 = vmatprep.subr.bf16.mxu0 %v1475
        %2174 = vmatpush1.bf16.msra.mxu0 %v1474
        %2175 = vmatprep.subr.bf16.mxu0 %v1479
        %2176 = vmatpush1.bf16.msra.mxu0 %v1478
        %2177 = vmatprep.subr.bf16.mxu0 %v1483
        %2178 = vmatpush1.bf16.msra.mxu0 %v1482
        %2179 = vmatprep.subr.bf16.mxu0 %v1487
        %2180 = vmatpush1.bf16.msra.mxu0 %v1486
        %2181 = vmatprep.subr.bf16.mxu0 %v1491
        %2182 = vmatpush1.bf16.msra.mxu0 %v1490
        %2183 = vmatprep.mubr.bf16.mxu0 %v757
        %2184 = vmatmul.mubr.bf16.gmra.mrb[0].mxu0 %v756
        %v2185 = vpop.f32.mrb[0].mxu0
        %v2186 = vadd.f32 0.0, %v2185
        %v2187 = vpop.f32.mrb[0].mxu0
        %v2188 = vadd.f32 0.0, %v2187
        %v2189 = vpop.f32.mrb[0].mxu0
        %v2190 = vadd.f32 0.0, %v2189
        %v2191 = vpop.f32.mrb[0].mxu0
        %v2192 = vadd.f32 0.0, %v2191
        %2193 = vmatprep.mubr.bf16.mxu0 %v763
        %2194 = vmatmul.mubr.bf16.gmra.mrb[0].mxu0 %v762
        %v2195 = vpop.f32.mrb[0].mxu0
        %v2196 = vadd.f32 0.0, %v2195
        %v2197 = vpop.f32.mrb[0].mxu0
        %v2198 = vadd.f32 0.0, %v2197
        %v2199 = vpop.f32.mrb[0].mxu0
        %v2200 = vadd.f32 0.0, %v2199
        %v2201 = vpop.f32.mrb[0].mxu0
        %v2202 = vadd.f32 0.0, %v2201
        %2203 = vmatprep.mubr.bf16.mxu0 %v769
        %2204 = vmatmul.mubr.bf16.gmra.mrb[0].mxu0 %v768
        %v2205 = vpop.f32.mrb[0].mxu0
        %v2206 = vadd.f32 0.0, %v2205
        %v2207 = vpop.f32.mrb[0].mxu0
        %v2208 = vadd.f32 0.0, %v2207
        %v2209 = vpop.f32.mrb[0].mxu0
        %v2210 = vadd.f32 0.0, %v2209
        %v2211 = vpop.f32.mrb[0].mxu0
        %v2212 = vadd.f32 0.0, %v2211
        %2213 = vmatprep.mubr.bf16.mxu0 %v775
        %2214 = vmatmul.mubr.bf16.gmra.mrb[0].mxu0 %v774
        %v2215 = vpop.f32.mrb[0].mxu0
        %v2216 = vadd.f32 0.0, %v2215
        %v2217 = vpop.f32.mrb[0].mxu0
        %v2218 = vadd.f32 0.0, %v2217
        %v2219 = vpop.f32.mrb[0].mxu0
        %v2220 = vadd.f32 0.0, %v2219
        %v2221 = vpop.f32.mrb[0].mxu0
        %v2222 = vadd.f32 0.0, %v2221
        %2223 = vmatprep.mubr.bf16.mxu0 %v781
        %2224 = vmatmul.mubr.bf16.gmra.mrb[0].mxu0 %v780
        %v2225 = vpop.f32.mrb[0].mxu0
        %v2226 = vadd.f32 0.0, %v2225
        %v2227 = vpop.f32.mrb[0].mxu0
        %v2228 = vadd.f32 0.0, %v2227
        %v2229 = vpop.f32.mrb[0].mxu0
        %v2230 = vadd.f32 0.0, %v2229
        %v2231 = vpop.f32.mrb[0].mxu0
        %v2232 = vadd.f32 0.0, %v2231
        %2233 = vmatprep.mubr.bf16.mxu0 %v787
        %2234 = vmatmul.mubr.bf16.gmra.mrb[0].mxu0 %v786
        %v2235 = vpop.f32.mrb[0].mxu0
        %v2236 = vadd.f32 0.0, %v2235
        %v2237 = vpop.f32.mrb[0].mxu0
        %v2238 = vadd.f32 0.0, %v2237
        %v2239 = vpop.f32.mrb[0].mxu0
        %v2240 = vadd.f32 0.0, %v2239
        %v2241 = vpop.f32.mrb[0].mxu0
        %v2242 = vadd.f32 0.0, %v2241
        %2243 = vmatprep.mubr.bf16.mxu0 %v793
        %2244 = vmatmul.mubr.bf16.gmra.mrb[0].mxu0 %v792
        %v2245 = vpop.f32.mrb[0].mxu0
        %v2246 = vadd.f32 0.0, %v2245
        %v2247 = vpop.f32.mrb[0].mxu0
        %v2248 = vadd.f32 0.0, %v2247
        %v2249 = vpop.f32.mrb[0].mxu0
        %v2250 = vadd.f32 0.0, %v2249
        %v2251 = vpop.f32.mrb[0].mxu0
        %v2252 = vadd.f32 0.0, %v2251
        %2253 = vmatprep.mubr.bf16.mxu0 %v799
        %2254 = vmatmul.mubr.bf16.gmra.mrb[0].mxu0 %v798
        %v2255 = vpop.f32.mrb[0].mxu0
        %v2256 = vadd.f32 0.0, %v2255
        %v2257 = vpop.f32.mrb[0].mxu0
        %v2258 = vadd.f32 0.0, %v2257
        %v2259 = vpop.f32.mrb[0].mxu0
        %v2260 = vadd.f32 0.0, %v2259
        %v2261 = vpop.f32.mrb[0].mxu0
        %v2262 = vadd.f32 0.0, %v2261
        %2263 = vdwg.mxu0
        %2264 = vmatprep.subr.bf16.mxu0 %v1495
        %2265 = vmatpush1.bf16.msra.mxu0 %v1494
        %2266 = vmatprep.subr.bf16.mxu0 %v1499
        %2267 = vmatpush1.bf16.msra.mxu0 %v1498
        %2268 = vmatprep.subr.bf16.mxu0 %v1503
        %2269 = vmatpush1.bf16.msra.mxu0 %v1502
        %2270 = vmatprep.subr.bf16.mxu0 %v1507
        %2271 = vmatpush1.bf16.msra.mxu0 %v1506
        %2272 = vmatprep.subr.bf16.mxu0 %v1511
        %2273 = vmatpush1.bf16.msra.mxu0 %v1510
        %2274 = vmatprep.subr.bf16.mxu0 %v1515
        %2275 = vmatpush1.bf16.msra.mxu0 %v1514
        %2276 = vmatprep.subr.bf16.mxu0 %v1519
        %2277 = vmatpush1.bf16.msra.mxu0 %v1518
        %2278 = vmatprep.subr.bf16.mxu0 %v1523
        %2279 = vmatpush1.bf16.msra.mxu0 %v1522
        %2280 = vmatprep.subr.bf16.mxu0 %v1527
        %2281 = vmatpush1.bf16.msra.mxu0 %v1526
        %2282 = vmatprep.subr.bf16.mxu0 %v1531
        %2283 = vmatpush1.bf16.msra.mxu0 %v1530
        %2284 = vmatprep.subr.bf16.mxu0 %v1535
        %2285 = vmatpush1.bf16.msra.mxu0 %v1534
        %2286 = vmatprep.subr.bf16.mxu0 %v1539
        %2287 = vmatpush1.bf16.msra.mxu0 %v1538
        %2288 = vmatprep.subr.bf16.mxu0 %v1543
        %2289 = vmatpush1.bf16.msra.mxu0 %v1542
        %2290 = vmatprep.subr.bf16.mxu0 %v1547
        %2291 = vmatpush1.bf16.msra.mxu0 %v1546
        %2292 = vmatprep.subr.bf16.mxu0 %v1551
        %2293 = vmatpush1.bf16.msra.mxu0 %v1550
        %2294 = vmatprep.subr.bf16.mxu0 %v1555
        %2295 = vmatpush1.bf16.msra.mxu0 %v1554
        %2296 = vmatprep.mubr.bf16.mxu0 %v759
        %2297 = vmatmul.mubr.bf16.gmra.mrb[0].mxu0 %v758
        %v2298 = vpop.f32.mrb[0].mxu0
        %v2299 = vadd.f32 %v2186, %v2298
        %v2300 = vpop.f32.mrb[0].mxu0
        %v2301 = vadd.f32 %v2188, %v2300
        %v2302 = vpop.f32.mrb[0].mxu0
        %v2303 = vadd.f32 %v2190, %v2302
        %v2304 = vpop.f32.mrb[0].mxu0
        %v2305 = vadd.f32 %v2192, %v2304
        %2306 = vmatprep.mubr.bf16.mxu0 %v765
        %2307 = vmatmul.mubr.bf16.gmra.mrb[0].mxu0 %v764
        %v2308 = vpop.f32.mrb[0].mxu0
        %v2309 = vadd.f32 %v2196, %v2308
        %v2310 = vpop.f32.mrb[0].mxu0
        %v2311 = vadd.f32 %v2198, %v2310
        %v2312 = vpop.f32.mrb[0].mxu0
        %v2313 = vadd.f32 %v2200, %v2312
        %v2314 = vpop.f32.mrb[0].mxu0
        %v2315 = vadd.f32 %v2202, %v2314
        %2316 = vmatprep.mubr.bf16.mxu0 %v771
        %2317 = vmatmul.mubr.bf16.gmra.mrb[0].mxu0 %v770
        %v2318 = vpop.f32.mrb[0].mxu0
        %v2319 = vadd.f32 %v2206, %v2318
        %v2320 = vpop.f32.mrb[0].mxu0
        %v2321 = vadd.f32 %v2208, %v2320
        %v2322 = vpop.f32.mrb[0].mxu0
        %v2323 = vadd.f32 %v2210, %v2322
        %v2324 = vpop.f32.mrb[0].mxu0
        %v2325 = vadd.f32 %v2212, %v2324
        %2326 = vmatprep.mubr.bf16.mxu0 %v777
        %2327 = vmatmul.mubr.bf16.gmra.mrb[0].mxu0 %v776
        %v2328 = vpop.f32.mrb[0].mxu0
        %v2329 = vadd.f32 %v2216, %v2328
        %v2330 = vpop.f32.mrb[0].mxu0
        %v2331 = vadd.f32 %v2218, %v2330
        %v2332 = vpop.f32.mrb[0].mxu0
        %v2333 = vadd.f32 %v2220, %v2332
        %v2334 = vpop.f32.mrb[0].mxu0
        %v2335 = vadd.f32 %v2222, %v2334
        %2336 = vmatprep.mubr.bf16.mxu0 %v783
        %2337 = vmatmul.mubr.bf16.gmra.mrb[0].mxu0 %v782
        %v2338 = vpop.f32.mrb[0].mxu0
        %v2339 = vadd.f32 %v2226, %v2338
        %v2340 = vpop.f32.mrb[0].mxu0
        %v2341 = vadd.f32 %v2228, %v2340
        %v2342 = vpop.f32.mrb[0].mxu0
        %v2343 = vadd.f32 %v2230, %v2342
        %v2344 = vpop.f32.mrb[0].mxu0
        %v2345 = vadd.f32 %v2232, %v2344
        %2346 = vmatprep.mubr.bf16.mxu0 %v789
        %2347 = vmatmul.mubr.bf16.gmra.mrb[0].mxu0 %v788
        %v2348 = vpop.f32.mrb[0].mxu0
        %v2349 = vadd.f32 %v2236, %v2348
        %v2350 = vpop.f32.mrb[0].mxu0
        %v2351 = vadd.f32 %v2238, %v2350
        %v2352 = vpop.f32.mrb[0].mxu0
        %v2353 = vadd.f32 %v2240, %v2352
        %v2354 = vpop.f32.mrb[0].mxu0
        %v2355 = vadd.f32 %v2242, %v2354
        %2356 = vmatprep.mubr.bf16.mxu0 %v795
        %2357 = vmatmul.mubr.bf16.gmra.mrb[0].mxu0 %v794
        %v2358 = vpop.f32.mrb[0].mxu0
        %v2359 = vadd.f32 %v2246, %v2358
        %v2360 = vpop.f32.mrb[0].mxu0
        %v2361 = vadd.f32 %v2248, %v2360
        %v2362 = vpop.f32.mrb[0].mxu0
        %v2363 = vadd.f32 %v2250, %v2362
        %v2364 = vpop.f32.mrb[0].mxu0
        %v2365 = vadd.f32 %v2252, %v2364
        %2366 = vmatprep.mubr.bf16.mxu0 %v801
        %2367 = vmatmul.mubr.bf16.gmra.mrb[0].mxu0 %v800
        %v2368 = vpop.f32.mrb[0].mxu0
        %v2369 = vadd.f32 %v2256, %v2368
        %v2370 = vpop.f32.mrb[0].mxu0
        %v2371 = vadd.f32 %v2258, %v2370
        %v2372 = vpop.f32.mrb[0].mxu0
        %v2373 = vadd.f32 %v2260, %v2372
        %v2374 = vpop.f32.mrb[0].mxu0
        %v2375 = vadd.f32 %v2262, %v2374
        %2376 = vdwg.mxu0
        %2377 = vmatprep.subr.bf16.mxu0 %v1559
        %2378 = vmatpush1.bf16.msra.mxu0 %v1558
        %2379 = vmatprep.subr.bf16.mxu0 %v1563
        %2380 = vmatpush1.bf16.msra.mxu0 %v1562
        %2381 = vmatprep.subr.bf16.mxu0 %v1567
        %2382 = vmatpush1.bf16.msra.mxu0 %v1566
        %2383 = vmatprep.subr.bf16.mxu0 %v1571
        %2384 = vmatpush1.bf16.msra.mxu0 %v1570
        %2385 = vmatprep.subr.bf16.mxu0 %v1575
        %2386 = vmatpush1.bf16.msra.mxu0 %v1574
        %2387 = vmatprep.subr.bf16.mxu0 %v1579
        %2388 = vmatpush1.bf16.msra.mxu0 %v1578
        %2389 = vmatprep.subr.bf16.mxu0 %v1583
        %2390 = vmatpush1.bf16.msra.mxu0 %v1582
        %2391 = vmatprep.subr.bf16.mxu0 %v1587
        %2392 = vmatpush1.bf16.msra.mxu0 %v1586
        %2393 = vmatprep.subr.bf16.mxu0 %v1591
        %2394 = vmatpush1.bf16.msra.mxu0 %v1590
        %2395 = vmatprep.subr.bf16.mxu0 %v1595
        %2396 = vmatpush1.bf16.msra.mxu0 %v1594
        %2397 = vmatprep.subr.bf16.mxu0 %v1599
        %2398 = vmatpush1.bf16.msra.mxu0 %v1598
        %2399 = vmatprep.subr.bf16.mxu0 %v1603
        %2400 = vmatpush1.bf16.msra.mxu0 %v1602
        %2401 = vmatprep.subr.bf16.mxu0 %v1607
        %2402 = vmatpush1.bf16.msra.mxu0 %v1606
        %2403 = vmatprep.subr.bf16.mxu0 %v1611
        %2404 = vmatpush1.bf16.msra.mxu0 %v1610
        %2405 = vmatprep.subr.bf16.mxu0 %v1615
        %2406 = vmatpush1.bf16.msra.mxu0 %v1614
        %2407 = vmatprep.subr.bf16.mxu0 %v1619
        %2408 = vmatpush1.bf16.msra.mxu0 %v1618
        %2409 = vmatprep.mubr.bf16.mxu0 %v761
        %2410 = vmatmul.mubr.bf16.gmra.mrb[0].mxu0 %v760
        %v2411 = vpop.f32.mrb[0].mxu0
        %v2412 = vadd.f32 %v2299, %v2411
        %v2413 = vpop.f32.mrb[0].mxu0
        %v2414 = vadd.f32 %v2301, %v2413
        %v2415 = vpop.f32.mrb[0].mxu0
        %v2416 = vadd.f32 %v2303, %v2415
        %v2417 = vpop.f32.mrb[0].mxu0
        %v2418 = vadd.f32 %v2305, %v2417
        %2419 = vmatprep.mubr.bf16.mxu0 %v767
        %2420 = vmatmul.mubr.bf16.gmra.mrb[0].mxu0 %v766
        %v2421 = vpop.f32.mrb[0].mxu0
        %v2422 = vadd.f32 %v2309, %v2421
        %v2423 = vpop.f32.mrb[0].mxu0
        %v2424 = vadd.f32 %v2311, %v2423
        %v2425 = vpop.f32.mrb[0].mxu0
        %v2426 = vadd.f32 %v2313, %v2425
        %v2427 = vpop.f32.mrb[0].mxu0
        %v2428 = vadd.f32 %v2315, %v2427
        %2429 = vmatprep.mubr.bf16.mxu0 %v773
        %2430 = vmatmul.mubr.bf16.gmra.mrb[0].mxu0 %v772
        %v2431 = vpop.f32.mrb[0].mxu0
        %v2432 = vadd.f32 %v2319, %v2431
        %v2433 = vpop.f32.mrb[0].mxu0
        %v2434 = vadd.f32 %v2321, %v2433
        %v2435 = vpop.f32.mrb[0].mxu0
        %v2436 = vadd.f32 %v2323, %v2435
        %v2437 = vpop.f32.mrb[0].mxu0
        %v2438 = vadd.f32 %v2325, %v2437
        %2439 = vmatprep.mubr.bf16.mxu0 %v779
        %2440 = vmatmul.mubr.bf16.gmra.mrb[0].mxu0 %v778
        %v2441 = vpop.f32.mrb[0].mxu0
        %v2442 = vadd.f32 %v2329, %v2441
        %v2443 = vpop.f32.mrb[0].mxu0
        %v2444 = vadd.f32 %v2331, %v2443
        %v2445 = vpop.f32.mrb[0].mxu0
        %v2446 = vadd.f32 %v2333, %v2445
        %v2447 = vpop.f32.mrb[0].mxu0
        %v2448 = vadd.f32 %v2335, %v2447
        %2449 = vmatprep.mubr.bf16.mxu0 %v785
        %2450 = vmatmul.mubr.bf16.gmra.mrb[0].mxu0 %v784
        %v2451 = vpop.f32.mrb[0].mxu0
        %v2452 = vadd.f32 %v2339, %v2451
        %v2453 = vpop.f32.mrb[0].mxu0
        %v2454 = vadd.f32 %v2341, %v2453
        %v2455 = vpop.f32.mrb[0].mxu0
        %v2456 = vadd.f32 %v2343, %v2455
        %v2457 = vpop.f32.mrb[0].mxu0
        %v2458 = vadd.f32 %v2345, %v2457
        %2459 = vmatprep.mubr.bf16.mxu0 %v791
        %2460 = vmatmul.mubr.bf16.gmra.mrb[0].mxu0 %v790
        %v2461 = vpop.f32.mrb[0].mxu0
        %v2462 = vadd.f32 %v2349, %v2461
        %v2463 = vpop.f32.mrb[0].mxu0
        %v2464 = vadd.f32 %v2351, %v2463
        %v2465 = vpop.f32.mrb[0].mxu0
        %v2466 = vadd.f32 %v2353, %v2465
        %v2467 = vpop.f32.mrb[0].mxu0
        %v2468 = vadd.f32 %v2355, %v2467
        %2469 = vmatprep.mubr.bf16.mxu0 %v797
        %2470 = vmatmul.mubr.bf16.gmra.mrb[0].mxu0 %v796
        %v2471 = vpop.f32.mrb[0].mxu0
        %v2472 = vadd.f32 %v2359, %v2471
        %v2473 = vpop.f32.mrb[0].mxu0
        %v2474 = vadd.f32 %v2361, %v2473
        %v2475 = vpop.f32.mrb[0].mxu0
        %v2476 = vadd.f32 %v2363, %v2475
        %v2477 = vpop.f32.mrb[0].mxu0
        %v2478 = vadd.f32 %v2365, %v2477
        %2479 = vmatprep.mubr.bf16.mxu0 %v803
        %2480 = vmatmul.mubr.bf16.gmra.mrb[0].mxu0 %v802
        %v2481 = vpop.f32.mrb[0].mxu0
        %v2482 = vadd.f32 %v2369, %v2481
        %v2483 = vpop.f32.mrb[0].mxu0
        %v2484 = vadd.f32 %v2371, %v2483
        %v2485 = vpop.f32.mrb[0].mxu0
        %v2486 = vadd.f32 %v2373, %v2485
        %v2487 = vpop.f32.mrb[0].mxu0
        %v2488 = vadd.f32 %v2375, %v2487
        %2489 = vdwg.mxu0
        %v2490 = vadd.f32 %v2073, %v2075
        %v2491 = vadd.f32 %v2490, %v2412
        %v2492 = vadd.f32 %v2491, %v2414
        %2493 = vadd.xlane.f32.xlu0 %v2492
        %v2494 = vpop.xlane.xlu0 %2493
        %v2495 = vadd.f32 %v2077, %v2079
        %v2496 = vadd.f32 %v2495, %v2416
        %v2497 = vadd.f32 %v2496, %v2418
        %2498 = vadd.xlane.f32.xlu0 %v2497
        %v2499 = vpop.xlane.xlu0 %2498
        %v2500 = vadd.f32 %v2083, %v2085
        %v2501 = vadd.f32 %v2500, %v2422
        %v2502 = vadd.f32 %v2501, %v2424
        %2503 = vadd.xlane.f32.xlu0 %v2502
        %v2504 = vpop.xlane.xlu0 %2503
        %v2505 = vadd.f32 %v2087, %v2089
        %v2506 = vadd.f32 %v2505, %v2426
        %v2507 = vadd.f32 %v2506, %v2428
        %2508 = vadd.xlane.f32.xlu0 %v2507
        %v2509 = vpop.xlane.xlu0 %2508
        %v2510 = vadd.f32 %v2093, %v2095
        %v2511 = vadd.f32 %v2510, %v2432
        %v2512 = vadd.f32 %v2511, %v2434
        %2513 = vadd.xlane.f32.xlu0 %v2512
        %v2514 = vpop.xlane.xlu0 %2513
        %v2515 = vadd.f32 %v2097, %v2099
        %v2516 = vadd.f32 %v2515, %v2436
        %v2517 = vadd.f32 %v2516, %v2438
        %2518 = vadd.xlane.f32.xlu0 %v2517
        %v2519 = vpop.xlane.xlu0 %2518
        %v2520 = vadd.f32 %v2103, %v2105
        %v2521 = vadd.f32 %v2520, %v2442
        %v2522 = vadd.f32 %v2521, %v2444
        %2523 = vadd.xlane.f32.xlu0 %v2522
        %v2524 = vpop.xlane.xlu0 %2523
        %v2525 = vadd.f32 %v2107, %v2109
        %v2526 = vadd.f32 %v2525, %v2446
        %v2527 = vadd.f32 %v2526, %v2448
        %2528 = vadd.xlane.f32.xlu0 %v2527
        %v2529 = vpop.xlane.xlu0 %2528
        %v2530 = vadd.f32 %v2113, %v2115
        %v2531 = vadd.f32 %v2530, %v2452
        %v2532 = vadd.f32 %v2531, %v2454
        %2533 = vadd.xlane.f32.xlu0 %v2532
        %v2534 = vpop.xlane.xlu0 %2533
        %v2535 = vadd.f32 %v2117, %v2119
        %v2536 = vadd.f32 %v2535, %v2456
        %v2537 = vadd.f32 %v2536, %v2458
        %2538 = vadd.xlane.f32.xlu0 %v2537
        %v2539 = vpop.xlane.xlu0 %2538
        %v2540 = vadd.f32 %v2123, %v2125
        %v2541 = vadd.f32 %v2540, %v2462
        %v2542 = vadd.f32 %v2541, %v2464
        %2543 = vadd.xlane.f32.xlu0 %v2542
        %v2544 = vpop.xlane.xlu0 %2543
        %v2545 = vadd.f32 %v2127, %v2129
        %v2546 = vadd.f32 %v2545, %v2466
        %v2547 = vadd.f32 %v2546, %v2468
        %2548 = vadd.xlane.f32.xlu0 %v2547
        %v2549 = vpop.xlane.xlu0 %2548
        %v2550 = vadd.f32 %v2133, %v2135
        %v2551 = vadd.f32 %v2550, %v2472
        %v2552 = vadd.f32 %v2551, %v2474
        %2553 = vadd.xlane.f32.xlu0 %v2552
        %v2554 = vpop.xlane.xlu0 %2553
        %v2555 = vadd.f32 %v2137, %v2139
        %v2556 = vadd.f32 %v2555, %v2476
        %v2557 = vadd.f32 %v2556, %v2478
        %2558 = vadd.xlane.f32.xlu0 %v2557
        %v2559 = vpop.xlane.xlu0 %2558
        %v2560 = vadd.f32 %v2143, %v2145
        %v2561 = vadd.f32 %v2560, %v2482
        %v2562 = vadd.f32 %v2561, %v2484
        %2563 = vadd.xlane.f32.xlu0 %v2562
        %v2564 = vpop.xlane.xlu0 %2563
        %v2565 = vadd.f32 %v2147, %v2149
        %v2566 = vadd.f32 %v2565, %v2486
        %v2567 = vadd.f32 %v2566, %v2488
        %2568 = vadd.xlane.f32.xlu0 %v2567
        %v2569 = vpop.xlane.xlu0 %2568
        %v2570 = vmul.f32 %v2073, %v2073
        %v2571 = vmul.f32 %v2075, %v2075
        %v2572 = vmul.f32 %v2412, %v2412
        %v2573 = vmul.f32 %v2414, %v2414
        %v2574 = vmul.f32 %v2077, %v2077
        %v2575 = vmul.f32 %v2079, %v2079
        %v2576 = vmul.f32 %v2416, %v2416
        %v2577 = vmul.f32 %v2418, %v2418
        %v2578 = vmul.f32 %v2083, %v2083
        %v2579 = vmul.f32 %v2085, %v2085
        %v2580 = vmul.f32 %v2422, %v2422
        %v2581 = vmul.f32 %v2424, %v2424
        %v2582 = vmul.f32 %v2087, %v2087
        %v2583 = vmul.f32 %v2089, %v2089
        %v2584 = vmul.f32 %v2426, %v2426
        %v2585 = vmul.f32 %v2428, %v2428
        %v2586 = vmul.f32 %v2093, %v2093
        %v2587 = vmul.f32 %v2095, %v2095
        %v2588 = vmul.f32 %v2432, %v2432
        %v2589 = vmul.f32 %v2434, %v2434
        %v2590 = vmul.f32 %v2097, %v2097
        %v2591 = vmul.f32 %v2099, %v2099
        %v2592 = vmul.f32 %v2436, %v2436
        %v2593 = vmul.f32 %v2438, %v2438
        %v2594 = vmul.f32 %v2103, %v2103
        %v2595 = vmul.f32 %v2105, %v2105
        %v2596 = vmul.f32 %v2442, %v2442
        %v2597 = vmul.f32 %v2444, %v2444
        %v2598 = vmul.f32 %v2107, %v2107
        %v2599 = vmul.f32 %v2109, %v2109
        %v2600 = vmul.f32 %v2446, %v2446
        %v2601 = vmul.f32 %v2448, %v2448
        %v2602 = vmul.f32 %v2113, %v2113
        %v2603 = vmul.f32 %v2115, %v2115
        %v2604 = vmul.f32 %v2452, %v2452
        %v2605 = vmul.f32 %v2454, %v2454
        %v2606 = vmul.f32 %v2117, %v2117
        %v2607 = vmul.f32 %v2119, %v2119
        %v2608 = vmul.f32 %v2456, %v2456
        %v2609 = vmul.f32 %v2458, %v2458
        %v2610 = vmul.f32 %v2123, %v2123
        %v2611 = vmul.f32 %v2125, %v2125
        %v2612 = vmul.f32 %v2462, %v2462
        %v2613 = vmul.f32 %v2464, %v2464
        %v2614 = vmul.f32 %v2127, %v2127
        %v2615 = vmul.f32 %v2129, %v2129
        %v2616 = vmul.f32 %v2466, %v2466
        %v2617 = vmul.f32 %v2468, %v2468
        %v2618 = vmul.f32 %v2133, %v2133
        %v2619 = vmul.f32 %v2135, %v2135
        %v2620 = vmul.f32 %v2472, %v2472
        %v2621 = vmul.f32 %v2474, %v2474
        %v2622 = vmul.f32 %v2137, %v2137
        %v2623 = vmul.f32 %v2139, %v2139
        %v2624 = vmul.f32 %v2476, %v2476
        %v2625 = vmul.f32 %v2478, %v2478
        %v2626 = vmul.f32 %v2143, %v2143
        %v2627 = vmul.f32 %v2145, %v2145
        %v2628 = vmul.f32 %v2482, %v2482
        %v2629 = vmul.f32 %v2484, %v2484
        %v2630 = vmul.f32 %v2147, %v2147
        %v2631 = vmul.f32 %v2149, %v2149
        %v2632 = vmul.f32 %v2486, %v2486
        %v2633 = vmul.f32 %v2488, %v2488
        %v2634 = vadd.f32 %v2570, %v2571
        %v2635 = vadd.f32 %v2634, %v2572
        %v2636 = vadd.f32 %v2635, %v2573
        %2637 = vadd.xlane.f32.xlu0 %v2636
        %v2638 = vpop.xlane.xlu0 %2637
        %v2639 = vadd.f32 %v2574, %v2575
        %v2640 = vadd.f32 %v2639, %v2576
        %v2641 = vadd.f32 %v2640, %v2577
        %2642 = vadd.xlane.f32.xlu0 %v2641
        %v2643 = vpop.xlane.xlu0 %2642
        %v2644 = vadd.f32 %v2578, %v2579
        %v2645 = vadd.f32 %v2644, %v2580
        %v2646 = vadd.f32 %v2645, %v2581
        %2647 = vadd.xlane.f32.xlu0 %v2646
        %v2648 = vpop.xlane.xlu0 %2647
        %v2649 = vadd.f32 %v2582, %v2583
        %v2650 = vadd.f32 %v2649, %v2584
        %v2651 = vadd.f32 %v2650, %v2585
        %2652 = vadd.xlane.f32.xlu0 %v2651
        %v2653 = vpop.xlane.xlu0 %2652
        %v2654 = vadd.f32 %v2586, %v2587
        %v2655 = vadd.f32 %v2654, %v2588
        %v2656 = vadd.f32 %v2655, %v2589
        %2657 = vadd.xlane.f32.xlu0 %v2656
        %v2658 = vpop.xlane.xlu0 %2657
        %v2659 = vadd.f32 %v2590, %v2591
        %v2660 = vadd.f32 %v2659, %v2592
        %v2661 = vadd.f32 %v2660, %v2593
        %2662 = vadd.xlane.f32.xlu0 %v2661
        %v2663 = vpop.xlane.xlu0 %2662
        %v2664 = vadd.f32 %v2594, %v2595
        %v2665 = vadd.f32 %v2664, %v2596
        %v2666 = vadd.f32 %v2665, %v2597
        %2667 = vadd.xlane.f32.xlu0 %v2666
        %v2668 = vpop.xlane.xlu0 %2667
        %v2669 = vadd.f32 %v2598, %v2599
        %v2670 = vadd.f32 %v2669, %v2600
        %v2671 = vadd.f32 %v2670, %v2601
        %2672 = vadd.xlane.f32.xlu0 %v2671
        %v2673 = vpop.xlane.xlu0 %2672
        %v2674 = vadd.f32 %v2602, %v2603
        %v2675 = vadd.f32 %v2674, %v2604
        %v2676 = vadd.f32 %v2675, %v2605
        %2677 = vadd.xlane.f32.xlu0 %v2676
        %v2678 = vpop.xlane.xlu0 %2677
        %v2679 = vadd.f32 %v2606, %v2607
        %v2680 = vadd.f32 %v2679, %v2608
        %v2681 = vadd.f32 %v2680, %v2609
        %2682 = vadd.xlane.f32.xlu0 %v2681
        %v2683 = vpop.xlane.xlu0 %2682
        %v2684 = vadd.f32 %v2610, %v2611
        %v2685 = vadd.f32 %v2684, %v2612
        %v2686 = vadd.f32 %v2685, %v2613
        %2687 = vadd.xlane.f32.xlu0 %v2686
        %v2688 = vpop.xlane.xlu0 %2687
        %v2689 = vadd.f32 %v2614, %v2615
        %v2690 = vadd.f32 %v2689, %v2616
        %v2691 = vadd.f32 %v2690, %v2617
        %2692 = vadd.xlane.f32.xlu0 %v2691
        %v2693 = vpop.xlane.xlu0 %2692
        %v2694 = vadd.f32 %v2618, %v2619
        %v2695 = vadd.f32 %v2694, %v2620
        %v2696 = vadd.f32 %v2695, %v2621
        %2697 = vadd.xlane.f32.xlu0 %v2696
        %v2698 = vpop.xlane.xlu0 %2697
        %v2699 = vadd.f32 %v2622, %v2623
        %v2700 = vadd.f32 %v2699, %v2624
        %v2701 = vadd.f32 %v2700, %v2625
        %2702 = vadd.xlane.f32.xlu0 %v2701
        %v2703 = vpop.xlane.xlu0 %2702
        %v2704 = vadd.f32 %v2626, %v2627
        %v2705 = vadd.f32 %v2704, %v2628
        %v2706 = vadd.f32 %v2705, %v2629
        %2707 = vadd.xlane.f32.xlu0 %v2706
        %v2708 = vpop.xlane.xlu0 %2707
        %v2709 = vadd.f32 %v2630, %v2631
        %v2710 = vadd.f32 %v2709, %v2632
        %v2711 = vadd.f32 %v2710, %v2633
        %2712 = vadd.xlane.f32.xlu0 %v2711
        %v2713 = vpop.xlane.xlu0 %2712
        %v2714 = vmul.f32 %v2494, 0.001953125
        %v2715 = vmul.f32 %v2499, 0.001953125
        %v2716 = vmul.f32 %v2504, 0.001953125
        %v2717 = vmul.f32 %v2509, 0.001953125
        %v2718 = vmul.f32 %v2514, 0.001953125
        %v2719 = vmul.f32 %v2519, 0.001953125
        %v2720 = vmul.f32 %v2524, 0.001953125
        %v2721 = vmul.f32 %v2529, 0.001953125
        %v2722 = vmul.f32 %v2534, 0.001953125
        %v2723 = vmul.f32 %v2539, 0.001953125
        %v2724 = vmul.f32 %v2544, 0.001953125
        %v2725 = vmul.f32 %v2549, 0.001953125
        %v2726 = vmul.f32 %v2554, 0.001953125
        %v2727 = vmul.f32 %v2559, 0.001953125
        %v2728 = vmul.f32 %v2564, 0.001953125
        %v2729 = vmul.f32 %v2569, 0.001953125
        %v2730 = vmul.f32 %v2638, 0.001953125
        %v2731 = vmul.f32 %v2643, 0.001953125
        %v2732 = vmul.f32 %v2648, 0.001953125
        %v2733 = vmul.f32 %v2653, 0.001953125
        %v2734 = vmul.f32 %v2658, 0.001953125
        %v2735 = vmul.f32 %v2663, 0.001953125
        %v2736 = vmul.f32 %v2668, 0.001953125
        %v2737 = vmul.f32 %v2673, 0.001953125
        %v2738 = vmul.f32 %v2678, 0.001953125
        %v2739 = vmul.f32 %v2683, 0.001953125
        %v2740 = vmul.f32 %v2688, 0.001953125
        %v2741 = vmul.f32 %v2693, 0.001953125
        %v2742 = vmul.f32 %v2698, 0.001953125
        %v2743 = vmul.f32 %v2703, 0.001953125
        %v2744 = vmul.f32 %v2708, 0.001953125
        %v2745 = vmul.f32 %v2713, 0.001953125
        %v2746 = vmul.f32 %v2714, %v2714
        %v2747 = vmul.f32 %v2715, %v2715
        %v2748 = vmul.f32 %v2716, %v2716
        %v2749 = vmul.f32 %v2717, %v2717
        %v2750 = vmul.f32 %v2718, %v2718
        %v2751 = vmul.f32 %v2719, %v2719
        %v2752 = vmul.f32 %v2720, %v2720
        %v2753 = vmul.f32 %v2721, %v2721
        %v2754 = vmul.f32 %v2722, %v2722
        %v2755 = vmul.f32 %v2723, %v2723
        %v2756 = vmul.f32 %v2724, %v2724
        %v2757 = vmul.f32 %v2725, %v2725
        %v2758 = vmul.f32 %v2726, %v2726
        %v2759 = vmul.f32 %v2727, %v2727
        %v2760 = vmul.f32 %v2728, %v2728
        %v2761 = vmul.f32 %v2729, %v2729
        %v2762 = vsub.f32 %v2730, %v2746
        %v2763 = vsub.f32 %v2731, %v2747
        %v2764 = vsub.f32 %v2732, %v2748
        %v2765 = vsub.f32 %v2733, %v2749
        %v2766 = vsub.f32 %v2734, %v2750
        %v2767 = vsub.f32 %v2735, %v2751
        %v2768 = vsub.f32 %v2736, %v2752
        %v2769 = vsub.f32 %v2737, %v2753
        %v2770 = vsub.f32 %v2738, %v2754
        %v2771 = vsub.f32 %v2739, %v2755
        %v2772 = vsub.f32 %v2740, %v2756
        %v2773 = vsub.f32 %v2741, %v2757
        %v2774 = vsub.f32 %v2742, %v2758
        %v2775 = vsub.f32 %v2743, %v2759
        %v2776 = vsub.f32 %v2744, %v2760
        %v2777 = vsub.f32 %v2745, %v2761
        %v2778 = vsub.f32 %v2073, %v2714
        %v2779 = vsub.f32 %v2075, %v2714
        %v2780 = vsub.f32 %v2412, %v2714
        %v2781 = vsub.f32 %v2414, %v2714
        %v2782 = vsub.f32 %v2077, %v2715
        %v2783 = vsub.f32 %v2079, %v2715
        %v2784 = vsub.f32 %v2416, %v2715
        %v2785 = vsub.f32 %v2418, %v2715
        %v2786 = vsub.f32 %v2083, %v2716
        %v2787 = vsub.f32 %v2085, %v2716
        %v2788 = vsub.f32 %v2422, %v2716
        %v2789 = vsub.f32 %v2424, %v2716
        %v2790 = vsub.f32 %v2087, %v2717
        %v2791 = vsub.f32 %v2089, %v2717
        %v2792 = vsub.f32 %v2426, %v2717
        %v2793 = vsub.f32 %v2428, %v2717
        %v2794 = vsub.f32 %v2093, %v2718
        %v2795 = vsub.f32 %v2095, %v2718
        %v2796 = vsub.f32 %v2432, %v2718
        %v2797 = vsub.f32 %v2434, %v2718
        %v2798 = vsub.f32 %v2097, %v2719
        %v2799 = vsub.f32 %v2099, %v2719
        %v2800 = vsub.f32 %v2436, %v2719
        %v2801 = vsub.f32 %v2438, %v2719
        %v2802 = vsub.f32 %v2103, %v2720
        %v2803 = vsub.f32 %v2105, %v2720
        %v2804 = vsub.f32 %v2442, %v2720
        %v2805 = vsub.f32 %v2444, %v2720
        %v2806 = vsub.f32 %v2107, %v2721
        %v2807 = vsub.f32 %v2109, %v2721
        %v2808 = vsub.f32 %v2446, %v2721
        %v2809 = vsub.f32 %v2448, %v2721
        %v2810 = vsub.f32 %v2113, %v2722
        %v2811 = vsub.f32 %v2115, %v2722
        %v2812 = vsub.f32 %v2452, %v2722
        %v2813 = vsub.f32 %v2454, %v2722
        %v2814 = vsub.f32 %v2117, %v2723
        %v2815 = vsub.f32 %v2119, %v2723
        %v2816 = vsub.f32 %v2456, %v2723
        %v2817 = vsub.f32 %v2458, %v2723
        %v2818 = vsub.f32 %v2123, %v2724
        %v2819 = vsub.f32 %v2125, %v2724
        %v2820 = vsub.f32 %v2462, %v2724
        %v2821 = vsub.f32 %v2464, %v2724
        %v2822 = vsub.f32 %v2127, %v2725
        %v2823 = vsub.f32 %v2129, %v2725
        %v2824 = vsub.f32 %v2466, %v2725
        %v2825 = vsub.f32 %v2468, %v2725
        %v2826 = vsub.f32 %v2133, %v2726
        %v2827 = vsub.f32 %v2135, %v2726
        %v2828 = vsub.f32 %v2472, %v2726
        %v2829 = vsub.f32 %v2474, %v2726
        %v2830 = vsub.f32 %v2137, %v2727
        %v2831 = vsub.f32 %v2139, %v2727
        %v2832 = vsub.f32 %v2476, %v2727
        %v2833 = vsub.f32 %v2478, %v2727
        %v2834 = vsub.f32 %v2143, %v2728
        %v2835 = vsub.f32 %v2145, %v2728
        %v2836 = vsub.f32 %v2482, %v2728
        %v2837 = vsub.f32 %v2484, %v2728
        %v2838 = vsub.f32 %v2147, %v2729
        %v2839 = vsub.f32 %v2149, %v2729
        %v2840 = vsub.f32 %v2486, %v2729
        %v2841 = vsub.f32 %v2488, %v2729
        %v2842 = vadd.f32 %v2762, 1e-06
        %v2843 = vadd.f32 %v2763, 1e-06
        %v2844 = vadd.f32 %v2764, 1e-06
        %v2845 = vadd.f32 %v2765, 1e-06
        %v2846 = vadd.f32 %v2766, 1e-06
        %v2847 = vadd.f32 %v2767, 1e-06
        %v2848 = vadd.f32 %v2768, 1e-06
        %v2849 = vadd.f32 %v2769, 1e-06
        %v2850 = vadd.f32 %v2770, 1e-06
        %v2851 = vadd.f32 %v2771, 1e-06
        %v2852 = vadd.f32 %v2772, 1e-06
        %v2853 = vadd.f32 %v2773, 1e-06
        %v2854 = vadd.f32 %v2774, 1e-06
        %v2855 = vadd.f32 %v2775, 1e-06
        %v2856 = vadd.f32 %v2776, 1e-06
        %v2857 = vadd.f32 %v2777, 1e-06
        %v2858 = vrsqrt.pop %v2842
        %v2859 = vrsqrt.pop %v2843
        %v2860 = vrsqrt.pop %v2844
        %v2861 = vrsqrt.pop %v2845
        %v2862 = vrsqrt.pop %v2846
        %v2863 = vrsqrt.pop %v2847
        %v2864 = vrsqrt.pop %v2848
        %v2865 = vrsqrt.pop %v2849
        %v2866 = vrsqrt.pop %v2850
        %v2867 = vrsqrt.pop %v2851
        %v2868 = vrsqrt.pop %v2852
        %v2869 = vrsqrt.pop %v2853
        %v2870 = vrsqrt.pop %v2854
        %v2871 = vrsqrt.pop %v2855
        %v2872 = vrsqrt.pop %v2856
        %v2873 = vrsqrt.pop %v2857
        %v2874 = vmul.f32 %v2778, %v2858
        %v2875 = vmul.f32 %v2779, %v2858
        %v2876 = vmul.f32 %v2780, %v2858
        %v2877 = vmul.f32 %v2781, %v2858
        %v2878 = vmul.f32 %v2782, %v2859
        %v2879 = vmul.f32 %v2783, %v2859
        %v2880 = vmul.f32 %v2784, %v2859
        %v2881 = vmul.f32 %v2785, %v2859
        %v2882 = vmul.f32 %v2786, %v2860
        %v2883 = vmul.f32 %v2787, %v2860
        %v2884 = vmul.f32 %v2788, %v2860
        %v2885 = vmul.f32 %v2789, %v2860
        %v2886 = vmul.f32 %v2790, %v2861
        %v2887 = vmul.f32 %v2791, %v2861
        %v2888 = vmul.f32 %v2792, %v2861
        %v2889 = vmul.f32 %v2793, %v2861
        %v2890 = vmul.f32 %v2794, %v2862
        %v2891 = vmul.f32 %v2795, %v2862
        %v2892 = vmul.f32 %v2796, %v2862
        %v2893 = vmul.f32 %v2797, %v2862
        %v2894 = vmul.f32 %v2798, %v2863
        %v2895 = vmul.f32 %v2799, %v2863
        %v2896 = vmul.f32 %v2800, %v2863
        %v2897 = vmul.f32 %v2801, %v2863
        %v2898 = vmul.f32 %v2802, %v2864
        %v2899 = vmul.f32 %v2803, %v2864
        %v2900 = vmul.f32 %v2804, %v2864
        %v2901 = vmul.f32 %v2805, %v2864
        %v2902 = vmul.f32 %v2806, %v2865
        %v2903 = vmul.f32 %v2807, %v2865
        %v2904 = vmul.f32 %v2808, %v2865
        %v2905 = vmul.f32 %v2809, %v2865
        %v2906 = vmul.f32 %v2810, %v2866
        %v2907 = vmul.f32 %v2811, %v2866
        %v2908 = vmul.f32 %v2812, %v2866
        %v2909 = vmul.f32 %v2813, %v2866
        %v2910 = vmul.f32 %v2814, %v2867
        %v2911 = vmul.f32 %v2815, %v2867
        %v2912 = vmul.f32 %v2816, %v2867
        %v2913 = vmul.f32 %v2817, %v2867
        %v2914 = vmul.f32 %v2818, %v2868
        %v2915 = vmul.f32 %v2819, %v2868
        %v2916 = vmul.f32 %v2820, %v2868
        %v2917 = vmul.f32 %v2821, %v2868
        %v2918 = vmul.f32 %v2822, %v2869
        %v2919 = vmul.f32 %v2823, %v2869
        %v2920 = vmul.f32 %v2824, %v2869
        %v2921 = vmul.f32 %v2825, %v2869
        %v2922 = vmul.f32 %v2826, %v2870
        %v2923 = vmul.f32 %v2827, %v2870
        %v2924 = vmul.f32 %v2828, %v2870
        %v2925 = vmul.f32 %v2829, %v2870
        %v2926 = vmul.f32 %v2830, %v2871
        %v2927 = vmul.f32 %v2831, %v2871
        %v2928 = vmul.f32 %v2832, %v2871
        %v2929 = vmul.f32 %v2833, %v2871
        %v2930 = vmul.f32 %v2834, %v2872
        %v2931 = vmul.f32 %v2835, %v2872
        %v2932 = vmul.f32 %v2836, %v2872
        %v2933 = vmul.f32 %v2837, %v2872
        %v2934 = vmul.f32 %v2838, %v2873
        %v2935 = vmul.f32 %v2839, %v2873
        %v2936 = vmul.f32 %v2840, %v2873
        %v2937 = vmul.f32 %v2841, %v2873
        %v2938 = vld [vmem:[%s2] sm:$0xf]
        %v2940 = vlaneseq
        %v2941 = vshrl.u32 %v2940, 7
        %v2942 = vsub.s32 0, %v2941
        %v2943 = vrot.slane %v2938, %v2942
        %v2944 = vlaneseq
        %v2945 = vshrl.u32 %v2944, 7
        %v2946 = vsub.s32 1, %v2945
        %v2947 = vrot.slane %v2938, %v2946
        %v2948 = vlaneseq
        %v2949 = vshrl.u32 %v2948, 7
        %v2950 = vsub.s32 2, %v2949
        %v2951 = vrot.slane %v2938, %v2950
        %v2952 = vlaneseq
        %v2953 = vshrl.u32 %v2952, 7
        %v2954 = vsub.s32 3, %v2953
        %v2955 = vrot.slane %v2938, %v2954
        %v2960 = vmul.f32 %v2874, %v2943
        %v2961 = vmul.f32 %v2875, %v2947
        %v2962 = vmul.f32 %v2876, %v2951
        %v2963 = vmul.f32 %v2877, %v2955
        %v2964 = vmul.f32 %v2878, %v2943
        %v2965 = vmul.f32 %v2879, %v2947
        %v2966 = vmul.f32 %v2880, %v2951
        %v2967 = vmul.f32 %v2881, %v2955
        %v2968 = vmul.f32 %v2882, %v2943
        %v2969 = vmul.f32 %v2883, %v2947
        %v2970 = vmul.f32 %v2884, %v2951
        %v2971 = vmul.f32 %v2885, %v2955
        %v2972 = vmul.f32 %v2886, %v2943
        %v2973 = vmul.f32 %v2887, %v2947
        %v2974 = vmul.f32 %v2888, %v2951
        %v2975 = vmul.f32 %v2889, %v2955
        %v2976 = vmul.f32 %v2890, %v2943
        %v2977 = vmul.f32 %v2891, %v2947
        %v2978 = vmul.f32 %v2892, %v2951
        %v2979 = vmul.f32 %v2893, %v2955
        %v2980 = vmul.f32 %v2894, %v2943
        %v2981 = vmul.f32 %v2895, %v2947
        %v2982 = vmul.f32 %v2896, %v2951
        %v2983 = vmul.f32 %v2897, %v2955
        %v2984 = vmul.f32 %v2898, %v2943
        %v2985 = vmul.f32 %v2899, %v2947
        %v2986 = vmul.f32 %v2900, %v2951
        %v2987 = vmul.f32 %v2901, %v2955
        %v2988 = vmul.f32 %v2902, %v2943
        %v2989 = vmul.f32 %v2903, %v2947
        %v2990 = vmul.f32 %v2904, %v2951
        %v2991 = vmul.f32 %v2905, %v2955
        %v2992 = vmul.f32 %v2906, %v2943
        %v2993 = vmul.f32 %v2907, %v2947
        %v2994 = vmul.f32 %v2908, %v2951
        %v2995 = vmul.f32 %v2909, %v2955
        %v2996 = vmul.f32 %v2910, %v2943
        %v2997 = vmul.f32 %v2911, %v2947
        %v2998 = vmul.f32 %v2912, %v2951
        %v2999 = vmul.f32 %v2913, %v2955
        %v3000 = vmul.f32 %v2914, %v2943
        %v3001 = vmul.f32 %v2915, %v2947
        %v3002 = vmul.f32 %v2916, %v2951
        %v3003 = vmul.f32 %v2917, %v2955
        %v3004 = vmul.f32 %v2918, %v2943
        %v3005 = vmul.f32 %v2919, %v2947
        %v3006 = vmul.f32 %v2920, %v2951
        %v3007 = vmul.f32 %v2921, %v2955
        %v3008 = vmul.f32 %v2922, %v2943
        %v3009 = vmul.f32 %v2923, %v2947
        %v3010 = vmul.f32 %v2924, %v2951
        %v3011 = vmul.f32 %v2925, %v2955
        %v3012 = vmul.f32 %v2926, %v2943
        %v3013 = vmul.f32 %v2927, %v2947
        %v3014 = vmul.f32 %v2928, %v2951
        %v3015 = vmul.f32 %v2929, %v2955
        %v3016 = vmul.f32 %v2930, %v2943
        %v3017 = vmul.f32 %v2931, %v2947
        %v3018 = vmul.f32 %v2932, %v2951
        %v3019 = vmul.f32 %v2933, %v2955
        %v3020 = vmul.f32 %v2934, %v2943
        %v3021 = vmul.f32 %v2935, %v2947
        %v3022 = vmul.f32 %v2936, %v2951
        %v3023 = vmul.f32 %v2937, %v2955
        %v3024 = vld [vmem:[%s3] sm:$0xf]
        %v3026 = vlaneseq
        %v3027 = vshrl.u32 %v3026, 7
        %v3028 = vsub.s32 0, %v3027
        %v3029 = vrot.slane %v3024, %v3028
        %v3030 = vlaneseq
        %v3031 = vshrl.u32 %v3030, 7
        %v3032 = vsub.s32 1, %v3031
        %v3033 = vrot.slane %v3024, %v3032
        %v3034 = vlaneseq
        %v3035 = vshrl.u32 %v3034, 7
        %v3036 = vsub.s32 2, %v3035
        %v3037 = vrot.slane %v3024, %v3036
        %v3038 = vlaneseq
        %v3039 = vshrl.u32 %v3038, 7
        %v3040 = vsub.s32 3, %v3039
        %v3041 = vrot.slane %v3024, %v3040
        %v3046 = vadd.f32 %v2960, %v3029
        %v3047 = vadd.f32 %v2961, %v3033
        %v3048 = vadd.f32 %v2962, %v3037
        %v3049 = vadd.f32 %v2963, %v3041
        %v3050 = vadd.f32 %v2964, %v3029
        %v3051 = vadd.f32 %v2965, %v3033
        %v3052 = vadd.f32 %v2966, %v3037
        %v3053 = vadd.f32 %v2967, %v3041
        %v3054 = vadd.f32 %v2968, %v3029
        %v3055 = vadd.f32 %v2969, %v3033
        %v3056 = vadd.f32 %v2970, %v3037
        %v3057 = vadd.f32 %v2971, %v3041
        %v3058 = vadd.f32 %v2972, %v3029
        %v3059 = vadd.f32 %v2973, %v3033
        %v3060 = vadd.f32 %v2974, %v3037
        %v3061 = vadd.f32 %v2975, %v3041
        %v3062 = vadd.f32 %v2976, %v3029
        %v3063 = vadd.f32 %v2977, %v3033
        %v3064 = vadd.f32 %v2978, %v3037
        %v3065 = vadd.f32 %v2979, %v3041
        %v3066 = vadd.f32 %v2980, %v3029
        %v3067 = vadd.f32 %v2981, %v3033
        %v3068 = vadd.f32 %v2982, %v3037
        %v3069 = vadd.f32 %v2983, %v3041
        %v3070 = vadd.f32 %v2984, %v3029
        %v3071 = vadd.f32 %v2985, %v3033
        %v3072 = vadd.f32 %v2986, %v3037
        %v3073 = vadd.f32 %v2987, %v3041
        %v3074 = vadd.f32 %v2988, %v3029
        %v3075 = vadd.f32 %v2989, %v3033
        %v3076 = vadd.f32 %v2990, %v3037
        %v3077 = vadd.f32 %v2991, %v3041
        %v3078 = vadd.f32 %v2992, %v3029
        %v3079 = vadd.f32 %v2993, %v3033
        %v3080 = vadd.f32 %v2994, %v3037
        %v3081 = vadd.f32 %v2995, %v3041
        %v3082 = vadd.f32 %v2996, %v3029
        %v3083 = vadd.f32 %v2997, %v3033
        %v3084 = vadd.f32 %v2998, %v3037
        %v3085 = vadd.f32 %v2999, %v3041
        %v3086 = vadd.f32 %v3000, %v3029
        %v3087 = vadd.f32 %v3001, %v3033
        %v3088 = vadd.f32 %v3002, %v3037
        %v3089 = vadd.f32 %v3003, %v3041
        %v3090 = vadd.f32 %v3004, %v3029
        %v3091 = vadd.f32 %v3005, %v3033
        %v3092 = vadd.f32 %v3006, %v3037
        %v3093 = vadd.f32 %v3007, %v3041
        %v3094 = vadd.f32 %v3008, %v3029
        %v3095 = vadd.f32 %v3009, %v3033
        %v3096 = vadd.f32 %v3010, %v3037
        %v3097 = vadd.f32 %v3011, %v3041
        %v3098 = vadd.f32 %v3012, %v3029
        %v3099 = vadd.f32 %v3013, %v3033
        %v3100 = vadd.f32 %v3014, %v3037
        %v3101 = vadd.f32 %v3015, %v3041
        %v3102 = vadd.f32 %v3016, %v3029
        %v3103 = vadd.f32 %v3017, %v3033
        %v3104 = vadd.f32 %v3018, %v3037
        %v3105 = vadd.f32 %v3019, %v3041
        %v3106 = vadd.f32 %v3020, %v3029
        %v3107 = vadd.f32 %v3021, %v3033
        %v3108 = vadd.f32 %v3022, %v3037
        %v3109 = vadd.f32 %v3023, %v3041
        %v3110 = vpack.c.bf16 %v3050, %v3046
        %v3111 = vpack.c.bf16 %v3051, %v3047
        %v3112 = vpack.c.bf16 %v3052, %v3048
        %v3113 = vpack.c.bf16 %v3053, %v3049
        %v3114 = vpack.c.bf16 %v3058, %v3054
        %v3115 = vpack.c.bf16 %v3059, %v3055
        %v3116 = vpack.c.bf16 %v3060, %v3056
        %v3117 = vpack.c.bf16 %v3061, %v3057
        %v3118 = vpack.c.bf16 %v3066, %v3062
        %v3119 = vpack.c.bf16 %v3067, %v3063
        %v3120 = vpack.c.bf16 %v3068, %v3064
        %v3121 = vpack.c.bf16 %v3069, %v3065
        %v3122 = vpack.c.bf16 %v3074, %v3070
        %v3123 = vpack.c.bf16 %v3075, %v3071
        %v3124 = vpack.c.bf16 %v3076, %v3072
        %v3125 = vpack.c.bf16 %v3077, %v3073
        %v3126 = vpack.c.bf16 %v3082, %v3078
        %v3127 = vpack.c.bf16 %v3083, %v3079
        %v3128 = vpack.c.bf16 %v3084, %v3080
        %v3129 = vpack.c.bf16 %v3085, %v3081
        %v3130 = vpack.c.bf16 %v3090, %v3086
        %v3131 = vpack.c.bf16 %v3091, %v3087
        %v3132 = vpack.c.bf16 %v3092, %v3088
        %v3133 = vpack.c.bf16 %v3093, %v3089
        %v3134 = vpack.c.bf16 %v3098, %v3094
        %v3135 = vpack.c.bf16 %v3099, %v3095
        %v3136 = vpack.c.bf16 %v3100, %v3096
        %v3137 = vpack.c.bf16 %v3101, %v3097
        %v3138 = vpack.c.bf16 %v3106, %v3102
        %v3139 = vpack.c.bf16 %v3107, %v3103
        %v3140 = vpack.c.bf16 %v3108, %v3104
        %v3141 = vpack.c.bf16 %v3109, %v3105
        %v3142 = vld [vmem:[#allocation7] sm:$0xff]
        %v3143 = vld [vmem:[#allocation7 + $0x8] sm:$0xff]
        %v3144 = vld [vmem:[#allocation7 + $0x10] sm:$0xff]
        %v3145 = vld [vmem:[#allocation7 + $0x18] sm:$0xff]
        %v3146 = vld [vmem:[#allocation7 + $0x20] sm:$0xff]
        %v3147 = vld [vmem:[#allocation7 + $0x28] sm:$0xff]
        %v3148 = vld [vmem:[#allocation7 + $0x30] sm:$0xff]
        %v3149 = vld [vmem:[#allocation7 + $0x38] sm:$0xff]
        %v3150 = vld [vmem:[#allocation7 + $0x40] sm:$0xff]
        %v3151 = vld [vmem:[#allocation7 + $0x48] sm:$0xff]
        %v3152 = vld [vmem:[#allocation7 + $0x50] sm:$0xff]
        %v3153 = vld [vmem:[#allocation7 + $0x58] sm:$0xff]
        %v3154 = vld [vmem:[#allocation7 + $0x60] sm:$0xff]
        %v3155 = vld [vmem:[#allocation7 + $0x68] sm:$0xff]
        %v3156 = vld [vmem:[#allocation7 + $0x70] sm:$0xff]
        %v3157 = vld [vmem:[#allocation7 + $0x78] sm:$0xff]
        %v3158 = vld [vmem:[#allocation7 + $0x80] sm:$0xff]
        %v3159 = vld [vmem:[#allocation7 + $0x88] sm:$0xff]
        %v3160 = vld [vmem:[#allocation7 + $0x90] sm:$0xff]
        %v3161 = vld [vmem:[#allocation7 + $0x98] sm:$0xff]
        %v3162 = vld [vmem:[#allocation7 + $0xa0] sm:$0xff]
        %v3163 = vld [vmem:[#allocation7 + $0xa8] sm:$0xff]
        %v3164 = vld [vmem:[#allocation7 + $0xb0] sm:$0xff]
        %v3165 = vld [vmem:[#allocation7 + $0xb8] sm:$0xff]
        %v3166 = vld [vmem:[#allocation7 + $0xc0] sm:$0xff]
        %v3167 = vld [vmem:[#allocation7 + $0xc8] sm:$0xff]
        %v3168 = vld [vmem:[#allocation7 + $0xd0] sm:$0xff]
        %v3169 = vld [vmem:[#allocation7 + $0xd8] sm:$0xff]
        %v3170 = vld [vmem:[#allocation7 + $0xe0] sm:$0xff]
        %v3171 = vld [vmem:[#allocation7 + $0xe8] sm:$0xff]
        %v3172 = vld [vmem:[#allocation7 + $0xf0] sm:$0xff]
        %v3173 = vld [vmem:[#allocation7 + $0xf8] sm:$0xff]
        %v3174 = vld [vmem:[#allocation7 + $0x100] sm:$0xff]
        %v3175 = vld [vmem:[#allocation7 + $0x108] sm:$0xff]
        %v3176 = vld [vmem:[#allocation7 + $0x110] sm:$0xff]
        %v3177 = vld [vmem:[#allocation7 + $0x118] sm:$0xff]
        %v3178 = vld [vmem:[#allocation7 + $0x120] sm:$0xff]
        %v3179 = vld [vmem:[#allocation7 + $0x128] sm:$0xff]
        %v3180 = vld [vmem:[#allocation7 + $0x130] sm:$0xff]
        %v3181 = vld [vmem:[#allocation7 + $0x138] sm:$0xff]
        %v3182 = vld [vmem:[#allocation7 + $0x140] sm:$0xff]
        %v3183 = vld [vmem:[#allocation7 + $0x148] sm:$0xff]
        %v3184 = vld [vmem:[#allocation7 + $0x150] sm:$0xff]
        %v3185 = vld [vmem:[#allocation7 + $0x158] sm:$0xff]
        %v3186 = vld [vmem:[#allocation7 + $0x160] sm:$0xff]
        %v3187 = vld [vmem:[#allocation7 + $0x168] sm:$0xff]
        %v3188 = vld [vmem:[#allocation7 + $0x170] sm:$0xff]
        %v3189 = vld [vmem:[#allocation7 + $0x178] sm:$0xff]
        %v3190 = vld [vmem:[#allocation7 + $0x180] sm:$0xff]
        %v3191 = vld [vmem:[#allocation7 + $0x188] sm:$0xff]
        %v3192 = vld [vmem:[#allocation7 + $0x190] sm:$0xff]
        %v3193 = vld [vmem:[#allocation7 + $0x198] sm:$0xff]
        %v3194 = vld [vmem:[#allocation7 + $0x1a0] sm:$0xff]
        %v3195 = vld [vmem:[#allocation7 + $0x1a8] sm:$0xff]
        %v3196 = vld [vmem:[#allocation7 + $0x1b0] sm:$0xff]
        %v3197 = vld [vmem:[#allocation7 + $0x1b8] sm:$0xff]
        %v3198 = vld [vmem:[#allocation7 + $0x1c0] sm:$0xff]
        %v3199 = vld [vmem:[#allocation7 + $0x1c8] sm:$0xff]
        %v3200 = vld [vmem:[#allocation7 + $0x1d0] sm:$0xff]
        %v3201 = vld [vmem:[#allocation7 + $0x1d8] sm:$0xff]
        %v3202 = vld [vmem:[#allocation7 + $0x1e0] sm:$0xff]
        %v3203 = vld [vmem:[#allocation7 + $0x1e8] sm:$0xff]
        %v3204 = vld [vmem:[#allocation7 + $0x1f0] sm:$0xff]
        %v3205 = vld [vmem:[#allocation7 + $0x1f8] sm:$0xff]
        %v3206 = vld [vmem:[#allocation7 + $0x200] sm:$0xff]
        %v3207 = vld [vmem:[#allocation7 + $0x208] sm:$0xff]
        %v3208 = vld [vmem:[#allocation7 + $0x210] sm:$0xff]
        %v3209 = vld [vmem:[#allocation7 + $0x218] sm:$0xff]
        %v3210 = vld [vmem:[#allocation7 + $0x220] sm:$0xff]
        %v3211 = vld [vmem:[#allocation7 + $0x228] sm:$0xff]
        %v3212 = vld [vmem:[#allocation7 + $0x230] sm:$0xff]
        %v3213 = vld [vmem:[#allocation7 + $0x238] sm:$0xff]
        %v3214 = vld [vmem:[#allocation7 + $0x240] sm:$0xff]
        %v3215 = vld [vmem:[#allocation7 + $0x248] sm:$0xff]
        %v3216 = vld [vmem:[#allocation7 + $0x250] sm:$0xff]
        %v3217 = vld [vmem:[#allocation7 + $0x258] sm:$0xff]
        %v3218 = vld [vmem:[#allocation7 + $0x260] sm:$0xff]
        %v3219 = vld [vmem:[#allocation7 + $0x268] sm:$0xff]
        %v3220 = vld [vmem:[#allocation7 + $0x270] sm:$0xff]
        %v3221 = vld [vmem:[#allocation7 + $0x278] sm:$0xff]
        %v3222 = vld [vmem:[#allocation7 + $0x280] sm:$0xff]
        %v3223 = vld [vmem:[#allocation7 + $0x288] sm:$0xff]
        %v3224 = vld [vmem:[#allocation7 + $0x290] sm:$0xff]
        %v3225 = vld [vmem:[#allocation7 + $0x298] sm:$0xff]
        %v3226 = vld [vmem:[#allocation7 + $0x2a0] sm:$0xff]
        %v3227 = vld [vmem:[#allocation7 + $0x2a8] sm:$0xff]
        %v3228 = vld [vmem:[#allocation7 + $0x2b0] sm:$0xff]
        %v3229 = vld [vmem:[#allocation7 + $0x2b8] sm:$0xff]
        %v3230 = vld [vmem:[#allocation7 + $0x2c0] sm:$0xff]
        %v3231 = vld [vmem:[#allocation7 + $0x2c8] sm:$0xff]
        %v3232 = vld [vmem:[#allocation7 + $0x2d0] sm:$0xff]
        %v3233 = vld [vmem:[#allocation7 + $0x2d8] sm:$0xff]
        %v3234 = vld [vmem:[#allocation7 + $0x2e0] sm:$0xff]
        %v3235 = vld [vmem:[#allocation7 + $0x2e8] sm:$0xff]
        %v3236 = vld [vmem:[#allocation7 + $0x2f0] sm:$0xff]
        %v3237 = vld [vmem:[#allocation7 + $0x2f8] sm:$0xff]
        %v3238 = vld [vmem:[#allocation7 + $0x300] sm:$0xff]
        %v3239 = vld [vmem:[#allocation7 + $0x308] sm:$0xff]
        %v3240 = vld [vmem:[#allocation7 + $0x310] sm:$0xff]
        %v3241 = vld [vmem:[#allocation7 + $0x318] sm:$0xff]
        %v3242 = vld [vmem:[#allocation7 + $0x320] sm:$0xff]
        %v3243 = vld [vmem:[#allocation7 + $0x328] sm:$0xff]
        %v3244 = vld [vmem:[#allocation7 + $0x330] sm:$0xff]
        %v3245 = vld [vmem:[#allocation7 + $0x338] sm:$0xff]
        %v3246 = vld [vmem:[#allocation7 + $0x340] sm:$0xff]
        %v3247 = vld [vmem:[#allocation7 + $0x348] sm:$0xff]
        %v3248 = vld [vmem:[#allocation7 + $0x350] sm:$0xff]
        %v3249 = vld [vmem:[#allocation7 + $0x358] sm:$0xff]
        %v3250 = vld [vmem:[#allocation7 + $0x360] sm:$0xff]
        %v3251 = vld [vmem:[#allocation7 + $0x368] sm:$0xff]
        %v3252 = vld [vmem:[#allocation7 + $0x370] sm:$0xff]
        %v3253 = vld [vmem:[#allocation7 + $0x378] sm:$0xff]
        %v3254 = vld [vmem:[#allocation7 + $0x380] sm:$0xff]
        %v3255 = vld [vmem:[#allocation7 + $0x388] sm:$0xff]
        %v3256 = vld [vmem:[#allocation7 + $0x390] sm:$0xff]
        %v3257 = vld [vmem:[#allocation7 + $0x398] sm:$0xff]
        %v3258 = vld [vmem:[#allocation7 + $0x3a0] sm:$0xff]
        %v3259 = vld [vmem:[#allocation7 + $0x3a8] sm:$0xff]
        %v3260 = vld [vmem:[#allocation7 + $0x3b0] sm:$0xff]
        %v3261 = vld [vmem:[#allocation7 + $0x3b8] sm:$0xff]
        %v3262 = vld [vmem:[#allocation7 + $0x3c0] sm:$0xff]
        %v3263 = vld [vmem:[#allocation7 + $0x3c8] sm:$0xff]
        %v3264 = vld [vmem:[#allocation7 + $0x3d0] sm:$0xff]
        %v3265 = vld [vmem:[#allocation7 + $0x3d8] sm:$0xff]
        %v3266 = vld [vmem:[#allocation7 + $0x3e0] sm:$0xff]
        %v3267 = vld [vmem:[#allocation7 + $0x3e8] sm:$0xff]
        %v3268 = vld [vmem:[#allocation7 + $0x3f0] sm:$0xff]
        %v3269 = vld [vmem:[#allocation7 + $0x3f8] sm:$0xff]
        %v3270 = vld [vmem:[%s5] sm:$0xf]
        %v3272 = vlaneseq
        %v3273 = vshrl.u32 %v3272, 7
        %v3274 = vsub.s32 0, %v3273
        %v3275 = vrot.slane %v3270, %v3274
        %v3276 = vlaneseq
        %v3277 = vshrl.u32 %v3276, 7
        %v3278 = vsub.s32 1, %v3277
        %v3279 = vrot.slane %v3270, %v3278
        %v3280 = vlaneseq
        %v3281 = vshrl.u32 %v3280, 7
        %v3282 = vsub.s32 2, %v3281
        %v3283 = vrot.slane %v3270, %v3282
        %v3284 = vlaneseq
        %v3285 = vshrl.u32 %v3284, 7
        %v3286 = vsub.s32 3, %v3285
        %v3287 = vrot.slane %v3270, %v3286
        %v3420 = vunpack.c.l.b16 %v3142
        %v3421 = vunpack.c.h.b16 %v3142
        %v3422 = vunpack.c.l.b16 %v3143
        %v3423 = vunpack.c.h.b16 %v3143
        %v3424 = vunpack.c.l.b16 %v3144
        %v3425 = vunpack.c.h.b16 %v3144
        %v3426 = vunpack.c.l.b16 %v3145
        %v3427 = vunpack.c.h.b16 %v3145
        %v3428 = vunpack.c.l.b16 %v3146
        %v3429 = vunpack.c.h.b16 %v3146
        %v3430 = vunpack.c.l.b16 %v3147
        %v3431 = vunpack.c.h.b16 %v3147
        %v3432 = vunpack.c.l.b16 %v3148
        %v3433 = vunpack.c.h.b16 %v3148
        %v3434 = vunpack.c.l.b16 %v3149
        %v3435 = vunpack.c.h.b16 %v3149
        %v3436 = vunpack.c.l.b16 %v3150
        %v3437 = vunpack.c.h.b16 %v3150
        %v3438 = vunpack.c.l.b16 %v3151
        %v3439 = vunpack.c.h.b16 %v3151
        %v3440 = vunpack.c.l.b16 %v3152
        %v3441 = vunpack.c.h.b16 %v3152
        %v3442 = vunpack.c.l.b16 %v3153
        %v3443 = vunpack.c.h.b16 %v3153
        %v3444 = vunpack.c.l.b16 %v3154
        %v3445 = vunpack.c.h.b16 %v3154
        %v3446 = vunpack.c.l.b16 %v3155
        %v3447 = vunpack.c.h.b16 %v3155
        %v3448 = vunpack.c.l.b16 %v3156
        %v3449 = vunpack.c.h.b16 %v3156
        %v3450 = vunpack.c.l.b16 %v3157
        %v3451 = vunpack.c.h.b16 %v3157
        %v3452 = vunpack.c.l.b16 %v3158
        %v3453 = vunpack.c.h.b16 %v3158
        %v3454 = vunpack.c.l.b16 %v3159
        %v3455 = vunpack.c.h.b16 %v3159
        %v3456 = vunpack.c.l.b16 %v3160
        %v3457 = vunpack.c.h.b16 %v3160
        %v3458 = vunpack.c.l.b16 %v3161
        %v3459 = vunpack.c.h.b16 %v3161
        %v3460 = vunpack.c.l.b16 %v3162
        %v3461 = vunpack.c.h.b16 %v3162
        %v3462 = vunpack.c.l.b16 %v3163
        %v3463 = vunpack.c.h.b16 %v3163
        %v3464 = vunpack.c.l.b16 %v3164
        %v3465 = vunpack.c.h.b16 %v3164
        %v3466 = vunpack.c.l.b16 %v3165
        %v3467 = vunpack.c.h.b16 %v3165
        %v3468 = vunpack.c.l.b16 %v3166
        %v3469 = vunpack.c.h.b16 %v3166
        %v3470 = vunpack.c.l.b16 %v3167
        %v3471 = vunpack.c.h.b16 %v3167
        %v3472 = vunpack.c.l.b16 %v3168
        %v3473 = vunpack.c.h.b16 %v3168
        %v3474 = vunpack.c.l.b16 %v3169
        %v3475 = vunpack.c.h.b16 %v3169
        %v3476 = vunpack.c.l.b16 %v3170
        %v3477 = vunpack.c.h.b16 %v3170
        %v3478 = vunpack.c.l.b16 %v3171
        %v3479 = vunpack.c.h.b16 %v3171
        %v3480 = vunpack.c.l.b16 %v3172
        %v3481 = vunpack.c.h.b16 %v3172
        %v3482 = vunpack.c.l.b16 %v3173
        %v3483 = vunpack.c.h.b16 %v3173
        %v3484 = vunpack.c.l.b16 %v3174
        %v3485 = vunpack.c.h.b16 %v3174
        %v3486 = vunpack.c.l.b16 %v3175
        %v3487 = vunpack.c.h.b16 %v3175
        %v3488 = vunpack.c.l.b16 %v3176
        %v3489 = vunpack.c.h.b16 %v3176
        %v3490 = vunpack.c.l.b16 %v3177
        %v3491 = vunpack.c.h.b16 %v3177
        %v3492 = vunpack.c.l.b16 %v3178
        %v3493 = vunpack.c.h.b16 %v3178
        %v3494 = vunpack.c.l.b16 %v3179
        %v3495 = vunpack.c.h.b16 %v3179
        %v3496 = vunpack.c.l.b16 %v3180
        %v3497 = vunpack.c.h.b16 %v3180
        %v3498 = vunpack.c.l.b16 %v3181
        %v3499 = vunpack.c.h.b16 %v3181
        %v3500 = vunpack.c.l.b16 %v3182
        %v3501 = vunpack.c.h.b16 %v3182
        %v3502 = vunpack.c.l.b16 %v3183
        %v3503 = vunpack.c.h.b16 %v3183
        %v3504 = vunpack.c.l.b16 %v3184
        %v3505 = vunpack.c.h.b16 %v3184
        %v3506 = vunpack.c.l.b16 %v3185
        %v3507 = vunpack.c.h.b16 %v3185
        %v3508 = vunpack.c.l.b16 %v3186
        %v3509 = vunpack.c.h.b16 %v3186
        %v3510 = vunpack.c.l.b16 %v3187
        %v3511 = vunpack.c.h.b16 %v3187
        %v3512 = vunpack.c.l.b16 %v3188
        %v3513 = vunpack.c.h.b16 %v3188
        %v3514 = vunpack.c.l.b16 %v3189
        %v3515 = vunpack.c.h.b16 %v3189
        %v3516 = vunpack.c.l.b16 %v3190
        %v3517 = vunpack.c.h.b16 %v3190
        %v3518 = vunpack.c.l.b16 %v3191
        %v3519 = vunpack.c.h.b16 %v3191
        %v3520 = vunpack.c.l.b16 %v3192
        %v3521 = vunpack.c.h.b16 %v3192
        %v3522 = vunpack.c.l.b16 %v3193
        %v3523 = vunpack.c.h.b16 %v3193
        %v3524 = vunpack.c.l.b16 %v3194
        %v3525 = vunpack.c.h.b16 %v3194
        %v3526 = vunpack.c.l.b16 %v3195
        %v3527 = vunpack.c.h.b16 %v3195
        %v3528 = vunpack.c.l.b16 %v3196
        %v3529 = vunpack.c.h.b16 %v3196
        %v3530 = vunpack.c.l.b16 %v3197
        %v3531 = vunpack.c.h.b16 %v3197
        %v3532 = vunpack.c.l.b16 %v3198
        %v3533 = vunpack.c.h.b16 %v3198
        %v3534 = vunpack.c.l.b16 %v3199
        %v3535 = vunpack.c.h.b16 %v3199
        %v3536 = vunpack.c.l.b16 %v3200
        %v3537 = vunpack.c.h.b16 %v3200
        %v3538 = vunpack.c.l.b16 %v3201
        %v3539 = vunpack.c.h.b16 %v3201
        %v3540 = vunpack.c.l.b16 %v3202
        %v3541 = vunpack.c.h.b16 %v3202
        %v3542 = vunpack.c.l.b16 %v3203
        %v3543 = vunpack.c.h.b16 %v3203
        %v3544 = vunpack.c.l.b16 %v3204
        %v3545 = vunpack.c.h.b16 %v3204
        %v3546 = vunpack.c.l.b16 %v3205
        %v3547 = vunpack.c.h.b16 %v3205
        %v3548 = vunpack.c.l.b16 %v3206
        %v3549 = vunpack.c.h.b16 %v3206
        %v3550 = vunpack.c.l.b16 %v3207
        %v3551 = vunpack.c.h.b16 %v3207
        %v3552 = vunpack.c.l.b16 %v3208
        %v3553 = vunpack.c.h.b16 %v3208
        %v3554 = vunpack.c.l.b16 %v3209
        %v3555 = vunpack.c.h.b16 %v3209
        %v3556 = vunpack.c.l.b16 %v3210
        %v3557 = vunpack.c.h.b16 %v3210
        %v3558 = vunpack.c.l.b16 %v3211
        %v3559 = vunpack.c.h.b16 %v3211
        %v3560 = vunpack.c.l.b16 %v3212
        %v3561 = vunpack.c.h.b16 %v3212
        %v3562 = vunpack.c.l.b16 %v3213
        %v3563 = vunpack.c.h.b16 %v3213
        %v3564 = vunpack.c.l.b16 %v3214
        %v3565 = vunpack.c.h.b16 %v3214
        %v3566 = vunpack.c.l.b16 %v3215
        %v3567 = vunpack.c.h.b16 %v3215
        %v3568 = vunpack.c.l.b16 %v3216
        %v3569 = vunpack.c.h.b16 %v3216
        %v3570 = vunpack.c.l.b16 %v3217
        %v3571 = vunpack.c.h.b16 %v3217
        %v3572 = vunpack.c.l.b16 %v3218
        %v3573 = vunpack.c.h.b16 %v3218
        %v3574 = vunpack.c.l.b16 %v3219
        %v3575 = vunpack.c.h.b16 %v3219
        %v3576 = vunpack.c.l.b16 %v3220
        %v3577 = vunpack.c.h.b16 %v3220
        %v3578 = vunpack.c.l.b16 %v3221
        %v3579 = vunpack.c.h.b16 %v3221
        %v3580 = vunpack.c.l.b16 %v3222
        %v3581 = vunpack.c.h.b16 %v3222
        %v3582 = vunpack.c.l.b16 %v3223
        %v3583 = vunpack.c.h.b16 %v3223
        %v3584 = vunpack.c.l.b16 %v3224
        %v3585 = vunpack.c.h.b16 %v3224
        %v3586 = vunpack.c.l.b16 %v3225
        %v3587 = vunpack.c.h.b16 %v3225
        %v3588 = vunpack.c.l.b16 %v3226
        %v3589 = vunpack.c.h.b16 %v3226
        %v3590 = vunpack.c.l.b16 %v3227
        %v3591 = vunpack.c.h.b16 %v3227
        %v3592 = vunpack.c.l.b16 %v3228
        %v3593 = vunpack.c.h.b16 %v3228
        %v3594 = vunpack.c.l.b16 %v3229
        %v3595 = vunpack.c.h.b16 %v3229
        %v3596 = vunpack.c.l.b16 %v3230
        %v3597 = vunpack.c.h.b16 %v3230
        %v3598 = vunpack.c.l.b16 %v3231
        %v3599 = vunpack.c.h.b16 %v3231
        %v3600 = vunpack.c.l.b16 %v3232
        %v3601 = vunpack.c.h.b16 %v3232
        %v3602 = vunpack.c.l.b16 %v3233
        %v3603 = vunpack.c.h.b16 %v3233
        %v3604 = vunpack.c.l.b16 %v3234
        %v3605 = vunpack.c.h.b16 %v3234
        %v3606 = vunpack.c.l.b16 %v3235
        %v3607 = vunpack.c.h.b16 %v3235
        %v3608 = vunpack.c.l.b16 %v3236
        %v3609 = vunpack.c.h.b16 %v3236
        %v3610 = vunpack.c.l.b16 %v3237
        %v3611 = vunpack.c.h.b16 %v3237
        %v3612 = vunpack.c.l.b16 %v3238
        %v3613 = vunpack.c.h.b16 %v3238
        %v3614 = vunpack.c.l.b16 %v3239
        %v3615 = vunpack.c.h.b16 %v3239
        %v3616 = vunpack.c.l.b16 %v3240
        %v3617 = vunpack.c.h.b16 %v3240
        %v3618 = vunpack.c.l.b16 %v3241
        %v3619 = vunpack.c.h.b16 %v3241
        %v3620 = vunpack.c.l.b16 %v3242
        %v3621 = vunpack.c.h.b16 %v3242
        %v3622 = vunpack.c.l.b16 %v3243
        %v3623 = vunpack.c.h.b16 %v3243
        %v3624 = vunpack.c.l.b16 %v3244
        %v3625 = vunpack.c.h.b16 %v3244
        %v3626 = vunpack.c.l.b16 %v3245
        %v3627 = vunpack.c.h.b16 %v3245
        %v3628 = vunpack.c.l.b16 %v3246
        %v3629 = vunpack.c.h.b16 %v3246
        %v3630 = vunpack.c.l.b16 %v3247
        %v3631 = vunpack.c.h.b16 %v3247
        %v3632 = vunpack.c.l.b16 %v3248
        %v3633 = vunpack.c.h.b16 %v3248
        %v3634 = vunpack.c.l.b16 %v3249
        %v3635 = vunpack.c.h.b16 %v3249
        %v3636 = vunpack.c.l.b16 %v3250
        %v3637 = vunpack.c.h.b16 %v3250
        %v3638 = vunpack.c.l.b16 %v3251
        %v3639 = vunpack.c.h.b16 %v3251
        %v3640 = vunpack.c.l.b16 %v3252
        %v3641 = vunpack.c.h.b16 %v3252
        %v3642 = vunpack.c.l.b16 %v3253
        %v3643 = vunpack.c.h.b16 %v3253
        %v3644 = vunpack.c.l.b16 %v3254
        %v3645 = vunpack.c.h.b16 %v3254
        %v3646 = vunpack.c.l.b16 %v3255
        %v3647 = vunpack.c.h.b16 %v3255
        %v3648 = vunpack.c.l.b16 %v3256
        %v3649 = vunpack.c.h.b16 %v3256
        %v3650 = vunpack.c.l.b16 %v3257
        %v3651 = vunpack.c.h.b16 %v3257
        %v3652 = vunpack.c.l.b16 %v3258
        %v3653 = vunpack.c.h.b16 %v3258
        %v3654 = vunpack.c.l.b16 %v3259
        %v3655 = vunpack.c.h.b16 %v3259
        %v3656 = vunpack.c.l.b16 %v3260
        %v3657 = vunpack.c.h.b16 %v3260
        %v3658 = vunpack.c.l.b16 %v3261
        %v3659 = vunpack.c.h.b16 %v3261
        %v3660 = vunpack.c.l.b16 %v3262
        %v3661 = vunpack.c.h.b16 %v3262
        %v3662 = vunpack.c.l.b16 %v3263
        %v3663 = vunpack.c.h.b16 %v3263
        %v3664 = vunpack.c.l.b16 %v3264
        %v3665 = vunpack.c.h.b16 %v3264
        %v3666 = vunpack.c.l.b16 %v3265
        %v3667 = vunpack.c.h.b16 %v3265
        %v3668 = vunpack.c.l.b16 %v3266
        %v3669 = vunpack.c.h.b16 %v3266
        %v3670 = vunpack.c.l.b16 %v3267
        %v3671 = vunpack.c.h.b16 %v3267
        %v3672 = vunpack.c.l.b16 %v3268
        %v3673 = vunpack.c.h.b16 %v3268
        %v3674 = vunpack.c.l.b16 %v3269
        %v3675 = vunpack.c.h.b16 %v3269
        %v3676 = vpack.c.b16 %v3424, %v3420
        %v3677 = vpack.c.b16 %v3425, %v3421
        %v3678 = vpack.c.b16 %v3426, %v3422
        %v3679 = vpack.c.b16 %v3427, %v3423
        %v3680 = vpack.c.b16 %v3432, %v3428
        %v3681 = vpack.c.b16 %v3433, %v3429
        %v3682 = vpack.c.b16 %v3434, %v3430
        %v3683 = vpack.c.b16 %v3435, %v3431
        %v3684 = vpack.c.b16 %v3440, %v3436
        %v3685 = vpack.c.b16 %v3441, %v3437
        %v3686 = vpack.c.b16 %v3442, %v3438
        %v3687 = vpack.c.b16 %v3443, %v3439
        %v3688 = vpack.c.b16 %v3448, %v3444
        %v3689 = vpack.c.b16 %v3449, %v3445
        %v3690 = vpack.c.b16 %v3450, %v3446
        %v3691 = vpack.c.b16 %v3451, %v3447
        %v3692 = vpack.c.b16 %v3456, %v3452
        %v3693 = vpack.c.b16 %v3457, %v3453
        %v3694 = vpack.c.b16 %v3458, %v3454
        %v3695 = vpack.c.b16 %v3459, %v3455
        %v3696 = vpack.c.b16 %v3464, %v3460
        %v3697 = vpack.c.b16 %v3465, %v3461
        %v3698 = vpack.c.b16 %v3466, %v3462
        %v3699 = vpack.c.b16 %v3467, %v3463
        %v3700 = vpack.c.b16 %v3472, %v3468
        %v3701 = vpack.c.b16 %v3473, %v3469
        %v3702 = vpack.c.b16 %v3474, %v3470
        %v3703 = vpack.c.b16 %v3475, %v3471
        %v3704 = vpack.c.b16 %v3480, %v3476
        %v3705 = vpack.c.b16 %v3481, %v3477
        %v3706 = vpack.c.b16 %v3482, %v3478
        %v3707 = vpack.c.b16 %v3483, %v3479
        %v3708 = vpack.c.b16 %v3488, %v3484
        %v3709 = vpack.c.b16 %v3489, %v3485
        %v3710 = vpack.c.b16 %v3490, %v3486
        %v3711 = vpack.c.b16 %v3491, %v3487
        %v3712 = vpack.c.b16 %v3496, %v3492
        %v3713 = vpack.c.b16 %v3497, %v3493
        %v3714 = vpack.c.b16 %v3498, %v3494
        %v3715 = vpack.c.b16 %v3499, %v3495
        %v3716 = vpack.c.b16 %v3504, %v3500
        %v3717 = vpack.c.b16 %v3505, %v3501
        %v3718 = vpack.c.b16 %v3506, %v3502
        %v3719 = vpack.c.b16 %v3507, %v3503
        %v3720 = vpack.c.b16 %v3512, %v3508
        %v3721 = vpack.c.b16 %v3513, %v3509
        %v3722 = vpack.c.b16 %v3514, %v3510
        %v3723 = vpack.c.b16 %v3515, %v3511
        %v3724 = vpack.c.b16 %v3520, %v3516
        %v3725 = vpack.c.b16 %v3521, %v3517
        %v3726 = vpack.c.b16 %v3522, %v3518
        %v3727 = vpack.c.b16 %v3523, %v3519
        %v3728 = vpack.c.b16 %v3528, %v3524
        %v3729 = vpack.c.b16 %v3529, %v3525
        %v3730 = vpack.c.b16 %v3530, %v3526
        %v3731 = vpack.c.b16 %v3531, %v3527
        %v3732 = vpack.c.b16 %v3536, %v3532
        %v3733 = vpack.c.b16 %v3537, %v3533
        %v3734 = vpack.c.b16 %v3538, %v3534
        %v3735 = vpack.c.b16 %v3539, %v3535
        %v3736 = vpack.c.b16 %v3544, %v3540
        %v3737 = vpack.c.b16 %v3545, %v3541
        %v3738 = vpack.c.b16 %v3546, %v3542
        %v3739 = vpack.c.b16 %v3547, %v3543
        %v3740 = vpack.c.b16 %v3552, %v3548
        %v3741 = vpack.c.b16 %v3553, %v3549
        %v3742 = vpack.c.b16 %v3554, %v3550
        %v3743 = vpack.c.b16 %v3555, %v3551
        %v3744 = vpack.c.b16 %v3560, %v3556
        %v3745 = vpack.c.b16 %v3561, %v3557
        %v3746 = vpack.c.b16 %v3562, %v3558
        %v3747 = vpack.c.b16 %v3563, %v3559
        %v3748 = vpack.c.b16 %v3568, %v3564
        %v3749 = vpack.c.b16 %v3569, %v3565
        %v3750 = vpack.c.b16 %v3570, %v3566
        %v3751 = vpack.c.b16 %v3571, %v3567
        %v3752 = vpack.c.b16 %v3576, %v3572
        %v3753 = vpack.c.b16 %v3577, %v3573
        %v3754 = vpack.c.b16 %v3578, %v3574
        %v3755 = vpack.c.b16 %v3579, %v3575
        %v3756 = vpack.c.b16 %v3584, %v3580
        %v3757 = vpack.c.b16 %v3585, %v3581
        %v3758 = vpack.c.b16 %v3586, %v3582
        %v3759 = vpack.c.b16 %v3587, %v3583
        %v3760 = vpack.c.b16 %v3592, %v3588
        %v3761 = vpack.c.b16 %v3593, %v3589
        %v3762 = vpack.c.b16 %v3594, %v3590
        %v3763 = vpack.c.b16 %v3595, %v3591
        %v3764 = vpack.c.b16 %v3600, %v3596
        %v3765 = vpack.c.b16 %v3601, %v3597
        %v3766 = vpack.c.b16 %v3602, %v3598
        %v3767 = vpack.c.b16 %v3603, %v3599
        %v3768 = vpack.c.b16 %v3608, %v3604
        %v3769 = vpack.c.b16 %v3609, %v3605
        %v3770 = vpack.c.b16 %v3610, %v3606
        %v3771 = vpack.c.b16 %v3611, %v3607
        %v3772 = vpack.c.b16 %v3616, %v3612
        %v3773 = vpack.c.b16 %v3617, %v3613
        %v3774 = vpack.c.b16 %v3618, %v3614
        %v3775 = vpack.c.b16 %v3619, %v3615
        %v3776 = vpack.c.b16 %v3624, %v3620
        %v3777 = vpack.c.b16 %v3625, %v3621
        %v3778 = vpack.c.b16 %v3626, %v3622
        %v3779 = vpack.c.b16 %v3627, %v3623
        %v3780 = vpack.c.b16 %v3632, %v3628
        %v3781 = vpack.c.b16 %v3633, %v3629
        %v3782 = vpack.c.b16 %v3634, %v3630
        %v3783 = vpack.c.b16 %v3635, %v3631
        %v3784 = vpack.c.b16 %v3640, %v3636
        %v3785 = vpack.c.b16 %v3641, %v3637
        %v3786 = vpack.c.b16 %v3642, %v3638
        %v3787 = vpack.c.b16 %v3643, %v3639
        %v3788 = vpack.c.b16 %v3648, %v3644
        %v3789 = vpack.c.b16 %v3649, %v3645
        %v3790 = vpack.c.b16 %v3650, %v3646
        %v3791 = vpack.c.b16 %v3651, %v3647
        %v3792 = vpack.c.b16 %v3656, %v3652
        %v3793 = vpack.c.b16 %v3657, %v3653
        %v3794 = vpack.c.b16 %v3658, %v3654
        %v3795 = vpack.c.b16 %v3659, %v3655
        %v3796 = vpack.c.b16 %v3664, %v3660
        %v3797 = vpack.c.b16 %v3665, %v3661
        %v3798 = vpack.c.b16 %v3666, %v3662
        %v3799 = vpack.c.b16 %v3667, %v3663
        %v3800 = vpack.c.b16 %v3672, %v3668
        %v3801 = vpack.c.b16 %v3673, %v3669
        %v3802 = vpack.c.b16 %v3674, %v3670
        %v3803 = vpack.c.b16 %v3675, %v3671
        %3932 = vmatprep.subr.bf16.mxu0 %v3677
        %3933 = vmatpush1.bf16.msra.mxu0 %v3676
        %3934 = vmatprep.subr.bf16.mxu0 %v3681
        %3935 = vmatpush1.bf16.msra.mxu0 %v3680
        %3936 = vmatprep.subr.bf16.mxu0 %v3685
        %3937 = vmatpush1.bf16.msra.mxu0 %v3684
        %3938 = vmatprep.subr.bf16.mxu0 %v3689
        %3939 = vmatpush1.bf16.msra.mxu0 %v3688
        %3940 = vmatprep.subr.bf16.mxu0 %v3693
        %3941 = vmatpush1.bf16.msra.mxu0 %v3692
        %3942 = vmatprep.subr.bf16.mxu0 %v3697
        %3943 = vmatpush1.bf16.msra.mxu0 %v3696
        %3944 = vmatprep.subr.bf16.mxu0 %v3701
        %3945 = vmatpush1.bf16.msra.mxu0 %v3700
        %3946 = vmatprep.subr.bf16.mxu0 %v3705
        %3947 = vmatpush1.bf16.msra.mxu0 %v3704
        %3948 = vmatprep.subr.bf16.mxu0 %v3709
        %3949 = vmatpush1.bf16.msra.mxu0 %v3708
        %3950 = vmatprep.subr.bf16.mxu0 %v3713
        %3951 = vmatpush1.bf16.msra.mxu0 %v3712
        %3952 = vmatprep.subr.bf16.mxu0 %v3717
        %3953 = vmatpush1.bf16.msra.mxu0 %v3716
        %3954 = vmatprep.subr.bf16.mxu0 %v3721
        %3955 = vmatpush1.bf16.msra.mxu0 %v3720
        %3956 = vmatprep.subr.bf16.mxu0 %v3725
        %3957 = vmatpush1.bf16.msra.mxu0 %v3724
        %3958 = vmatprep.subr.bf16.mxu0 %v3729
        %3959 = vmatpush1.bf16.msra.mxu0 %v3728
        %3960 = vmatprep.subr.bf16.mxu0 %v3733
        %3961 = vmatpush1.bf16.msra.mxu0 %v3732
        %3962 = vmatprep.subr.bf16.mxu0 %v3737
        %3963 = vmatpush1.bf16.msra.mxu0 %v3736
        %3964 = vmatprep.mubr.bf16.mxu0 %v3111
        %3965 = vmatmul.mubr.bf16.gmra.mrb[0].mxu0 %v3110
        %v3966 = vpop.f32.mrb[0].mxu0
        %v3967 = vadd.f32 %v3275, %v3966
        %v3968 = vpop.f32.mrb[0].mxu0
        %v3969 = vadd.f32 %v3279, %v3968
        %v3970 = vpop.f32.mrb[0].mxu0
        %v3971 = vadd.f32 %v3275, %v3970
        %v3972 = vpop.f32.mrb[0].mxu0
        %v3973 = vadd.f32 %v3279, %v3972
        %3974 = vmatprep.mubr.bf16.mxu0 %v3115
        %3975 = vmatmul.mubr.bf16.gmra.mrb[0].mxu0 %v3114
        %v3976 = vpop.f32.mrb[0].mxu0
        %v3977 = vadd.f32 %v3275, %v3976
        %v3978 = vpop.f32.mrb[0].mxu0
        %v3979 = vadd.f32 %v3279, %v3978
        %v3980 = vpop.f32.mrb[0].mxu0
        %v3981 = vadd.f32 %v3275, %v3980
        %v3982 = vpop.f32.mrb[0].mxu0
        %v3983 = vadd.f32 %v3279, %v3982
        %3984 = vmatprep.mubr.bf16.mxu0 %v3119
        %3985 = vmatmul.mubr.bf16.gmra.mrb[0].mxu0 %v3118
        %v3986 = vpop.f32.mrb[0].mxu0
        %v3987 = vadd.f32 %v3275, %v3986
        %v3988 = vpop.f32.mrb[0].mxu0
        %v3989 = vadd.f32 %v3279, %v3988
        %v3990 = vpop.f32.mrb[0].mxu0
        %v3991 = vadd.f32 %v3275, %v3990
        %v3992 = vpop.f32.mrb[0].mxu0
        %v3993 = vadd.f32 %v3279, %v3992
        %3994 = vmatprep.mubr.bf16.mxu0 %v3123
        %3995 = vmatmul.mubr.bf16.gmra.mrb[0].mxu0 %v3122
        %v3996 = vpop.f32.mrb[0].mxu0
        %v3997 = vadd.f32 %v3275, %v3996
        %v3998 = vpop.f32.mrb[0].mxu0
        %v3999 = vadd.f32 %v3279, %v3998
        %v4000 = vpop.f32.mrb[0].mxu0
        %v4001 = vadd.f32 %v3275, %v4000
        %v4002 = vpop.f32.mrb[0].mxu0
        %v4003 = vadd.f32 %v3279, %v4002
        %4004 = vmatprep.mubr.bf16.mxu0 %v3127
        %4005 = vmatmul.mubr.bf16.gmra.mrb[0].mxu0 %v3126
        %v4006 = vpop.f32.mrb[0].mxu0
        %v4007 = vadd.f32 %v3275, %v4006
        %v4008 = vpop.f32.mrb[0].mxu0
        %v4009 = vadd.f32 %v3279, %v4008
        %v4010 = vpop.f32.mrb[0].mxu0
        %v4011 = vadd.f32 %v3275, %v4010
        %v4012 = vpop.f32.mrb[0].mxu0
        %v4013 = vadd.f32 %v3279, %v4012
        %4014 = vmatprep.mubr.bf16.mxu0 %v3131
        %4015 = vmatmul.mubr.bf16.gmra.mrb[0].mxu0 %v3130
        %v4016 = vpop.f32.mrb[0].mxu0
        %v4017 = vadd.f32 %v3275, %v4016
        %v4018 = vpop.f32.mrb[0].mxu0
        %v4019 = vadd.f32 %v3279, %v4018
        %v4020 = vpop.f32.mrb[0].mxu0
        %v4021 = vadd.f32 %v3275, %v4020
        %v4022 = vpop.f32.mrb[0].mxu0
        %v4023 = vadd.f32 %v3279, %v4022
        %4024 = vmatprep.mubr.bf16.mxu0 %v3135
        %4025 = vmatmul.mubr.bf16.gmra.mrb[0].mxu0 %v3134
        %v4026 = vpop.f32.mrb[0].mxu0
        %v4027 = vadd.f32 %v3275, %v4026
        %v4028 = vpop.f32.mrb[0].mxu0
        %v4029 = vadd.f32 %v3279, %v4028
        %v4030 = vpop.f32.mrb[0].mxu0
        %v4031 = vadd.f32 %v3275, %v4030
        %v4032 = vpop.f32.mrb[0].mxu0
        %v4033 = vadd.f32 %v3279, %v4032
        %4034 = vmatprep.mubr.bf16.mxu0 %v3139
        %4035 = vmatmul.mubr.bf16.gmra.mrb[0].mxu0 %v3138
        %v4036 = vpop.f32.mrb[0].mxu0
        %v4037 = vadd.f32 %v3275, %v4036
        %v4038 = vpop.f32.mrb[0].mxu0
        %v4039 = vadd.f32 %v3279, %v4038
        %v4040 = vpop.f32.mrb[0].mxu0
        %v4041 = vadd.f32 %v3275, %v4040
        %v4042 = vpop.f32.mrb[0].mxu0
        %v4043 = vadd.f32 %v3279, %v4042
        %4044 = vdwg.mxu0
        %4045 = vmatprep.subr.bf16.mxu0 %v3741
        %4046 = vmatpush1.bf16.msra.mxu0 %v3740
        %4047 = vmatprep.subr.bf16.mxu0 %v3745
        %4048 = vmatpush1.bf16.msra.mxu0 %v3744
        %4049 = vmatprep.subr.bf16.mxu0 %v3749
        %4050 = vmatpush1.bf16.msra.mxu0 %v3748
        %4051 = vmatprep.subr.bf16.mxu0 %v3753
        %4052 = vmatpush1.bf16.msra.mxu0 %v3752
        %4053 = vmatprep.subr.bf16.mxu0 %v3757
        %4054 = vmatpush1.bf16.msra.mxu0 %v3756
        %4055 = vmatprep.subr.bf16.mxu0 %v3761
        %4056 = vmatpush1.bf16.msra.mxu0 %v3760
        %4057 = vmatprep.subr.bf16.mxu0 %v3765
        %4058 = vmatpush1.bf16.msra.mxu0 %v3764
        %4059 = vmatprep.subr.bf16.mxu0 %v3769
        %4060 = vmatpush1.bf16.msra.mxu0 %v3768
        %4061 = vmatprep.subr.bf16.mxu0 %v3773
        %4062 = vmatpush1.bf16.msra.mxu0 %v3772
        %4063 = vmatprep.subr.bf16.mxu0 %v3777
        %4064 = vmatpush1.bf16.msra.mxu0 %v3776
        %4065 = vmatprep.subr.bf16.mxu0 %v3781
        %4066 = vmatpush1.bf16.msra.mxu0 %v3780
        %4067 = vmatprep.subr.bf16.mxu0 %v3785
        %4068 = vmatpush1.bf16.msra.mxu0 %v3784
        %4069 = vmatprep.subr.bf16.mxu0 %v3789
        %4070 = vmatpush1.bf16.msra.mxu0 %v3788
        %4071 = vmatprep.subr.bf16.mxu0 %v3793
        %4072 = vmatpush1.bf16.msra.mxu0 %v3792
        %4073 = vmatprep.subr.bf16.mxu0 %v3797
        %4074 = vmatpush1.bf16.msra.mxu0 %v3796
        %4075 = vmatprep.subr.bf16.mxu0 %v3801
        %4076 = vmatpush1.bf16.msra.mxu0 %v3800
        %4077 = vmatprep.mubr.bf16.mxu0 %v3113
        %4078 = vmatmul.mubr.bf16.gmra.mrb[0].mxu0 %v3112
        %v4079 = vpop.f32.mrb[0].mxu0
        %v4080 = vadd.f32 %v3967, %v4079
        %v4081 = vpop.f32.mrb[0].mxu0
        %v4082 = vadd.f32 %v3969, %v4081
        %v4083 = vpop.f32.mrb[0].mxu0
        %v4084 = vadd.f32 %v3971, %v4083
        %v4085 = vpop.f32.mrb[0].mxu0
        %v4086 = vadd.f32 %v3973, %v4085
        %4087 = vmatprep.mubr.bf16.mxu0 %v3117
        %4088 = vmatmul.mubr.bf16.gmra.mrb[0].mxu0 %v3116
        %v4089 = vpop.f32.mrb[0].mxu0
        %v4090 = vadd.f32 %v3977, %v4089
        %v4091 = vpop.f32.mrb[0].mxu0
        %v4092 = vadd.f32 %v3979, %v4091
        %v4093 = vpop.f32.mrb[0].mxu0
        %v4094 = vadd.f32 %v3981, %v4093
        %v4095 = vpop.f32.mrb[0].mxu0
        %v4096 = vadd.f32 %v3983, %v4095
        %4097 = vmatprep.mubr.bf16.mxu0 %v3121
        %4098 = vmatmul.mubr.bf16.gmra.mrb[0].mxu0 %v3120
        %v4099 = vpop.f32.mrb[0].mxu0
        %v4100 = vadd.f32 %v3987, %v4099
        %v4101 = vpop.f32.mrb[0].mxu0
        %v4102 = vadd.f32 %v3989, %v4101
        %v4103 = vpop.f32.mrb[0].mxu0
        %v4104 = vadd.f32 %v3991, %v4103
        %v4105 = vpop.f32.mrb[0].mxu0
        %v4106 = vadd.f32 %v3993, %v4105
        %4107 = vmatprep.mubr.bf16.mxu0 %v3125
        %4108 = vmatmul.mubr.bf16.gmra.mrb[0].mxu0 %v3124
        %v4109 = vpop.f32.mrb[0].mxu0
        %v4110 = vadd.f32 %v3997, %v4109
        %v4111 = vpop.f32.mrb[0].mxu0
        %v4112 = vadd.f32 %v3999, %v4111
        %v4113 = vpop.f32.mrb[0].mxu0
        %v4114 = vadd.f32 %v4001, %v4113
        %v4115 = vpop.f32.mrb[0].mxu0
        %v4116 = vadd.f32 %v4003, %v4115
        %4117 = vmatprep.mubr.bf16.mxu0 %v3129
        %4118 = vmatmul.mubr.bf16.gmra.mrb[0].mxu0 %v3128
        %v4119 = vpop.f32.mrb[0].mxu0
        %v4120 = vadd.f32 %v4007, %v4119
        %v4121 = vpop.f32.mrb[0].mxu0
        %v4122 = vadd.f32 %v4009, %v4121
        %v4123 = vpop.f32.mrb[0].mxu0
        %v4124 = vadd.f32 %v4011, %v4123
        %v4125 = vpop.f32.mrb[0].mxu0
        %v4126 = vadd.f32 %v4013, %v4125
        %4127 = vmatprep.mubr.bf16.mxu0 %v3133
        %4128 = vmatmul.mubr.bf16.gmra.mrb[0].mxu0 %v3132
        %v4129 = vpop.f32.mrb[0].mxu0
        %v4130 = vadd.f32 %v4017, %v4129
        %v4131 = vpop.f32.mrb[0].mxu0
        %v4132 = vadd.f32 %v4019, %v4131
        %v4133 = vpop.f32.mrb[0].mxu0
        %v4134 = vadd.f32 %v4021, %v4133
        %v4135 = vpop.f32.mrb[0].mxu0
        %v4136 = vadd.f32 %v4023, %v4135
        %4137 = vmatprep.mubr.bf16.mxu0 %v3137
        %4138 = vmatmul.mubr.bf16.gmra.mrb[0].mxu0 %v3136
        %v4139 = vpop.f32.mrb[0].mxu0
        %v4140 = vadd.f32 %v4027, %v4139
        %v4141 = vpop.f32.mrb[0].mxu0
        %v4142 = vadd.f32 %v4029, %v4141
        %v4143 = vpop.f32.mrb[0].mxu0
        %v4144 = vadd.f32 %v4031, %v4143
        %v4145 = vpop.f32.mrb[0].mxu0
        %v4146 = vadd.f32 %v4033, %v4145
        %4147 = vmatprep.mubr.bf16.mxu0 %v3141
        %4148 = vmatmul.mubr.bf16.gmra.mrb[0].mxu0 %v3140
        %v4149 = vpop.f32.mrb[0].mxu0
        %v4150 = vadd.f32 %v4037, %v4149
        %v4151 = vpop.f32.mrb[0].mxu0
        %v4152 = vadd.f32 %v4039, %v4151
        %v4153 = vpop.f32.mrb[0].mxu0
        %v4154 = vadd.f32 %v4041, %v4153
        %v4155 = vpop.f32.mrb[0].mxu0
        %v4156 = vadd.f32 %v4043, %v4155
        %4157 = vdwg.mxu0
        %4158 = vmatprep.subr.bf16.mxu0 %v3679
        %4159 = vmatpush1.bf16.msra.mxu0 %v3678
        %4160 = vmatprep.subr.bf16.mxu0 %v3683
        %4161 = vmatpush1.bf16.msra.mxu0 %v3682
        %4162 = vmatprep.subr.bf16.mxu0 %v3687
        %4163 = vmatpush1.bf16.msra.mxu0 %v3686
        %4164 = vmatprep.subr.bf16.mxu0 %v3691
        %4165 = vmatpush1.bf16.msra.mxu0 %v3690
        %4166 = vmatprep.subr.bf16.mxu0 %v3695
        %4167 = vmatpush1.bf16.msra.mxu0 %v3694
        %4168 = vmatprep.subr.bf16.mxu0 %v3699
        %4169 = vmatpush1.bf16.msra.mxu0 %v3698
        %4170 = vmatprep.subr.bf16.mxu0 %v3703
        %4171 = vmatpush1.bf16.msra.mxu0 %v3702
        %4172 = vmatprep.subr.bf16.mxu0 %v3707
        %4173 = vmatpush1.bf16.msra.mxu0 %v3706
        %4174 = vmatprep.subr.bf16.mxu0 %v3711
        %4175 = vmatpush1.bf16.msra.mxu0 %v3710
        %4176 = vmatprep.subr.bf16.mxu0 %v3715
        %4177 = vmatpush1.bf16.msra.mxu0 %v3714
        %4178 = vmatprep.subr.bf16.mxu0 %v3719
        %4179 = vmatpush1.bf16.msra.mxu0 %v3718
        %4180 = vmatprep.subr.bf16.mxu0 %v3723
        %4181 = vmatpush1.bf16.msra.mxu0 %v3722
        %4182 = vmatprep.subr.bf16.mxu0 %v3727
        %4183 = vmatpush1.bf16.msra.mxu0 %v3726
        %4184 = vmatprep.subr.bf16.mxu0 %v3731
        %4185 = vmatpush1.bf16.msra.mxu0 %v3730
        %4186 = vmatprep.subr.bf16.mxu0 %v3735
        %4187 = vmatpush1.bf16.msra.mxu0 %v3734
        %4188 = vmatprep.subr.bf16.mxu0 %v3739
        %4189 = vmatpush1.bf16.msra.mxu0 %v3738
        %4190 = vmatprep.mubr.bf16.mxu0 %v3111
        %4191 = vmatmul.mubr.bf16.gmra.mrb[0].mxu0 %v3110
        %v4192 = vpop.f32.mrb[0].mxu0
        %v4193 = vadd.f32 %v3283, %v4192
        %v4194 = vpop.f32.mrb[0].mxu0
        %v4195 = vadd.f32 %v3287, %v4194
        %v4196 = vpop.f32.mrb[0].mxu0
        %v4197 = vadd.f32 %v3283, %v4196
        %v4198 = vpop.f32.mrb[0].mxu0
        %v4199 = vadd.f32 %v3287, %v4198
        %4200 = vmatprep.mubr.bf16.mxu0 %v3115
        %4201 = vmatmul.mubr.bf16.gmra.mrb[0].mxu0 %v3114
        %v4202 = vpop.f32.mrb[0].mxu0
        %v4203 = vadd.f32 %v3283, %v4202
        %v4204 = vpop.f32.mrb[0].mxu0
        %v4205 = vadd.f32 %v3287, %v4204
        %v4206 = vpop.f32.mrb[0].mxu0
        %v4207 = vadd.f32 %v3283, %v4206
        %v4208 = vpop.f32.mrb[0].mxu0
        %v4209 = vadd.f32 %v3287, %v4208
        %4210 = vmatprep.mubr.bf16.mxu0 %v3119
        %4211 = vmatmul.mubr.bf16.gmra.mrb[0].mxu0 %v3118
        %v4212 = vpop.f32.mrb[0].mxu0
        %v4213 = vadd.f32 %v3283, %v4212
        %v4214 = vpop.f32.mrb[0].mxu0
        %v4215 = vadd.f32 %v3287, %v4214
        %v4216 = vpop.f32.mrb[0].mxu0
        %v4217 = vadd.f32 %v3283, %v4216
        %v4218 = vpop.f32.mrb[0].mxu0
        %v4219 = vadd.f32 %v3287, %v4218
        %4220 = vmatprep.mubr.bf16.mxu0 %v3123
        %4221 = vmatmul.mubr.bf16.gmra.mrb[0].mxu0 %v3122
        %v4222 = vpop.f32.mrb[0].mxu0
        %v4223 = vadd.f32 %v3283, %v4222
        %v4224 = vpop.f32.mrb[0].mxu0
        %v4225 = vadd.f32 %v3287, %v4224
        %v4226 = vpop.f32.mrb[0].mxu0
        %v4227 = vadd.f32 %v3283, %v4226
        %v4228 = vpop.f32.mrb[0].mxu0
        %v4229 = vadd.f32 %v3287, %v4228
        %4230 = vmatprep.mubr.bf16.mxu0 %v3127
        %4231 = vmatmul.mubr.bf16.gmra.mrb[0].mxu0 %v3126
        %v4232 = vpop.f32.mrb[0].mxu0
        %v4233 = vadd.f32 %v3283, %v4232
        %v4234 = vpop.f32.mrb[0].mxu0
        %v4235 = vadd.f32 %v3287, %v4234
        %v4236 = vpop.f32.mrb[0].mxu0
        %v4237 = vadd.f32 %v3283, %v4236
        %v4238 = vpop.f32.mrb[0].mxu0
        %v4239 = vadd.f32 %v3287, %v4238
        %4240 = vmatprep.mubr.bf16.mxu0 %v3131
        %4241 = vmatmul.mubr.bf16.gmra.mrb[0].mxu0 %v3130
        %v4242 = vpop.f32.mrb[0].mxu0
        %v4243 = vadd.f32 %v3283, %v4242
        %v4244 = vpop.f32.mrb[0].mxu0
        %v4245 = vadd.f32 %v3287, %v4244
        %v4246 = vpop.f32.mrb[0].mxu0
        %v4247 = vadd.f32 %v3283, %v4246
        %v4248 = vpop.f32.mrb[0].mxu0
        %v4249 = vadd.f32 %v3287, %v4248
        %4250 = vmatprep.mubr.bf16.mxu0 %v3135
        %4251 = vmatmul.mubr.bf16.gmra.mrb[0].mxu0 %v3134
        %v4252 = vpop.f32.mrb[0].mxu0
        %v4253 = vadd.f32 %v3283, %v4252
        %v4254 = vpop.f32.mrb[0].mxu0
        %v4255 = vadd.f32 %v3287, %v4254
        %v4256 = vpop.f32.mrb[0].mxu0
        %v4257 = vadd.f32 %v3283, %v4256
        %v4258 = vpop.f32.mrb[0].mxu0
        %v4259 = vadd.f32 %v3287, %v4258
        %4260 = vmatprep.mubr.bf16.mxu0 %v3139
        %4261 = vmatmul.mubr.bf16.gmra.mrb[0].mxu0 %v3138
        %v4262 = vpop.f32.mrb[0].mxu0
        %v4263 = vadd.f32 %v3283, %v4262
        %v4264 = vpop.f32.mrb[0].mxu0
        %v4265 = vadd.f32 %v3287, %v4264
        %v4266 = vpop.f32.mrb[0].mxu0
        %v4267 = vadd.f32 %v3283, %v4266
        %v4268 = vpop.f32.mrb[0].mxu0
        %v4269 = vadd.f32 %v3287, %v4268
        %4270 = vdwg.mxu0
        %4271 = vmatprep.subr.bf16.mxu0 %v3743
        %4272 = vmatpush1.bf16.msra.mxu0 %v3742
        %4273 = vmatprep.subr.bf16.mxu0 %v3747
        %4274 = vmatpush1.bf16.msra.mxu0 %v3746
        %4275 = vmatprep.subr.bf16.mxu0 %v3751
        %4276 = vmatpush1.bf16.msra.mxu0 %v3750
        %4277 = vmatprep.subr.bf16.mxu0 %v3755
        %4278 = vmatpush1.bf16.msra.mxu0 %v3754
        %4279 = vmatprep.subr.bf16.mxu0 %v3759
        %4280 = vmatpush1.bf16.msra.mxu0 %v3758
        %4281 = vmatprep.subr.bf16.mxu0 %v3763
        %4282 = vmatpush1.bf16.msra.mxu0 %v3762
        %4283 = vmatprep.subr.bf16.mxu0 %v3767
        %4284 = vmatpush1.bf16.msra.mxu0 %v3766
        %4285 = vmatprep.subr.bf16.mxu0 %v3771
        %4286 = vmatpush1.bf16.msra.mxu0 %v3770
        %4287 = vmatprep.subr.bf16.mxu0 %v3775
        %4288 = vmatpush1.bf16.msra.mxu0 %v3774
        %4289 = vmatprep.subr.bf16.mxu0 %v3779
        %4290 = vmatpush1.bf16.msra.mxu0 %v3778
        %4291 = vmatprep.subr.bf16.mxu0 %v3783
        %4292 = vmatpush1.bf16.msra.mxu0 %v3782
        %4293 = vmatprep.subr.bf16.mxu0 %v3787
        %4294 = vmatpush1.bf16.msra.mxu0 %v3786
        %4295 = vmatprep.subr.bf16.mxu0 %v3791
        %4296 = vmatpush1.bf16.msra.mxu0 %v3790
        %4297 = vmatprep.subr.bf16.mxu0 %v3795
        %4298 = vmatpush1.bf16.msra.mxu0 %v3794
        %4299 = vmatprep.subr.bf16.mxu0 %v3799
        %4300 = vmatpush1.bf16.msra.mxu0 %v3798
        %4301 = vmatprep.subr.bf16.mxu0 %v3803
        %4302 = vmatpush1.bf16.msra.mxu0 %v3802
        %4303 = vmatprep.mubr.bf16.mxu0 %v3113
        %4304 = vmatmul.mubr.bf16.gmra.mrb[0].mxu0 %v3112
        %v4305 = vpop.f32.mrb[0].mxu0
        %v4306 = vadd.f32 %v4193, %v4305
        %v4307 = vpop.f32.mrb[0].mxu0
        %v4308 = vadd.f32 %v4195, %v4307
        %v4309 = vpop.f32.mrb[0].mxu0
        %v4310 = vadd.f32 %v4197, %v4309
        %v4311 = vpop.f32.mrb[0].mxu0
        %v4312 = vadd.f32 %v4199, %v4311
        %4313 = vmatprep.mubr.bf16.mxu0 %v3117
        %4314 = vmatmul.mubr.bf16.gmra.mrb[0].mxu0 %v3116
        %v4315 = vpop.f32.mrb[0].mxu0
        %v4316 = vadd.f32 %v4203, %v4315
        %v4317 = vpop.f32.mrb[0].mxu0
        %v4318 = vadd.f32 %v4205, %v4317
        %v4319 = vpop.f32.mrb[0].mxu0
        %v4320 = vadd.f32 %v4207, %v4319
        %v4321 = vpop.f32.mrb[0].mxu0
        %v4322 = vadd.f32 %v4209, %v4321
        %4323 = vmatprep.mubr.bf16.mxu0 %v3121
        %4324 = vmatmul.mubr.bf16.gmra.mrb[0].mxu0 %v3120
        %v4325 = vpop.f32.mrb[0].mxu0
        %v4326 = vadd.f32 %v4213, %v4325
        %v4327 = vpop.f32.mrb[0].mxu0
        %v4328 = vadd.f32 %v4215, %v4327
        %v4329 = vpop.f32.mrb[0].mxu0
        %v4330 = vadd.f32 %v4217, %v4329
        %v4331 = vpop.f32.mrb[0].mxu0
        %v4332 = vadd.f32 %v4219, %v4331
        %4333 = vmatprep.mubr.bf16.mxu0 %v3125
        %4334 = vmatmul.mubr.bf16.gmra.mrb[0].mxu0 %v3124
        %v4335 = vpop.f32.mrb[0].mxu0
        %v4336 = vadd.f32 %v4223, %v4335
        %v4337 = vpop.f32.mrb[0].mxu0
        %v4338 = vadd.f32 %v4225, %v4337
        %v4339 = vpop.f32.mrb[0].mxu0
        %v4340 = vadd.f32 %v4227, %v4339
        %v4341 = vpop.f32.mrb[0].mxu0
        %v4342 = vadd.f32 %v4229, %v4341
        %4343 = vmatprep.mubr.bf16.mxu0 %v3129
        %4344 = vmatmul.mubr.bf16.gmra.mrb[0].mxu0 %v3128
        %v4345 = vpop.f32.mrb[0].mxu0
        %v4346 = vadd.f32 %v4233, %v4345
        %v4347 = vpop.f32.mrb[0].mxu0
        %v4348 = vadd.f32 %v4235, %v4347
        %v4349 = vpop.f32.mrb[0].mxu0
        %v4350 = vadd.f32 %v4237, %v4349
        %v4351 = vpop.f32.mrb[0].mxu0
        %v4352 = vadd.f32 %v4239, %v4351
        %4353 = vmatprep.mubr.bf16.mxu0 %v3133
        %4354 = vmatmul.mubr.bf16.gmra.mrb[0].mxu0 %v3132
        %v4355 = vpop.f32.mrb[0].mxu0
        %v4356 = vadd.f32 %v4243, %v4355
        %v4357 = vpop.f32.mrb[0].mxu0
        %v4358 = vadd.f32 %v4245, %v4357
        %v4359 = vpop.f32.mrb[0].mxu0
        %v4360 = vadd.f32 %v4247, %v4359
        %v4361 = vpop.f32.mrb[0].mxu0
        %v4362 = vadd.f32 %v4249, %v4361
        %4363 = vmatprep.mubr.bf16.mxu0 %v3137
        %4364 = vmatmul.mubr.bf16.gmra.mrb[0].mxu0 %v3136
        %v4365 = vpop.f32.mrb[0].mxu0
        %v4366 = vadd.f32 %v4253, %v4365
        %v4367 = vpop.f32.mrb[0].mxu0
        %v4368 = vadd.f32 %v4255, %v4367
        %v4369 = vpop.f32.mrb[0].mxu0
        %v4370 = vadd.f32 %v4257, %v4369
        %v4371 = vpop.f32.mrb[0].mxu0
        %v4372 = vadd.f32 %v4259, %v4371
        %4373 = vmatprep.mubr.bf16.mxu0 %v3141
        %4374 = vmatmul.mubr.bf16.gmra.mrb[0].mxu0 %v3140
        %v4375 = vpop.f32.mrb[0].mxu0
        %v4376 = vadd.f32 %v4263, %v4375
        %v4377 = vpop.f32.mrb[0].mxu0
        %v4378 = vadd.f32 %v4265, %v4377
        %v4379 = vpop.f32.mrb[0].mxu0
        %v4380 = vadd.f32 %v4267, %v4379
        %v4381 = vpop.f32.mrb[0].mxu0
        %v4382 = vadd.f32 %v4269, %v4381
        %4383 = vdwg.mxu0
        %v4384 = vmul.f32 %v4080, 0.5
        %v4385 = vmul.f32 %v4082, 0.5
        %v4386 = vmul.f32 %v4306, 0.5
        %v4387 = vmul.f32 %v4308, 0.5
        %v4388 = vmul.f32 %v4084, 0.5
        %v4389 = vmul.f32 %v4086, 0.5
        %v4390 = vmul.f32 %v4310, 0.5
        %v4391 = vmul.f32 %v4312, 0.5
        %v4392 = vmul.f32 %v4090, 0.5
        %v4393 = vmul.f32 %v4092, 0.5
        %v4394 = vmul.f32 %v4316, 0.5
        %v4395 = vmul.f32 %v4318, 0.5
        %v4396 = vmul.f32 %v4094, 0.5
        %v4397 = vmul.f32 %v4096, 0.5
        %v4398 = vmul.f32 %v4320, 0.5
        %v4399 = vmul.f32 %v4322, 0.5
        %v4400 = vmul.f32 %v4100, 0.5
        %v4401 = vmul.f32 %v4102, 0.5
        %v4402 = vmul.f32 %v4326, 0.5
        %v4403 = vmul.f32 %v4328, 0.5
        %v4404 = vmul.f32 %v4104, 0.5
        %v4405 = vmul.f32 %v4106, 0.5
        %v4406 = vmul.f32 %v4330, 0.5
        %v4407 = vmul.f32 %v4332, 0.5
        %v4408 = vmul.f32 %v4110, 0.5
        %v4409 = vmul.f32 %v4112, 0.5
        %v4410 = vmul.f32 %v4336, 0.5
        %v4411 = vmul.f32 %v4338, 0.5
        %v4412 = vmul.f32 %v4114, 0.5
        %v4413 = vmul.f32 %v4116, 0.5
        %v4414 = vmul.f32 %v4340, 0.5
        %v4415 = vmul.f32 %v4342, 0.5
        %v4416 = vmul.f32 %v4120, 0.5
        %v4417 = vmul.f32 %v4122, 0.5
        %v4418 = vmul.f32 %v4346, 0.5
        %v4419 = vmul.f32 %v4348, 0.5
        %v4420 = vmul.f32 %v4124, 0.5
        %v4421 = vmul.f32 %v4126, 0.5
        %v4422 = vmul.f32 %v4350, 0.5
        %v4423 = vmul.f32 %v4352, 0.5
        %v4424 = vmul.f32 %v4130, 0.5
        %v4425 = vmul.f32 %v4132, 0.5
        %v4426 = vmul.f32 %v4356, 0.5
        %v4427 = vmul.f32 %v4358, 0.5
        %v4428 = vmul.f32 %v4134, 0.5
        %v4429 = vmul.f32 %v4136, 0.5
        %v4430 = vmul.f32 %v4360, 0.5
        %v4431 = vmul.f32 %v4362, 0.5
        %v4432 = vmul.f32 %v4140, 0.5
        %v4433 = vmul.f32 %v4142, 0.5
        %v4434 = vmul.f32 %v4366, 0.5
        %v4435 = vmul.f32 %v4368, 0.5
        %v4436 = vmul.f32 %v4144, 0.5
        %v4437 = vmul.f32 %v4146, 0.5
        %v4438 = vmul.f32 %v4370, 0.5
        %v4439 = vmul.f32 %v4372, 0.5
        %v4440 = vmul.f32 %v4150, 0.5
        %v4441 = vmul.f32 %v4152, 0.5
        %v4442 = vmul.f32 %v4376, 0.5
        %v4443 = vmul.f32 %v4378, 0.5
        %v4444 = vmul.f32 %v4154, 0.5
        %v4445 = vmul.f32 %v4156, 0.5
        %v4446 = vmul.f32 %v4380, 0.5
        %v4447 = vmul.f32 %v4382, 0.5
        %v4448 = vmul.f32 %v4080, 0.70710677
        %v4449 = vmul.f32 %v4082, 0.70710677
        %v4450 = vmul.f32 %v4306, 0.70710677
        %v4451 = vmul.f32 %v4308, 0.70710677
        %v4452 = vmul.f32 %v4084, 0.70710677
        %v4453 = vmul.f32 %v4086, 0.70710677
        %v4454 = vmul.f32 %v4310, 0.70710677
        %v4455 = vmul.f32 %v4312, 0.70710677
        %v4456 = vmul.f32 %v4090, 0.70710677
        %v4457 = vmul.f32 %v4092, 0.70710677
        %v4458 = vmul.f32 %v4316, 0.70710677
        %v4459 = vmul.f32 %v4318, 0.70710677
        %v4460 = vmul.f32 %v4094, 0.70710677
        %v4461 = vmul.f32 %v4096, 0.70710677
        %v4462 = vmul.f32 %v4320, 0.70710677
        %v4463 = vmul.f32 %v4322, 0.70710677
        %v4464 = vmul.f32 %v4100, 0.70710677
        %v4465 = vmul.f32 %v4102, 0.70710677
        %v4466 = vmul.f32 %v4326, 0.70710677
        %v4467 = vmul.f32 %v4328, 0.70710677
        %v4468 = vmul.f32 %v4104, 0.70710677
        %v4469 = vmul.f32 %v4106, 0.70710677
        %v4470 = vmul.f32 %v4330, 0.70710677
        %v4471 = vmul.f32 %v4332, 0.70710677
        %v4472 = vmul.f32 %v4110, 0.70710677
        %v4473 = vmul.f32 %v4112, 0.70710677
        %v4474 = vmul.f32 %v4336, 0.70710677
        %v4475 = vmul.f32 %v4338, 0.70710677
        %v4476 = vmul.f32 %v4114, 0.70710677
        %v4477 = vmul.f32 %v4116, 0.70710677
        %v4478 = vmul.f32 %v4340, 0.70710677
        %v4479 = vmul.f32 %v4342, 0.70710677
        %v4480 = vmul.f32 %v4120, 0.70710677
        %v4481 = vmul.f32 %v4122, 0.70710677
        %v4482 = vmul.f32 %v4346, 0.70710677
        %v4483 = vmul.f32 %v4348, 0.70710677
        %v4484 = vmul.f32 %v4124, 0.70710677
        %v4485 = vmul.f32 %v4126, 0.70710677
        %v4486 = vmul.f32 %v4350, 0.70710677
        %v4487 = vmul.f32 %v4352, 0.70710677
        %v4488 = vmul.f32 %v4130, 0.70710677
        %v4489 = vmul.f32 %v4132, 0.70710677
        %v4490 = vmul.f32 %v4356, 0.70710677
        %v4491 = vmul.f32 %v4358, 0.70710677
        %v4492 = vmul.f32 %v4134, 0.70710677
        %v4493 = vmul.f32 %v4136, 0.70710677
        %v4494 = vmul.f32 %v4360, 0.70710677
        %v4495 = vmul.f32 %v4362, 0.70710677
        %v4496 = vmul.f32 %v4140, 0.70710677
        %v4497 = vmul.f32 %v4142, 0.70710677
        %v4498 = vmul.f32 %v4366, 0.70710677
        %v4499 = vmul.f32 %v4368, 0.70710677
        %v4500 = vmul.f32 %v4144, 0.70710677
        %v4501 = vmul.f32 %v4146, 0.70710677
        %v4502 = vmul.f32 %v4370, 0.70710677
        %v4503 = vmul.f32 %v4372, 0.70710677
        %v4504 = vmul.f32 %v4150, 0.70710677
        %v4505 = vmul.f32 %v4152, 0.70710677
        %v4506 = vmul.f32 %v4376, 0.70710677
        %v4507 = vmul.f32 %v4378, 0.70710677
        %v4508 = vmul.f32 %v4154, 0.70710677
        %v4509 = vmul.f32 %v4156, 0.70710677
        %v4510 = vmul.f32 %v4380, 0.70710677
        %v4511 = vmul.f32 %v4382, 0.70710677
        %v4512 = verf.f32.pop %v4448
        %v4513 = verf.f32.pop %v4449
        %v4514 = verf.f32.pop %v4450
        %v4515 = verf.f32.pop %v4451
        %v4516 = verf.f32.pop %v4452
        %v4517 = verf.f32.pop %v4453
        %v4518 = verf.f32.pop %v4454
        %v4519 = verf.f32.pop %v4455
        %v4520 = verf.f32.pop %v4456
        %v4521 = verf.f32.pop %v4457
        %v4522 = verf.f32.pop %v4458
        %v4523 = verf.f32.pop %v4459
        %v4524 = verf.f32.pop %v4460
        %v4525 = verf.f32.pop %v4461
        %v4526 = verf.f32.pop %v4462
        %v4527 = verf.f32.pop %v4463
        %v4528 = verf.f32.pop %v4464
        %v4529 = verf.f32.pop %v4465
        %v4530 = verf.f32.pop %v4466
        %v4531 = verf.f32.pop %v4467
        %v4532 = verf.f32.pop %v4468
        %v4533 = verf.f32.pop %v4469
        %v4534 = verf.f32.pop %v4470
        %v4535 = verf.f32.pop %v4471
        %v4536 = verf.f32.pop %v4472
        %v4537 = verf.f32.pop %v4473
        %v4538 = verf.f32.pop %v4474
        %v4539 = verf.f32.pop %v4475
        %v4540 = verf.f32.pop %v4476
        %v4541 = verf.f32.pop %v4477
        %v4542 = verf.f32.pop %v4478
        %v4543 = verf.f32.pop %v4479
        %v4544 = verf.f32.pop %v4480
        %v4545 = verf.f32.pop %v4481
        %v4546 = verf.f32.pop %v4482
        %v4547 = verf.f32.pop %v4483
        %v4548 = verf.f32.pop %v4484
        %v4549 = verf.f32.pop %v4485
        %v4550 = verf.f32.pop %v4486
        %v4551 = verf.f32.pop %v4487
        %v4552 = verf.f32.pop %v4488
        %v4553 = verf.f32.pop %v4489
        %v4554 = verf.f32.pop %v4490
        %v4555 = verf.f32.pop %v4491
        %v4556 = verf.f32.pop %v4492
        %v4557 = verf.f32.pop %v4493
        %v4558 = verf.f32.pop %v4494
        %v4559 = verf.f32.pop %v4495
        %v4560 = verf.f32.pop %v4496
        %v4561 = verf.f32.pop %v4497
        %v4562 = verf.f32.pop %v4498
        %v4563 = verf.f32.pop %v4499
        %v4564 = verf.f32.pop %v4500
        %v4565 = verf.f32.pop %v4501
        %v4566 = verf.f32.pop %v4502
        %v4567 = verf.f32.pop %v4503
        %v4568 = verf.f32.pop %v4504
        %v4569 = verf.f32.pop %v4505
        %v4570 = verf.f32.pop %v4506
        %v4571 = verf.f32.pop %v4507
        %v4572 = verf.f32.pop %v4508
        %v4573 = verf.f32.pop %v4509
        %v4574 = verf.f32.pop %v4510
        %v4575 = verf.f32.pop %v4511
        %v4576 = vadd.f32 %v4512, 1.0
        %v4577 = vadd.f32 %v4513, 1.0
        %v4578 = vadd.f32 %v4514, 1.0
        %v4579 = vadd.f32 %v4515, 1.0
        %v4580 = vadd.f32 %v4516, 1.0
        %v4581 = vadd.f32 %v4517, 1.0
        %v4582 = vadd.f32 %v4518, 1.0
        %v4583 = vadd.f32 %v4519, 1.0
        %v4584 = vadd.f32 %v4520, 1.0
        %v4585 = vadd.f32 %v4521, 1.0
        %v4586 = vadd.f32 %v4522, 1.0
        %v4587 = vadd.f32 %v4523, 1.0
        %v4588 = vadd.f32 %v4524, 1.0
        %v4589 = vadd.f32 %v4525, 1.0
        %v4590 = vadd.f32 %v4526, 1.0
        %v4591 = vadd.f32 %v4527, 1.0
        %v4592 = vadd.f32 %v4528, 1.0
        %v4593 = vadd.f32 %v4529, 1.0
        %v4594 = vadd.f32 %v4530, 1.0
        %v4595 = vadd.f32 %v4531, 1.0
        %v4596 = vadd.f32 %v4532, 1.0
        %v4597 = vadd.f32 %v4533, 1.0
        %v4598 = vadd.f32 %v4534, 1.0
        %v4599 = vadd.f32 %v4535, 1.0
        %v4600 = vadd.f32 %v4536, 1.0
        %v4601 = vadd.f32 %v4537, 1.0
        %v4602 = vadd.f32 %v4538, 1.0
        %v4603 = vadd.f32 %v4539, 1.0
        %v4604 = vadd.f32 %v4540, 1.0
        %v4605 = vadd.f32 %v4541, 1.0
        %v4606 = vadd.f32 %v4542, 1.0
        %v4607 = vadd.f32 %v4543, 1.0
        %v4608 = vadd.f32 %v4544, 1.0
        %v4609 = vadd.f32 %v4545, 1.0
        %v4610 = vadd.f32 %v4546, 1.0
        %v4611 = vadd.f32 %v4547, 1.0
        %v4612 = vadd.f32 %v4548, 1.0
        %v4613 = vadd.f32 %v4549, 1.0
        %v4614 = vadd.f32 %v4550, 1.0
        %v4615 = vadd.f32 %v4551, 1.0
        %v4616 = vadd.f32 %v4552, 1.0
        %v4617 = vadd.f32 %v4553, 1.0
        %v4618 = vadd.f32 %v4554, 1.0
        %v4619 = vadd.f32 %v4555, 1.0
        %v4620 = vadd.f32 %v4556, 1.0
        %v4621 = vadd.f32 %v4557, 1.0
        %v4622 = vadd.f32 %v4558, 1.0
        %v4623 = vadd.f32 %v4559, 1.0
        %v4624 = vadd.f32 %v4560, 1.0
        %v4625 = vadd.f32 %v4561, 1.0
        %v4626 = vadd.f32 %v4562, 1.0
        %v4627 = vadd.f32 %v4563, 1.0
        %v4628 = vadd.f32 %v4564, 1.0
        %v4629 = vadd.f32 %v4565, 1.0
        %v4630 = vadd.f32 %v4566, 1.0
        %v4631 = vadd.f32 %v4567, 1.0
        %v4632 = vadd.f32 %v4568, 1.0
        %v4633 = vadd.f32 %v4569, 1.0
        %v4634 = vadd.f32 %v4570, 1.0
        %v4635 = vadd.f32 %v4571, 1.0
        %v4636 = vadd.f32 %v4572, 1.0
        %v4637 = vadd.f32 %v4573, 1.0
        %v4638 = vadd.f32 %v4574, 1.0
        %v4639 = vadd.f32 %v4575, 1.0
        %v4640 = vmul.f32 %v4384, %v4576
        %v4641 = vmul.f32 %v4385, %v4577
        %v4642 = vmul.f32 %v4386, %v4578
        %v4643 = vmul.f32 %v4387, %v4579
        %v4644 = vmul.f32 %v4388, %v4580
        %v4645 = vmul.f32 %v4389, %v4581
        %v4646 = vmul.f32 %v4390, %v4582
        %v4647 = vmul.f32 %v4391, %v4583
        %v4648 = vmul.f32 %v4392, %v4584
        %v4649 = vmul.f32 %v4393, %v4585
        %v4650 = vmul.f32 %v4394, %v4586
        %v4651 = vmul.f32 %v4395, %v4587
        %v4652 = vmul.f32 %v4396, %v4588
        %v4653 = vmul.f32 %v4397, %v4589
        %v4654 = vmul.f32 %v4398, %v4590
        %v4655 = vmul.f32 %v4399, %v4591
        %v4656 = vmul.f32 %v4400, %v4592
        %v4657 = vmul.f32 %v4401, %v4593
        %v4658 = vmul.f32 %v4402, %v4594
        %v4659 = vmul.f32 %v4403, %v4595
        %v4660 = vmul.f32 %v4404, %v4596
        %v4661 = vmul.f32 %v4405, %v4597
        %v4662 = vmul.f32 %v4406, %v4598
        %v4663 = vmul.f32 %v4407, %v4599
        %v4664 = vmul.f32 %v4408, %v4600
        %v4665 = vmul.f32 %v4409, %v4601
        %v4666 = vmul.f32 %v4410, %v4602
        %v4667 = vmul.f32 %v4411, %v4603
        %v4668 = vmul.f32 %v4412, %v4604
        %v4669 = vmul.f32 %v4413, %v4605
        %v4670 = vmul.f32 %v4414, %v4606
        %v4671 = vmul.f32 %v4415, %v4607
        %v4672 = vmul.f32 %v4416, %v4608
        %v4673 = vmul.f32 %v4417, %v4609
        %v4674 = vmul.f32 %v4418, %v4610
        %v4675 = vmul.f32 %v4419, %v4611
        %v4676 = vmul.f32 %v4420, %v4612
        %v4677 = vmul.f32 %v4421, %v4613
        %v4678 = vmul.f32 %v4422, %v4614
        %v4679 = vmul.f32 %v4423, %v4615
        %v4680 = vmul.f32 %v4424, %v4616
        %v4681 = vmul.f32 %v4425, %v4617
        %v4682 = vmul.f32 %v4426, %v4618
        %v4683 = vmul.f32 %v4427, %v4619
        %v4684 = vmul.f32 %v4428, %v4620
        %v4685 = vmul.f32 %v4429, %v4621
        %v4686 = vmul.f32 %v4430, %v4622
        %v4687 = vmul.f32 %v4431, %v4623
        %v4688 = vmul.f32 %v4432, %v4624
        %v4689 = vmul.f32 %v4433, %v4625
        %v4690 = vmul.f32 %v4434, %v4626
        %v4691 = vmul.f32 %v4435, %v4627
        %v4692 = vmul.f32 %v4436, %v4628
        %v4693 = vmul.f32 %v4437, %v4629
        %v4694 = vmul.f32 %v4438, %v4630
        %v4695 = vmul.f32 %v4439, %v4631
        %v4696 = vmul.f32 %v4440, %v4632
        %v4697 = vmul.f32 %v4441, %v4633
        %v4698 = vmul.f32 %v4442, %v4634
        %v4699 = vmul.f32 %v4443, %v4635
        %v4700 = vmul.f32 %v4444, %v4636
        %v4701 = vmul.f32 %v4445, %v4637
        %v4702 = vmul.f32 %v4446, %v4638
        %v4703 = vmul.f32 %v4447, %v4639
        %v4704 = vpack.c.bf16 %v4644, %v4640
        %v4705 = vpack.c.bf16 %v4645, %v4641
        %v4706 = vpack.c.bf16 %v4646, %v4642
        %v4707 = vpack.c.bf16 %v4647, %v4643
        %v4708 = vpack.c.bf16 %v4652, %v4648
        %v4709 = vpack.c.bf16 %v4653, %v4649
        %v4710 = vpack.c.bf16 %v4654, %v4650
        %v4711 = vpack.c.bf16 %v4655, %v4651
        %v4712 = vpack.c.bf16 %v4660, %v4656
        %v4713 = vpack.c.bf16 %v4661, %v4657
        %v4714 = vpack.c.bf16 %v4662, %v4658
        %v4715 = vpack.c.bf16 %v4663, %v4659
        %v4716 = vpack.c.bf16 %v4668, %v4664
        %v4717 = vpack.c.bf16 %v4669, %v4665
        %v4718 = vpack.c.bf16 %v4670, %v4666
        %v4719 = vpack.c.bf16 %v4671, %v4667
        %v4720 = vpack.c.bf16 %v4676, %v4672
        %v4721 = vpack.c.bf16 %v4677, %v4673
        %v4722 = vpack.c.bf16 %v4678, %v4674
        %v4723 = vpack.c.bf16 %v4679, %v4675
        %v4724 = vpack.c.bf16 %v4684, %v4680
        %v4725 = vpack.c.bf16 %v4685, %v4681
        %v4726 = vpack.c.bf16 %v4686, %v4682
        %v4727 = vpack.c.bf16 %v4687, %v4683
        %v4728 = vpack.c.bf16 %v4692, %v4688
        %v4729 = vpack.c.bf16 %v4693, %v4689
        %v4730 = vpack.c.bf16 %v4694, %v4690
        %v4731 = vpack.c.bf16 %v4695, %v4691
        %v4732 = vpack.c.bf16 %v4700, %v4696
        %v4733 = vpack.c.bf16 %v4701, %v4697
        %v4734 = vpack.c.bf16 %v4702, %v4698
        %v4735 = vpack.c.bf16 %v4703, %v4699
        %v4736 = vld [vmem:[#allocation8] sm:$0xf]
        %v4737 = vld [vmem:[#allocation8 + $0x4] sm:$0xf]
        %v4738 = vld [vmem:[#allocation8 + $0x8] sm:$0xf]
        %v4739 = vld [vmem:[#allocation8 + $0xc] sm:$0xf]
        %v4740 = vld [vmem:[#allocation8 + $0x10] sm:$0xf]
        %v4741 = vld [vmem:[#allocation8 + $0x14] sm:$0xf]
        %v4742 = vld [vmem:[#allocation8 + $0x18] sm:$0xf]
        %v4743 = vld [vmem:[#allocation8 + $0x1c] sm:$0xf]
        %v4744 = vld [vmem:[#allocation8 + $0x20] sm:$0xf]
        %v4745 = vld [vmem:[#allocation8 + $0x24] sm:$0xf]
        %v4746 = vld [vmem:[#allocation8 + $0x28] sm:$0xf]
        %v4747 = vld [vmem:[#allocation8 + $0x2c] sm:$0xf]
        %v4748 = vld [vmem:[#allocation8 + $0x30] sm:$0xf]
        %v4749 = vld [vmem:[#allocation8 + $0x34] sm:$0xf]
        %v4750 = vld [vmem:[#allocation8 + $0x38] sm:$0xf]
        %v4751 = vld [vmem:[#allocation8 + $0x3c] sm:$0xf]
        %v4752 = vld [vmem:[#allocation8 + $0x40] sm:$0xf]
        %v4753 = vld [vmem:[#allocation8 + $0x44] sm:$0xf]
        %v4754 = vld [vmem:[#allocation8 + $0x48] sm:$0xf]
        %v4755 = vld [vmem:[#allocation8 + $0x4c] sm:$0xf]
        %v4756 = vld [vmem:[#allocation8 + $0x50] sm:$0xf]
        %v4757 = vld [vmem:[#allocation8 + $0x54] sm:$0xf]
        %v4758 = vld [vmem:[#allocation8 + $0x58] sm:$0xf]
        %v4759 = vld [vmem:[#allocation8 + $0x5c] sm:$0xf]
        %v4760 = vld [vmem:[#allocation8 + $0x60] sm:$0xf]
        %v4761 = vld [vmem:[#allocation8 + $0x64] sm:$0xf]
        %v4762 = vld [vmem:[#allocation8 + $0x68] sm:$0xf]
        %v4763 = vld [vmem:[#allocation8 + $0x6c] sm:$0xf]
        %v4764 = vld [vmem:[#allocation8 + $0x70] sm:$0xf]
        %v4765 = vld [vmem:[#allocation8 + $0x74] sm:$0xf]
        %v4766 = vld [vmem:[#allocation8 + $0x78] sm:$0xf]
        %v4767 = vld [vmem:[#allocation8 + $0x7c] sm:$0xf]
        %v4768 = vld [vmem:[#allocation8 + $0x80] sm:$0xf]
        %v4769 = vld [vmem:[#allocation8 + $0x84] sm:$0xf]
        %v4770 = vld [vmem:[#allocation8 + $0x88] sm:$0xf]
        %v4771 = vld [vmem:[#allocation8 + $0x8c] sm:$0xf]
        %v4772 = vld [vmem:[#allocation8 + $0x90] sm:$0xf]
        %v4773 = vld [vmem:[#allocation8 + $0x94] sm:$0xf]
        %v4774 = vld [vmem:[#allocation8 + $0x98] sm:$0xf]
        %v4775 = vld [vmem:[#allocation8 + $0x9c] sm:$0xf]
        %v4776 = vld [vmem:[#allocation8 + $0xa0] sm:$0xf]
        %v4777 = vld [vmem:[#allocation8 + $0xa4] sm:$0xf]
        %v4778 = vld [vmem:[#allocation8 + $0xa8] sm:$0xf]
        %v4779 = vld [vmem:[#allocation8 + $0xac] sm:$0xf]
        %v4780 = vld [vmem:[#allocation8 + $0xb0] sm:$0xf]
        %v4781 = vld [vmem:[#allocation8 + $0xb4] sm:$0xf]
        %v4782 = vld [vmem:[#allocation8 + $0xb8] sm:$0xf]
        %v4783 = vld [vmem:[#allocation8 + $0xbc] sm:$0xf]
        %v4784 = vld [vmem:[#allocation8 + $0xc0] sm:$0xf]
        %v4785 = vld [vmem:[#allocation8 + $0xc4] sm:$0xf]
        %v4786 = vld [vmem:[#allocation8 + $0xc8] sm:$0xf]
        %v4787 = vld [vmem:[#allocation8 + $0xcc] sm:$0xf]
        %v4788 = vld [vmem:[#allocation8 + $0xd0] sm:$0xf]
        %v4789 = vld [vmem:[#allocation8 + $0xd4] sm:$0xf]
        %v4790 = vld [vmem:[#allocation8 + $0xd8] sm:$0xf]
        %v4791 = vld [vmem:[#allocation8 + $0xdc] sm:$0xf]
        %v4792 = vld [vmem:[#allocation8 + $0xe0] sm:$0xf]
        %v4793 = vld [vmem:[#allocation8 + $0xe4] sm:$0xf]
        %v4794 = vld [vmem:[#allocation8 + $0xe8] sm:$0xf]
        %v4795 = vld [vmem:[#allocation8 + $0xec] sm:$0xf]
        %v4796 = vld [vmem:[#allocation8 + $0xf0] sm:$0xf]
        %v4797 = vld [vmem:[#allocation8 + $0xf4] sm:$0xf]
        %v4798 = vld [vmem:[#allocation8 + $0xf8] sm:$0xf]
        %v4799 = vld [vmem:[#allocation8 + $0xfc] sm:$0xf]
        %v4800 = vld [vmem:[%s7] sm:$0x1]
        %v4802 = vlaneseq
        %v4803 = vshrl.u32 %v4802, 7
        %v4804 = vsub.s32 0, %v4803
        %v4805 = vrot.slane %v4800, %v4804
        %v4871 = vunpack.c.l.b16 %v4736
        %v4872 = vunpack.c.l.b16 %v4737
        %v4873 = vunpack.c.l.b16 %v4738
        %v4874 = vunpack.c.l.b16 %v4739
        %v4875 = vunpack.c.l.b16 %v4740
        %v4876 = vunpack.c.l.b16 %v4741
        %v4877 = vunpack.c.l.b16 %v4742
        %v4878 = vunpack.c.l.b16 %v4743
        %v4879 = vunpack.c.l.b16 %v4744
        %v4880 = vunpack.c.l.b16 %v4745
        %v4881 = vunpack.c.l.b16 %v4746
        %v4882 = vunpack.c.l.b16 %v4747
        %v4883 = vunpack.c.l.b16 %v4748
        %v4884 = vunpack.c.l.b16 %v4749
        %v4885 = vunpack.c.l.b16 %v4750
        %v4886 = vunpack.c.l.b16 %v4751
        %v4887 = vunpack.c.l.b16 %v4752
        %v4888 = vunpack.c.l.b16 %v4753
        %v4889 = vunpack.c.l.b16 %v4754
        %v4890 = vunpack.c.l.b16 %v4755
        %v4891 = vunpack.c.l.b16 %v4756
        %v4892 = vunpack.c.l.b16 %v4757
        %v4893 = vunpack.c.l.b16 %v4758
        %v4894 = vunpack.c.l.b16 %v4759
        %v4895 = vunpack.c.l.b16 %v4760
        %v4896 = vunpack.c.l.b16 %v4761
        %v4897 = vunpack.c.l.b16 %v4762
        %v4898 = vunpack.c.l.b16 %v4763
        %v4899 = vunpack.c.l.b16 %v4764
        %v4900 = vunpack.c.l.b16 %v4765
        %v4901 = vunpack.c.l.b16 %v4766
        %v4902 = vunpack.c.l.b16 %v4767
        %v4903 = vunpack.c.l.b16 %v4768
        %v4904 = vunpack.c.l.b16 %v4769
        %v4905 = vunpack.c.l.b16 %v4770
        %v4906 = vunpack.c.l.b16 %v4771
        %v4907 = vunpack.c.l.b16 %v4772
        %v4908 = vunpack.c.l.b16 %v4773
        %v4909 = vunpack.c.l.b16 %v4774
        %v4910 = vunpack.c.l.b16 %v4775
        %v4911 = vunpack.c.l.b16 %v4776
        %v4912 = vunpack.c.l.b16 %v4777
        %v4913 = vunpack.c.l.b16 %v4778
        %v4914 = vunpack.c.l.b16 %v4779
        %v4915 = vunpack.c.l.b16 %v4780
        %v4916 = vunpack.c.l.b16 %v4781
        %v4917 = vunpack.c.l.b16 %v4782
        %v4918 = vunpack.c.l.b16 %v4783
        %v4919 = vunpack.c.l.b16 %v4784
        %v4920 = vunpack.c.l.b16 %v4785
        %v4921 = vunpack.c.l.b16 %v4786
        %v4922 = vunpack.c.l.b16 %v4787
        %v4923 = vunpack.c.l.b16 %v4788
        %v4924 = vunpack.c.l.b16 %v4789
        %v4925 = vunpack.c.l.b16 %v4790
        %v4926 = vunpack.c.l.b16 %v4791
        %v4927 = vunpack.c.l.b16 %v4792
        %v4928 = vunpack.c.l.b16 %v4793
        %v4929 = vunpack.c.l.b16 %v4794
        %v4930 = vunpack.c.l.b16 %v4795
        %v4931 = vunpack.c.l.b16 %v4796
        %v4932 = vunpack.c.l.b16 %v4797
        %v4933 = vunpack.c.l.b16 %v4798
        %v4934 = vunpack.c.l.b16 %v4799
        %v4935 = vpack.c.b16 %v4872, %v4871
        %v4936 = vpack.c.b16 %v4874, %v4873
        %v4937 = vpack.c.b16 %v4876, %v4875
        %v4938 = vpack.c.b16 %v4878, %v4877
        %v4939 = vpack.c.b16 %v4880, %v4879
        %v4940 = vpack.c.b16 %v4882, %v4881
        %v4941 = vpack.c.b16 %v4884, %v4883
        %v4942 = vpack.c.b16 %v4886, %v4885
        %v4943 = vpack.c.b16 %v4888, %v4887
        %v4944 = vpack.c.b16 %v4890, %v4889
        %v4945 = vpack.c.b16 %v4892, %v4891
        %v4946 = vpack.c.b16 %v4894, %v4893
        %v4947 = vpack.c.b16 %v4896, %v4895
        %v4948 = vpack.c.b16 %v4898, %v4897
        %v4949 = vpack.c.b16 %v4900, %v4899
        %v4950 = vpack.c.b16 %v4902, %v4901
        %v4951 = vpack.c.b16 %v4904, %v4903
        %v4952 = vpack.c.b16 %v4906, %v4905
        %v4953 = vpack.c.b16 %v4908, %v4907
        %v4954 = vpack.c.b16 %v4910, %v4909
        %v4955 = vpack.c.b16 %v4912, %v4911
        %v4956 = vpack.c.b16 %v4914, %v4913
        %v4957 = vpack.c.b16 %v4916, %v4915
        %v4958 = vpack.c.b16 %v4918, %v4917
        %v4959 = vpack.c.b16 %v4920, %v4919
        %v4960 = vpack.c.b16 %v4922, %v4921
        %v4961 = vpack.c.b16 %v4924, %v4923
        %v4962 = vpack.c.b16 %v4926, %v4925
        %v4963 = vpack.c.b16 %v4928, %v4927
        %v4964 = vpack.c.b16 %v4930, %v4929
        %v4965 = vpack.c.b16 %v4932, %v4931
        %v4966 = vpack.c.b16 %v4934, %v4933
        %4999 = vmatprep.subr.bf16.mxu0 0
        %5000 = vmatpush1.bf16.msra.mxu0 %v4935
        %5001 = vmatprep.subr.bf16.mxu0 0
        %5002 = vmatpush1.bf16.msra.mxu0 %v4936
        %5003 = vmatprep.subr.bf16.mxu0 0
        %5004 = vmatpush1.bf16.msra.mxu0 %v4937
        %5005 = vmatprep.subr.bf16.mxu0 0
        %5006 = vmatpush1.bf16.msra.mxu0 %v4938
        %5007 = vmatprep.subr.bf16.mxu0 0
        %5008 = vmatpush1.bf16.msra.mxu0 %v4939
        %5009 = vmatprep.subr.bf16.mxu0 0
        %5010 = vmatpush1.bf16.msra.mxu0 %v4940
        %5011 = vmatprep.subr.bf16.mxu0 0
        %5012 = vmatpush1.bf16.msra.mxu0 %v4941
        %5013 = vmatprep.subr.bf16.mxu0 0
        %5014 = vmatpush1.bf16.msra.mxu0 %v4942
        %5015 = vmatprep.subr.bf16.mxu0 0
        %5016 = vmatpush1.bf16.msra.mxu0 %v4943
        %5017 = vmatprep.subr.bf16.mxu0 0
        %5018 = vmatpush1.bf16.msra.mxu0 %v4944
        %5019 = vmatprep.subr.bf16.mxu0 0
        %5020 = vmatpush1.bf16.msra.mxu0 %v4945
        %5021 = vmatprep.subr.bf16.mxu0 0
        %5022 = vmatpush1.bf16.msra.mxu0 %v4946
        %5023 = vmatprep.subr.bf16.mxu0 0
        %5024 = vmatpush1.bf16.msra.mxu0 %v4947
        %5025 = vmatprep.subr.bf16.mxu0 0
        %5026 = vmatpush1.bf16.msra.mxu0 %v4948
        %5027 = vmatprep.subr.bf16.mxu0 0
        %5028 = vmatpush1.bf16.msra.mxu0 %v4949
        %5029 = vmatprep.subr.bf16.mxu0 0
        %5030 = vmatpush1.bf16.msra.mxu0 %v4950
        %5031 = vmatprep.mubr.bf16.mxu0 %v4705
        %5032 = vmatmul.mubr.bf16.gmra.mrb[0].mxu0 %v4704
        %v5033 = vpop.f32.mrb[0].mxu0
        %v5034 = vadd.f32 %v4805, %v5033
        %v5035 = vpop.f32.mrb[0].mxu0
        %v5036 = vpop.f32.mrb[0].mxu0
        %v5037 = vadd.f32 %v4805, %v5036
        %v5038 = vpop.f32.mrb[0].mxu0
        %5039 = vmatprep.mubr.bf16.mxu0 %v4709
        %5040 = vmatmul.mubr.bf16.gmra.mrb[0].mxu0 %v4708
        %v5041 = vpop.f32.mrb[0].mxu0
        %v5042 = vadd.f32 %v4805, %v5041
        %v5043 = vpop.f32.mrb[0].mxu0
        %v5044 = vpop.f32.mrb[0].mxu0
        %v5045 = vadd.f32 %v4805, %v5044
        %v5046 = vpop.f32.mrb[0].mxu0
        %5047 = vmatprep.mubr.bf16.mxu0 %v4713
        %5048 = vmatmul.mubr.bf16.gmra.mrb[0].mxu0 %v4712
        %v5049 = vpop.f32.mrb[0].mxu0
        %v5050 = vadd.f32 %v4805, %v5049
        %v5051 = vpop.f32.mrb[0].mxu0
        %v5052 = vpop.f32.mrb[0].mxu0
        %v5053 = vadd.f32 %v4805, %v5052
        %v5054 = vpop.f32.mrb[0].mxu0
        %5055 = vmatprep.mubr.bf16.mxu0 %v4717
        %5056 = vmatmul.mubr.bf16.gmra.mrb[0].mxu0 %v4716
        %v5057 = vpop.f32.mrb[0].mxu0
        %v5058 = vadd.f32 %v4805, %v5057
        %v5059 = vpop.f32.mrb[0].mxu0
        %v5060 = vpop.f32.mrb[0].mxu0
        %v5061 = vadd.f32 %v4805, %v5060
        %v5062 = vpop.f32.mrb[0].mxu0
        %5063 = vmatprep.mubr.bf16.mxu0 %v4721
        %5064 = vmatmul.mubr.bf16.gmra.mrb[0].mxu0 %v4720
        %v5065 = vpop.f32.mrb[0].mxu0
        %v5066 = vadd.f32 %v4805, %v5065
        %v5067 = vpop.f32.mrb[0].mxu0
        %v5068 = vpop.f32.mrb[0].mxu0
        %v5069 = vadd.f32 %v4805, %v5068
        %v5070 = vpop.f32.mrb[0].mxu0
        %5071 = vmatprep.mubr.bf16.mxu0 %v4725
        %5072 = vmatmul.mubr.bf16.gmra.mrb[0].mxu0 %v4724
        %v5073 = vpop.f32.mrb[0].mxu0
        %v5074 = vadd.f32 %v4805, %v5073
        %v5075 = vpop.f32.mrb[0].mxu0
        %v5076 = vpop.f32.mrb[0].mxu0
        %v5077 = vadd.f32 %v4805, %v5076
        %v5078 = vpop.f32.mrb[0].mxu0
        %5079 = vmatprep.mubr.bf16.mxu0 %v4729
        %5080 = vmatmul.mubr.bf16.gmra.mrb[0].mxu0 %v4728
        %v5081 = vpop.f32.mrb[0].mxu0
        %v5082 = vadd.f32 %v4805, %v5081
        %v5083 = vpop.f32.mrb[0].mxu0
        %v5084 = vpop.f32.mrb[0].mxu0
        %v5085 = vadd.f32 %v4805, %v5084
        %v5086 = vpop.f32.mrb[0].mxu0
        %5087 = vmatprep.mubr.bf16.mxu0 %v4733
        %5088 = vmatmul.mubr.bf16.gmra.mrb[0].mxu0 %v4732
        %v5089 = vpop.f32.mrb[0].mxu0
        %v5090 = vadd.f32 %v4805, %v5089
        %v5091 = vpop.f32.mrb[0].mxu0
        %v5092 = vpop.f32.mrb[0].mxu0
        %v5093 = vadd.f32 %v4805, %v5092
        %v5094 = vpop.f32.mrb[0].mxu0
        %5095 = vdwg.mxu0
        %5096 = vmatprep.subr.bf16.mxu0 0
        %5097 = vmatpush1.bf16.msra.mxu0 %v4951
        %5098 = vmatprep.subr.bf16.mxu0 0
        %5099 = vmatpush1.bf16.msra.mxu0 %v4952
        %5100 = vmatprep.subr.bf16.mxu0 0
        %5101 = vmatpush1.bf16.msra.mxu0 %v4953
        %5102 = vmatprep.subr.bf16.mxu0 0
        %5103 = vmatpush1.bf16.msra.mxu0 %v4954
        %5104 = vmatprep.subr.bf16.mxu0 0
        %5105 = vmatpush1.bf16.msra.mxu0 %v4955
        %5106 = vmatprep.subr.bf16.mxu0 0
        %5107 = vmatpush1.bf16.msra.mxu0 %v4956
        %5108 = vmatprep.subr.bf16.mxu0 0
        %5109 = vmatpush1.bf16.msra.mxu0 %v4957
        %5110 = vmatprep.subr.bf16.mxu0 0
        %5111 = vmatpush1.bf16.msra.mxu0 %v4958
        %5112 = vmatprep.subr.bf16.mxu0 0
        %5113 = vmatpush1.bf16.msra.mxu0 %v4959
        %5114 = vmatprep.subr.bf16.mxu0 0
        %5115 = vmatpush1.bf16.msra.mxu0 %v4960
        %5116 = vmatprep.subr.bf16.mxu0 0
        %5117 = vmatpush1.bf16.msra.mxu0 %v4961
        %5118 = vmatprep.subr.bf16.mxu0 0
        %5119 = vmatpush1.bf16.msra.mxu0 %v4962
        %5120 = vmatprep.subr.bf16.mxu0 0
        %5121 = vmatpush1.bf16.msra.mxu0 %v4963
        %5122 = vmatprep.subr.bf16.mxu0 0
        %5123 = vmatpush1.bf16.msra.mxu0 %v4964
        %5124 = vmatprep.subr.bf16.mxu0 0
        %5125 = vmatpush1.bf16.msra.mxu0 %v4965
        %5126 = vmatprep.subr.bf16.mxu0 0
        %5127 = vmatpush1.bf16.msra.mxu0 %v4966
        %5128 = vmatprep.mubr.bf16.mxu0 %v4707
        %5129 = vmatmul.mubr.bf16.gmra.mrb[0].mxu0 %v4706
        %v5130 = vpop.f32.mrb[0].mxu0
        %v5131 = vadd.f32 %v5034, %v5130
        %v5132 = vpop.f32.mrb[0].mxu0
        %v5133 = vpop.f32.mrb[0].mxu0
        %v5134 = vadd.f32 %v5037, %v5133
        %v5135 = vpop.f32.mrb[0].mxu0
        %5136 = vmatprep.mubr.bf16.mxu0 %v4711
        %5137 = vmatmul.mubr.bf16.gmra.mrb[0].mxu0 %v4710
        %v5138 = vpop.f32.mrb[0].mxu0
        %v5139 = vadd.f32 %v5042, %v5138
        %v5140 = vpop.f32.mrb[0].mxu0
        %v5141 = vpop.f32.mrb[0].mxu0
        %v5142 = vadd.f32 %v5045, %v5141
        %v5143 = vpop.f32.mrb[0].mxu0
        %5144 = vmatprep.mubr.bf16.mxu0 %v4715
        %5145 = vmatmul.mubr.bf16.gmra.mrb[0].mxu0 %v4714
        %v5146 = vpop.f32.mrb[0].mxu0
        %v5147 = vadd.f32 %v5050, %v5146
        %v5148 = vpop.f32.mrb[0].mxu0
        %v5149 = vpop.f32.mrb[0].mxu0
        %v5150 = vadd.f32 %v5053, %v5149
        %v5151 = vpop.f32.mrb[0].mxu0
        %5152 = vmatprep.mubr.bf16.mxu0 %v4719
        %5153 = vmatmul.mubr.bf16.gmra.mrb[0].mxu0 %v4718
        %v5154 = vpop.f32.mrb[0].mxu0
        %v5155 = vadd.f32 %v5058, %v5154
        %v5156 = vpop.f32.mrb[0].mxu0
        %v5157 = vpop.f32.mrb[0].mxu0
        %v5158 = vadd.f32 %v5061, %v5157
        %v5159 = vpop.f32.mrb[0].mxu0
        %5160 = vmatprep.mubr.bf16.mxu0 %v4723
        %5161 = vmatmul.mubr.bf16.gmra.mrb[0].mxu0 %v4722
        %v5162 = vpop.f32.mrb[0].mxu0
        %v5163 = vadd.f32 %v5066, %v5162
        %v5164 = vpop.f32.mrb[0].mxu0
        %v5165 = vpop.f32.mrb[0].mxu0
        %v5166 = vadd.f32 %v5069, %v5165
        %v5167 = vpop.f32.mrb[0].mxu0
        %5168 = vmatprep.mubr.bf16.mxu0 %v4727
        %5169 = vmatmul.mubr.bf16.gmra.mrb[0].mxu0 %v4726
        %v5170 = vpop.f32.mrb[0].mxu0
        %v5171 = vadd.f32 %v5074, %v5170
        %v5172 = vpop.f32.mrb[0].mxu0
        %v5173 = vpop.f32.mrb[0].mxu0
        %v5174 = vadd.f32 %v5077, %v5173
        %v5175 = vpop.f32.mrb[0].mxu0
        %5176 = vmatprep.mubr.bf16.mxu0 %v4731
        %5177 = vmatmul.mubr.bf16.gmra.mrb[0].mxu0 %v4730
        %v5178 = vpop.f32.mrb[0].mxu0
        %v5179 = vadd.f32 %v5082, %v5178
        %v5180 = vpop.f32.mrb[0].mxu0
        %v5181 = vpop.f32.mrb[0].mxu0
        %v5182 = vadd.f32 %v5085, %v5181
        %v5183 = vpop.f32.mrb[0].mxu0
        %5184 = vmatprep.mubr.bf16.mxu0 %v4735
        %5185 = vmatmul.mubr.bf16.gmra.mrb[0].mxu0 %v4734
        %v5186 = vpop.f32.mrb[0].mxu0
        %v5187 = vadd.f32 %v5090, %v5186
        %v5188 = vpop.f32.mrb[0].mxu0
        %v5189 = vpop.f32.mrb[0].mxu0
        %v5190 = vadd.f32 %v5093, %v5189
        %v5191 = vpop.f32.mrb[0].mxu0
        %5192 = vdwg.mxu0
        %v5193 = vtanh.pop %v5131
        %v5194 = vtanh.pop %v5134
        %v5195 = vtanh.pop %v5139
        %v5196 = vtanh.pop %v5142
        %v5197 = vtanh.pop %v5147
        %v5198 = vtanh.pop %v5150
        %v5199 = vtanh.pop %v5155
        %v5200 = vtanh.pop %v5158
        %v5201 = vtanh.pop %v5163
        %v5202 = vtanh.pop %v5166
        %v5203 = vtanh.pop %v5171
        %v5204 = vtanh.pop %v5174
        %v5205 = vtanh.pop %v5179
        %v5206 = vtanh.pop %v5182
        %v5207 = vtanh.pop %v5187
        %v5208 = vtanh.pop %v5190
        %5209 = vst [vmem:[%s368] sm:$0xff] %v5193
        %5210 = vst [vmem:[%s368 + $0x8] sm:$0xff] %v5194
        %5211 = vst [vmem:[%s368 + $0x10] sm:$0xff] %v5195
        %5212 = vst [vmem:[%s368 + $0x18] sm:$0xff] %v5196
        %5213 = vst [vmem:[%s368 + $0x20] sm:$0xff] %v5197
        %5214 = vst [vmem:[%s368 + $0x28] sm:$0xff] %v5198
        %5215 = vst [vmem:[%s368 + $0x30] sm:$0xff] %v5199
        %5216 = vst [vmem:[%s368 + $0x38] sm:$0xff] %v5200
        %5217 = vst [vmem:[%s368 + $0x40] sm:$0xff] %v5201
        %5218 = vst [vmem:[%s368 + $0x48] sm:$0xff] %v5202
        %5219 = vst [vmem:[%s368 + $0x50] sm:$0xff] %v5203
        %5220 = vst [vmem:[%s368 + $0x58] sm:$0xff] %v5204
        %5221 = vst [vmem:[%s368 + $0x60] sm:$0xff] %v5205
        %5222 = vst [vmem:[%s368 + $0x68] sm:$0xff] %v5206
        %5223 = vst [vmem:[%s368 + $0x70] sm:$0xff] %v5207
        %5224 = vst [vmem:[%s368 + $0x78] sm:$0xff] %v5208
        %s5225 = sand.u32 %s208, 1
        %s5226 = scalar_lea.sflag [#allocation4], %s5225
        %s5227 = sand.u32 %s208, 1
        %s5228 = smul.addr %s5227, 128
        %s5229 = scalar_lea.vmem [#allocation10], %s5228
        // Predicated region
        $region69: #{tpu_custom_call.1} parent=51 // pred_check
          %p5230 = pneg %p218
        $region70: #{tpu_custom_call.1} parent=51 // pred_check_branch
          %5232 = sbr.rel (%p5230) target = $region72
        $region71: #{tpu_custom_call.1} parent=51 // pred_region
          %s5233 = smul.u32 16, %s27
          %s5235 = ssub.s32 2048, 2048
          %5236 = vsyncadd %s5226, %s5235
          %s5237 = smul.addr %s5233, 128
          %s5238 = scalar_lea.hbm %s8, %s5237
          %s5239 = sshll.u32 %s5229, 4
          %s5240 = int_to_ptr.vmem [resolvable:$true] %s5239
          %5245 = dma.vmem_to_hbm [thread:$0]  %s5240, 2048, %s5238, %s5226, 128, 128, 8
        $region72: #{tpu_custom_call.1} parent=51 // pred_fallthru
          _
      $region52: #{tpu_custom_call.1} parent=5 // pred_fallthru
        _
      %p5246 = scmp.le.s32.totalorder 2, %s22
      // Predicated region
      $region73: #{tpu_custom_call.1} parent=5 // pred_check
        %p5247 = pneg %p5246
      $region74: #{tpu_custom_call.1} parent=5 // pred_check_branch
        %5249 = sbr.rel (%p5247) target = $region76
      $region75: #{tpu_custom_call.1} parent=5 // pred_region
        %s5250 = ssub.s32 %s22, 2
        // Predicated region
        $region77: #{tpu_custom_call.1} parent=75 // pred_check
          %p5251 = pneg %p224
        $region78: #{tpu_custom_call.1} parent=75 // pred_check_branch
          %5253 = sbr.rel (%p5251) target = $region80
        $region79: #{tpu_custom_call.1} parent=75 // pred_region
          %s5254 = sand.u32 %s209, 1
          %s5255 = scalar_lea.sflag [#allocation4], %s5254
          %s5256 = sand.u32 %s209, 1
          %s5257 = smul.addr %s5256, 128
          %s5258 = scalar_lea.vmem [#allocation10], %s5257
          %5259 = dma.done %s5255, 2048
        $region80: #{tpu_custom_call.1} parent=75 // pred_fallthru
          _
      $region76: #{tpu_custom_call.1} parent=5 // pred_fallthru
        _
    $region6: #{tpu_custom_call.1} parent=1 // loop_footer
      %s26 = sadd.s32 1, %s22
    $region7: #{tpu_custom_call.1} parent=1 // loop_footer_branch
      %21 = sbr.rel target = $region3
    $region8: #{tpu_custom_call.1} parent=1 // loop_exit
      _
    %5260 = vsyncpa [#allocation3], 1
    %s5261 = scalar_lea.sflag [#allocation3], 1
    %5262 = vsyncpa %s5261, 1
    %5263 = vsyncpa [#allocation6], 1
    %5264 = vsyncpa [#allocation9], 1
    %5265 = vsyncpa [#allocation4], 1
    %s5266 = scalar_lea.sflag [#allocation4], 1
    %5267 = vsyncpa %s5266, 1

</llo_original>
